<compile_context>
chip_gen: v7x
topology: tpu7x:2x2x1
jax: 0.10.0
libtpu: 0.0.40
codegen_flags: <defaults>
</compile_context>

<pallas_src>
import jax
import jax.numpy as jnp
from jax.experimental import pallas as pl
from jax.experimental.pallas import tpu as pltpu
import numpy as np

EPS = 1e-5  # torch.nn.InstanceNorm2d default eps


def sammi_kernel(img_ref, word_ref, wq_ref, bq_ref, wkv_ref, bkv_ref,
                 gamma_ref, beta_ref, out_ref):
    # img_ref  : (Bt, H, W, C)  f32
    # word_ref : (Bt, N, Cw)    bf16
    # wq_ref   : (3, C, D)      bf16   (softmax scale already folded in)
    # bq_ref   : (3, D)         f32    (scale folded in)
    # wkv_ref  : (Cw, 6*D)      bf16   layout [k1 k2 k3 v1 v2 v3]
    # bkv_ref  : (1, 6*D)       f32
    # gamma_ref, beta_ref : (3, D) f32 (InstanceNorm affine for IN1/IN2/IN3)
    f32, bf16 = jnp.float32, jnp.bfloat16
    x = img_ref[...].astype(f32)                        # (Bt, H, W, C)
    Bt, H, W, C = x.shape
    D = gamma_ref.shape[1]
    N = word_ref.shape[1]

    # ---- load all small constants from VMEM exactly once ----
    wq_all = wq_ref[...]                                # (3, C, D) bf16
    bq_all = bq_ref[...]                                # (3, D)    f32
    gamma_all = gamma_ref[...]                          # (3, D)    f32
    beta_all = beta_ref[...]                            # (3, D)    f32

    # ---- stage-invariant word K/V projections: one wide matmul, hoisted ----
    word_flat = word_ref[...].reshape(Bt * N, -1)       # (Bt*N, Cw) bf16
    kv = jnp.dot(word_flat, wkv_ref[...], preferred_element_type=f32)
    kv = (kv + bkv_ref[...]).astype(bf16).reshape(Bt, N, 6 * D)

    def attend(q_in, stage):
        # q_in: (Bt, R, C) queries; batch folded into M for the projection matmul.
        R = q_in.shape[1]
        q = jnp.dot(q_in.reshape(Bt * R, C).astype(bf16), wq_all[stage],
                    preferred_element_type=f32)          # (Bt*R, D)
        q = (q + bq_all[stage]).reshape(Bt, R, D).astype(bf16)
        k = kv[:, :, stage * D:(stage + 1) * D]          # (Bt, N, D) bf16
        v = kv[:, :, (3 + stage) * D:(4 + stage) * D]    # (Bt, N, D) bf16
        # batched, transpose-free contraction over the feature axis
        logits = jnp.einsum('brd,bnd->brn', q, k, preferred_element_type=f32)
        m = jnp.max(logits, axis=-1, keepdims=True)
        e = jnp.exp(logits - m)
        p = e * pl.reciprocal(jnp.sum(e, axis=-1, keepdims=True), approx=True)
        return jnp.einsum('brn,bnd->brd', p.astype(bf16), v,
                          preferred_element_type=f32)    # (Bt, R, D) f32

    def inorm(y, stage):
        # InstanceNorm2d: per-sample, per-channel over spatial dims (biased variance).
        # Affine folded into a single scale/shift so the per-element work is one FMA.
        mu = jnp.mean(y, axis=(1, 2), keepdims=True)                 # (Bt,1,1,D)
        var = jnp.mean((y - mu) ** 2, axis=(1, 2), keepdims=True)    # (Bt,1,1,D)
        g = gamma_all[stage].reshape(1, 1, 1, D)
        b = beta_all[stage].reshape(1, 1, 1, D)
        s = jax.lax.rsqrt(var + EPS) * g                             # (Bt,1,1,D)
        t = b - mu * s                                               # (Bt,1,1,D)
        return y * s + t

    # ---- stage 1: attention along H (pool over W) ----
    img_H = attend(jnp.mean(x, axis=2), 0)               # (Bt, H, D)
    x1 = x + img_H[:, :, None, :]                        # x + h_res
    x1n = inorm(x1, 0)                                   # IN1

    # ---- stage 2: attention along W (pool over H of IN1 output) ----
    img_W = attend(jnp.mean(x1n, axis=1), 1)             # (Bt, W, D)
    x2 = x1 + img_W[:, None, :, :]                       # x + h_res + w_res (reused x1)
    x2n = inorm(x2, 1)                                   # IN2

    # ---- stage 3: attention over all H*W positions (row-major h*W + w, as torch .view) --
    img_HW = attend(x2n.reshape(Bt, H * W, D), 2).reshape(Bt, H, W, D)
    x3 = x2 + img_HW                                     # reuse x2
    out_ref[...] = inorm(x3, 2).astype(out_ref.dtype)    # IN3


def _pick_batch_tile(B, per_img_bytes, vmem_budget=24 << 20):
    """Largest divisor of B that keeps >=2 grid steps (v7x megacore) and fits VMEM."""
    # ~12 live f32 (Bt,H,W,C)-sized blocks/intermediates (x, x1, x1n, x2, x2n, x3,
    # double-buffered in/out, attention temps) as a conservative working-set model.
    max_bt = max(1, vmem_budget // (12 * per_img_bytes))
    best = 1
    for bt in range(1, B + 1):
        if B % bt != 0 or bt > max_bt:
            continue
        if (B // bt) >= 2 or (B == 1 and bt == 1):
            best = bt
    return best


def sammi_pallas(img_nchw, word, params, batch_tile=None):
    """img_nchw: (B, C, H, W) float32 ; word: (B, N, Cw).  Returns (B, C, H, W)."""
    wq, bq, wk, bk, wv, bv, gamma, beta = params
    img = jnp.transpose(img_nchw, (0, 2, 3, 1)).astype(jnp.float32)   # -> NHWC
    B, H, W, C = img.shape
    N, Cw = word.shape[1], word.shape[2]
    D = wq.shape[-1]
    assert C == D, "hidden_dim must equal img_dim (hidden_dim=None case)"

    # Fold the softmax scale into the q projection (removes a per-stage logits mul).
    scale = D ** (-0.5)
    wq_s = (wq * scale).astype(jnp.bfloat16)                          # (3, C, D)
    bq_s = (bq * scale).astype(jnp.float32)                           # (3, D)
    # Hoisted word-side projections: one (Cw, 6*D) matrix, layout [k1 k2 k3 v1 v2 v3].
    wkv = jnp.concatenate([wk[0], wk[1], wk[2], wv[0], wv[1], wv[2]],
                          axis=1).astype(jnp.bfloat16)                # (Cw, 6D)
    bkv = jnp.concatenate([bk.reshape(-1), bv.reshape(-1)])[None, :].astype(jnp.float32)
    word_bf = word.astype(jnp.bfloat16)

    bt = batch_tile if batch_tile is not None else _pick_batch_tile(B, H * W * C * 4)
    assert B % bt == 0, (B, bt)

    const = lambda ndim: (lambda b: (0,) * ndim)
    out = pl.pallas_call(
        sammi_kernel,
        out_shape=jax.ShapeDtypeStruct((B, H, W, C), jnp.float32),
        grid=(B // bt,),
        in_specs=[
            pl.BlockSpec((bt, H, W, C), lambda b: (b, 0, 0, 0)),      # img block
            pl.BlockSpec((bt, N, Cw), lambda b: (b, 0, 0)),           # word block
            pl.BlockSpec((3, C, D), const(3)),                        # Wq stack (bf16)
            pl.BlockSpec((3, D), const(2)),                           # bq
            pl.BlockSpec((Cw, 6 * D), const(2)),                      # Wkv (bf16)
            pl.BlockSpec((1, 6 * D), const(2)),                       # bkv
            pl.BlockSpec((3, D), const(2)),                           # gamma
            pl.BlockSpec((3, D), const(2)),                           # beta
        ],
        out_specs=pl.BlockSpec((bt, H, W, C), lambda b: (b, 0, 0, 0)),
        compiler_params=pltpu.CompilerParams(dimension_semantics=("parallel",)),
    )(img, word_bf, wq_s, bq_s, wkv, bkv, gamma, beta)
    return jnp.transpose(out, (0, 3, 1, 2))                           # back to NCHW


def sammi_reference(img_nchw, word, params):
    """Pure-JAX f32 reference of the PyTorch forward (word_mask=None)."""
    wq, bq, wk, bk, wv, bv, gamma, beta = params
    x = jnp.transpose(img_nchw, (0, 2, 3, 1)).astype(jnp.float32)     # NHWC
    wrd = word.astype(jnp.float32)
    B, H, W, C = x.shape
    D = wq.shape[-1]
    scale = D ** (-0.5)

    def attend(q_in, s):
        q = q_in @ wq[s] + bq[s]
        k = wrd @ wk[s] + bk[s]
        v = wrd @ wv[s] + bv[s]
        logits = jnp.einsum('bqd,bnd->bqn', q, k) * scale
        p = jax.nn.softmax(logits, axis=-1)
        return jnp.einsum('bqn,bnd->bqd', p, v)

    def inorm(y, s):
        mu = y.mean(axis=(1, 2), keepdims=True)
        var = ((y - mu) ** 2).mean(axis=(1, 2), keepdims=True)
        return (y - mu) * jax.lax.rsqrt(var + EPS) * gamma[s] + beta[s]

    q_h_in = x.mean(axis=2)                       # (B, H, C)
    h_res = attend(q_h_in, 0)[:, :, None, :]      # (B, H, 1, D)
    x1n = inorm(x + h_res, 0)
    q_w_in = x1n.mean(axis=1)                     # (B, W, D)
    w_res = attend(q_w_in, 1)[:, None, :, :]      # (B, 1, W, D)
    x2n = inorm(x + h_res + w_res, 1)
    q_hw = x2n.reshape(B, H * W, C)
    img_HW = attend(q_hw, 2).reshape(B, H, W, C)
    out = inorm(x + h_res + w_res + img_HW, 2)
    return jnp.transpose(out, (0, 3, 1, 2))


def init_params(key, img_dim, word_dim, hidden_dim):
    # PyTorch init: Linear weights trunc_normal(std=0.02), biases 0; IN weight 1, bias 0.
    k1, k2, k3 = jax.random.split(key, 3)
    std = 0.02
    wq = std * jax.random.truncated_normal(k1, -2.0, 2.0, (3, img_dim, hidden_dim), jnp.float32)
    wk = std * jax.random.truncated_normal(k2, -2.0, 2.0, (3, word_dim, hidden_dim), jnp.float32)
    wv = std * jax.random.truncated_normal(k3, -2.0, 2.0, (3, word_dim, hidden_dim), jnp.float32)
    bq = jnp.zeros((3, hidden_dim), jnp.float32)
    bk = jnp.zeros((3, hidden_dim), jnp.float32)
    bv = jnp.zeros((3, hidden_dim), jnp.float32)
    gamma = jnp.ones((3, hidden_dim), jnp.float32)
    beta = jnp.zeros((3, hidden_dim), jnp.float32)
    return (wq, bq, wk, bk, wv, bv, gamma, beta)


if __name__ == "__main__":
    B, C, H, W = 4, 32, 8, 8          # img_dim = hidden_dim = 32; Bt=2 -> grid of 2 steps
    N, Cw = 8, 16                     # word seq length, word_dim

    key = jax.random.PRNGKey(0)
    k_img, k_word, k_par = jax.random.split(key, 3)
    img = jax.random.normal(k_img, (B, C, H, W), jnp.float32)
    word = jax.random.normal(k_word, (B, N, Cw), jnp.float32)
    params = init_params(k_par, C, Cw, C)

    out = jax.block_until_ready(sammi_pallas(img, word, params))
    ref = jax.block_until_ready(sammi_reference(img, word, params))

    assert out.shape == (B, C, H, W), out.shape
    # bf16 matmul operands + approx-reciprocal softmax shift results by a few 1e-4;
    # keep a 1e-3-class tolerance (slightly looser atol for near-zero elements).
    np.testing.assert_allclose(np.asarray(out), np.asarray(ref), rtol=1e-3, atol=2e-3)
    print("KERNEL_OK")
</pallas_src>

<mosaic_0001>
module attributes {stable_mosaic.version = 11 : i64} {
  func.func @sammi_kernel(%arg0: i32, %arg1: memref<2x8x8x32xf32, #tpu.memory_space<vmem>>, %arg2: memref<2x8x16xbf16, #tpu.memory_space<vmem>>, %arg3: memref<3x32x32xbf16, #tpu.memory_space<vmem>>, %arg4: memref<3x32xf32, #tpu.memory_space<vmem>>, %arg5: memref<16x192xbf16, #tpu.memory_space<vmem>>, %arg6: memref<1x192xf32, #tpu.memory_space<vmem>>, %arg7: memref<3x32xf32, #tpu.memory_space<vmem>>, %arg8: memref<3x32xf32, #tpu.memory_space<vmem>>, %arg9: memref<2x8x8x32xf32, #tpu.memory_space<vmem>>) attributes {dimension_semantics = [#tpu.dimension_semantics<parallel>], iteration_bounds = array<i64: 2>, scalar_prefetch = 0 : i64, scratch_operands = 0 : i64, tpu.core_type = #tpu.core_type<tc>, window_params = [{transform_indices = @transform_0, window_bounds = array<i64: 2, 8, 8, 32>}, {transform_indices = @transform_1, window_bounds = array<i64: 2, 8, 16>}, {pipeline_mode = #tpu.pipeline_mode<synchronous>, transform_indices = @transform_2, window_bounds = array<i64: 3, 32, 32>}, {pipeline_mode = #tpu.pipeline_mode<synchronous>, transform_indices = @transform_3, window_bounds = array<i64: 3, 32>}, {pipeline_mode = #tpu.pipeline_mode<synchronous>, transform_indices = @transform_4, window_bounds = array<i64: 16, 192>}, {pipeline_mode = #tpu.pipeline_mode<synchronous>, transform_indices = @transform_5, window_bounds = array<i64: 1, 192>}, {pipeline_mode = #tpu.pipeline_mode<synchronous>, transform_indices = @transform_6, window_bounds = array<i64: 3, 32>}, {pipeline_mode = #tpu.pipeline_mode<synchronous>, transform_indices = @transform_7, window_bounds = array<i64: 3, 32>}, {transform_indices = @transform_8, window_bounds = array<i64: 2, 8, 8, 32>}]} {
    %c0 = arith.constant 0 : index
    %c0_0 = arith.constant 0 : index
    %c0_1 = arith.constant 0 : index
    %c0_2 = arith.constant 0 : index
    %0 = vector.load %arg1[%c0, %c0_0, %c0_1, %c0_2] : memref<2x8x8x32xf32, #tpu.memory_space<vmem>>, vector<2x8x8x32xf32>
    %c0_3 = arith.constant 0 : index
    %c0_4 = arith.constant 0 : index
    %c0_5 = arith.constant 0 : index
    %1 = vector.load %arg3[%c0_3, %c0_4, %c0_5] : memref<3x32x32xbf16, #tpu.memory_space<vmem>>, vector<3x32x32xbf16>
    %c0_6 = arith.constant 0 : index
    %c0_7 = arith.constant 0 : index
    %2 = vector.load %arg4[%c0_6, %c0_7] : memref<3x32xf32, #tpu.memory_space<vmem>>, vector<3x32xf32>
    %c0_8 = arith.constant 0 : index
    %c0_9 = arith.constant 0 : index
    %3 = vector.load %arg7[%c0_8, %c0_9] : memref<3x32xf32, #tpu.memory_space<vmem>>, vector<3x32xf32>
    %c0_10 = arith.constant 0 : index
    %c0_11 = arith.constant 0 : index
    %4 = vector.load %arg8[%c0_10, %c0_11] : memref<3x32xf32, #tpu.memory_space<vmem>>, vector<3x32xf32>
    %c0_12 = arith.constant 0 : index
    %c0_13 = arith.constant 0 : index
    %c0_14 = arith.constant 0 : index
    %5 = vector.load %arg2[%c0_12, %c0_13, %c0_14] : memref<2x8x16xbf16, #tpu.memory_space<vmem>>, vector<2x8x16xbf16>
    %6 = vector.shape_cast %5 : vector<2x8x16xbf16> to vector<16x16xbf16>
    %c0_15 = arith.constant 0 : index
    %c0_16 = arith.constant 0 : index
    %7 = vector.load %arg5[%c0_15, %c0_16] : memref<16x192xbf16, #tpu.memory_space<vmem>>, vector<16x192xbf16>
    %cst = arith.constant dense<0.000000e+00> : vector<16x192xf32>
    %8 = tpu.matmul %6, %7, %cst {dimension_numbers = #tpu.dot_dimension_numbers<[1], [0], [0], [1], [0, 0, 1, 1], [], []>} : vector<16x16xbf16>, vector<16x192xbf16>, vector<16x192xf32> -> vector<16x192xf32>
    %c0_17 = arith.constant 0 : index
    %c0_18 = arith.constant 0 : index
    %9 = vector.load %arg6[%c0_17, %c0_18] : memref<1x192xf32, #tpu.memory_space<vmem>>, vector<1x192xf32>
    %10 = vector.broadcast %9 : vector<1x192xf32> to vector<16x192xf32>
    %11 = arith.addf %8, %10 : vector<16x192xf32>
    %12 = arith.truncf %11 : vector<16x192xf32> to vector<16x192xbf16>
    %13 = vector.shape_cast %12 : vector<16x192xbf16> to vector<2x8x192xbf16>
    %cst_19 = arith.constant dense<0.000000e+00> : vector<2x8x32xf32>
    %14 = vector.multi_reduction <add>, %0, %cst_19 [2] : vector<2x8x8x32xf32> to vector<2x8x32xf32>
    %cst_20 = arith.constant 8.000000e+00 : f32
    %15 = vector.broadcast %cst_20 : f32 to vector<2x8x32xf32>
    %16 = arith.divf %14, %15 : vector<2x8x32xf32>
    %17 = vector.shape_cast %16 : vector<2x8x32xf32> to vector<16x32xf32>
    %18 = arith.truncf %17 : vector<16x32xf32> to vector<16x32xbf16>
    %19 = vector.extract_strided_slice %1 {offsets = [0, 0, 0], sizes = [1, 32, 32], strides = [1, 1, 1]} : vector<3x32x32xbf16> to vector<1x32x32xbf16>
    %20 = vector.shape_cast %19 : vector<1x32x32xbf16> to vector<32x32xbf16>
    %cst_21 = arith.constant dense<0.000000e+00> : vector<16x32xf32>
    %21 = tpu.matmul %18, %20, %cst_21 {dimension_numbers = #tpu.dot_dimension_numbers<[1], [0], [0], [1], [0, 0, 1, 1], [], []>} : vector<16x32xbf16>, vector<32x32xbf16>, vector<16x32xf32> -> vector<16x32xf32>
    %22 = vector.extract_strided_slice %2 {offsets = [0, 0], sizes = [1, 32], strides = [1, 1]} : vector<3x32xf32> to vector<1x32xf32>
    %23 = vector.shape_cast %22 : vector<1x32xf32> to vector<32xf32>
    %24 = vector.shape_cast %23 : vector<32xf32> to vector<1x32xf32>
    %25 = vector.broadcast %24 : vector<1x32xf32> to vector<16x32xf32>
    %26 = arith.addf %21, %25 : vector<16x32xf32>
    %27 = vector.shape_cast %26 : vector<16x32xf32> to vector<2x8x32xf32>
    %28 = arith.truncf %27 : vector<2x8x32xf32> to vector<2x8x32xbf16>
    %29 = vector.extract_strided_slice %13 {offsets = [0, 0, 0], sizes = [2, 8, 32], strides = [1, 1, 1]} : vector<2x8x192xbf16> to vector<2x8x32xbf16>
    %30 = vector.extract_strided_slice %13 {offsets = [0, 0, 96], sizes = [2, 8, 32], strides = [1, 1, 1]} : vector<2x8x192xbf16> to vector<2x8x32xbf16>
    "tpu.trace_start"() <{level = 10 : i32, message = "brd,bnd->brn"}> : () -> ()
    %cst_22 = arith.constant dense<0.000000e+00> : vector<2x8x8xf32>
    %31 = tpu.matmul %28, %29, %cst_22 {dimension_numbers = #tpu.dot_dimension_numbers<[2], [2], [1], [1], [0, 0, 0, 1, 1, 1], [0], [0]>} : vector<2x8x32xbf16>, vector<2x8x32xbf16>, vector<2x8x8xf32> -> vector<2x8x8xf32>
    "tpu.trace_stop"() : () -> ()
    %cst_23 = arith.constant dense<0xFF800000> : vector<2x8xf32>
    %32 = vector.multi_reduction <maximumf>, %31, %cst_23 [2] : vector<2x8x8xf32> to vector<2x8xf32>
    %33 = vector.shape_cast %32 : vector<2x8xf32> to vector<2x8x1xf32>
    %34 = vector.broadcast %33 : vector<2x8x1xf32> to vector<2x8x8xf32>
    %35 = arith.subf %31, %34 : vector<2x8x8xf32>
    %36 = math.exp %35 : vector<2x8x8xf32>
    %cst_24 = arith.constant dense<0.000000e+00> : vector<2x8xf32>
    %37 = vector.multi_reduction <add>, %36, %cst_24 [2] : vector<2x8x8xf32> to vector<2x8xf32>
    %38 = vector.shape_cast %37 : vector<2x8xf32> to vector<2x8x1xf32>
    %39 = tpu.reciprocal %38 {approx = true} : vector<2x8x1xf32> -> vector<2x8x1xf32>
    %40 = vector.broadcast %39 : vector<2x8x1xf32> to vector<2x8x8xf32>
    %41 = arith.mulf %36, %40 : vector<2x8x8xf32>
    %42 = arith.truncf %41 : vector<2x8x8xf32> to vector<2x8x8xbf16>
    "tpu.trace_start"() <{level = 10 : i32, message = "brn,bnd->brd"}> : () -> ()
    %cst_25 = arith.constant dense<0.000000e+00> : vector<2x8x32xf32>
    %43 = tpu.matmul %42, %30, %cst_25 {dimension_numbers = #tpu.dot_dimension_numbers<[2], [1], [1], [2], [0, 0, 0, 1, 1, 2], [0], [0]>} : vector<2x8x8xbf16>, vector<2x8x32xbf16>, vector<2x8x32xf32> -> vector<2x8x32xf32>
    "tpu.trace_stop"() : () -> ()
    %44 = vector.shape_cast %43 : vector<2x8x32xf32> to vector<2x8x1x32xf32>
    %45 = vector.broadcast %44 : vector<2x8x1x32xf32> to vector<2x8x8x32xf32>
    %46 = arith.addf %0, %45 : vector<2x8x8x32xf32>
    %cst_26 = arith.constant dense<0.000000e+00> : vector<2x32xf32>
    %47 = vector.multi_reduction <add>, %46, %cst_26 [1, 2] : vector<2x8x8x32xf32> to vector<2x32xf32>
    %48 = vector.shape_cast %47 : vector<2x32xf32> to vector<2x1x1x32xf32>
    %cst_27 = arith.constant 6.400000e+01 : f32
    %49 = vector.broadcast %cst_27 : f32 to vector<2x1x1x32xf32>
    %50 = arith.divf %48, %49 : vector<2x1x1x32xf32>
    %51 = vector.broadcast %50 : vector<2x1x1x32xf32> to vector<2x8x8x32xf32>
    %52 = arith.subf %46, %51 : vector<2x8x8x32xf32>
    %53 = arith.mulf %52, %52 : vector<2x8x8x32xf32>
    %cst_28 = arith.constant dense<0.000000e+00> : vector<2x32xf32>
    %54 = vector.multi_reduction <add>, %53, %cst_28 [1, 2] : vector<2x8x8x32xf32> to vector<2x32xf32>
    %55 = vector.shape_cast %54 : vector<2x32xf32> to vector<2x1x1x32xf32>
    %cst_29 = arith.constant 6.400000e+01 : f32
    %56 = vector.broadcast %cst_29 : f32 to vector<2x1x1x32xf32>
    %57 = arith.divf %55, %56 : vector<2x1x1x32xf32>
    %58 = vector.extract_strided_slice %3 {offsets = [0, 0], sizes = [1, 32], strides = [1, 1]} : vector<3x32xf32> to vector<1x32xf32>
    %59 = vector.shape_cast %58 : vector<1x32xf32> to vector<32xf32>
    %60 = vector.shape_cast %59 : vector<32xf32> to vector<1x1x1x32xf32>
    %61 = vector.extract_strided_slice %4 {offsets = [0, 0], sizes = [1, 32], strides = [1, 1]} : vector<3x32xf32> to vector<1x32xf32>
    %62 = vector.shape_cast %61 : vector<1x32xf32> to vector<32xf32>
    %63 = vector.shape_cast %62 : vector<32xf32> to vector<1x1x1x32xf32>
    %cst_30 = arith.constant 9.99999974E-6 : f32
    %64 = vector.broadcast %cst_30 : f32 to vector<2x1x1x32xf32>
    %65 = arith.addf %57, %64 : vector<2x1x1x32xf32>
    %66 = math.rsqrt %65 : vector<2x1x1x32xf32>
    %67 = vector.broadcast %60 : vector<1x1x1x32xf32> to vector<2x1x1x32xf32>
    %68 = arith.mulf %66, %67 : vector<2x1x1x32xf32>
    %69 = arith.mulf %50, %68 : vector<2x1x1x32xf32>
    %70 = vector.broadcast %63 : vector<1x1x1x32xf32> to vector<2x1x1x32xf32>
    %71 = arith.subf %70, %69 : vector<2x1x1x32xf32>
    %72 = vector.broadcast %68 : vector<2x1x1x32xf32> to vector<2x8x8x32xf32>
    %73 = arith.mulf %46, %72 : vector<2x8x8x32xf32>
    %74 = vector.broadcast %71 : vector<2x1x1x32xf32> to vector<2x8x8x32xf32>
    %75 = arith.addf %73, %74 : vector<2x8x8x32xf32>
    %cst_31 = arith.constant dense<0.000000e+00> : vector<2x8x32xf32>
    %76 = vector.multi_reduction <add>, %75, %cst_31 [1] : vector<2x8x8x32xf32> to vector<2x8x32xf32>
    %cst_32 = arith.constant 8.000000e+00 : f32
    %77 = vector.broadcast %cst_32 : f32 to vector<2x8x32xf32>
    %78 = arith.divf %76, %77 : vector<2x8x32xf32>
    %79 = vector.shape_cast %78 : vector<2x8x32xf32> to vector<16x32xf32>
    %80 = arith.truncf %79 : vector<16x32xf32> to vector<16x32xbf16>
    %81 = vector.extract_strided_slice %1 {offsets = [1, 0, 0], sizes = [1, 32, 32], strides = [1, 1, 1]} : vector<3x32x32xbf16> to vector<1x32x32xbf16>
    %82 = vector.shape_cast %81 : vector<1x32x32xbf16> to vector<32x32xbf16>
    %cst_33 = arith.constant dense<0.000000e+00> : vector<16x32xf32>
    %83 = tpu.matmul %80, %82, %cst_33 {dimension_numbers = #tpu.dot_dimension_numbers<[1], [0], [0], [1], [0, 0, 1, 1], [], []>} : vector<16x32xbf16>, vector<32x32xbf16>, vector<16x32xf32> -> vector<16x32xf32>
    %84 = vector.extract_strided_slice %2 {offsets = [1, 0], sizes = [1, 32], strides = [1, 1]} : vector<3x32xf32> to vector<1x32xf32>
    %85 = vector.shape_cast %84 : vector<1x32xf32> to vector<32xf32>
    %86 = vector.shape_cast %85 : vector<32xf32> to vector<1x32xf32>
    %87 = vector.broadcast %86 : vector<1x32xf32> to vector<16x32xf32>
    %88 = arith.addf %83, %87 : vector<16x32xf32>
    %89 = vector.shape_cast %88 : vector<16x32xf32> to vector<2x8x32xf32>
    %90 = arith.truncf %89 : vector<2x8x32xf32> to vector<2x8x32xbf16>
    %91 = vector.extract_strided_slice %13 {offsets = [0, 0, 32], sizes = [2, 8, 32], strides = [1, 1, 1]} : vector<2x8x192xbf16> to vector<2x8x32xbf16>
    %92 = vector.extract_strided_slice %13 {offsets = [0, 0, 128], sizes = [2, 8, 32], strides = [1, 1, 1]} : vector<2x8x192xbf16> to vector<2x8x32xbf16>
    "tpu.trace_start"() <{level = 10 : i32, message = "brd,bnd->brn"}> : () -> ()
    %cst_34 = arith.constant dense<0.000000e+00> : vector<2x8x8xf32>
    %93 = tpu.matmul %90, %91, %cst_34 {dimension_numbers = #tpu.dot_dimension_numbers<[2], [2], [1], [1], [0, 0, 0, 1, 1, 1], [0], [0]>} : vector<2x8x32xbf16>, vector<2x8x32xbf16>, vector<2x8x8xf32> -> vector<2x8x8xf32>
    "tpu.trace_stop"() : () -> ()
    %cst_35 = arith.constant dense<0xFF800000> : vector<2x8xf32>
    %94 = vector.multi_reduction <maximumf>, %93, %cst_35 [2] : vector<2x8x8xf32> to vector<2x8xf32>
    %95 = vector.shape_cast %94 : vector<2x8xf32> to vector<2x8x1xf32>
    %96 = vector.broadcast %95 : vector<2x8x1xf32> to vector<2x8x8xf32>
    %97 = arith.subf %93, %96 : vector<2x8x8xf32>
    %98 = math.exp %97 : vector<2x8x8xf32>
    %cst_36 = arith.constant dense<0.000000e+00> : vector<2x8xf32>
    %99 = vector.multi_reduction <add>, %98, %cst_36 [2] : vector<2x8x8xf32> to vector<2x8xf32>
    %100 = vector.shape_cast %99 : vector<2x8xf32> to vector<2x8x1xf32>
    %101 = tpu.reciprocal %100 {approx = true} : vector<2x8x1xf32> -> vector<2x8x1xf32>
    %102 = vector.broadcast %101 : vector<2x8x1xf32> to vector<2x8x8xf32>
    %103 = arith.mulf %98, %102 : vector<2x8x8xf32>
    %104 = arith.truncf %103 : vector<2x8x8xf32> to vector<2x8x8xbf16>
    "tpu.trace_start"() <{level = 10 : i32, message = "brn,bnd->brd"}> : () -> ()
    %cst_37 = arith.constant dense<0.000000e+00> : vector<2x8x32xf32>
    %105 = tpu.matmul %104, %92, %cst_37 {dimension_numbers = #tpu.dot_dimension_numbers<[2], [1], [1], [2], [0, 0, 0, 1, 1, 2], [0], [0]>} : vector<2x8x8xbf16>, vector<2x8x32xbf16>, vector<2x8x32xf32> -> vector<2x8x32xf32>
    "tpu.trace_stop"() : () -> ()
    %106 = vector.shape_cast %105 : vector<2x8x32xf32> to vector<2x1x8x32xf32>
    %107 = vector.broadcast %106 : vector<2x1x8x32xf32> to vector<2x8x8x32xf32>
    %108 = arith.addf %46, %107 : vector<2x8x8x32xf32>
    %cst_38 = arith.constant dense<0.000000e+00> : vector<2x32xf32>
    %109 = vector.multi_reduction <add>, %108, %cst_38 [1, 2] : vector<2x8x8x32xf32> to vector<2x32xf32>
    %110 = vector.shape_cast %109 : vector<2x32xf32> to vector<2x1x1x32xf32>
    %cst_39 = arith.constant 6.400000e+01 : f32
    %111 = vector.broadcast %cst_39 : f32 to vector<2x1x1x32xf32>
    %112 = arith.divf %110, %111 : vector<2x1x1x32xf32>
    %113 = vector.broadcast %112 : vector<2x1x1x32xf32> to vector<2x8x8x32xf32>
    %114 = arith.subf %108, %113 : vector<2x8x8x32xf32>
    %115 = arith.mulf %114, %114 : vector<2x8x8x32xf32>
    %cst_40 = arith.constant dense<0.000000e+00> : vector<2x32xf32>
    %116 = vector.multi_reduction <add>, %115, %cst_40 [1, 2] : vector<2x8x8x32xf32> to vector<2x32xf32>
    %117 = vector.shape_cast %116 : vector<2x32xf32> to vector<2x1x1x32xf32>
    %cst_41 = arith.constant 6.400000e+01 : f32
    %118 = vector.broadcast %cst_41 : f32 to vector<2x1x1x32xf32>
    %119 = arith.divf %117, %118 : vector<2x1x1x32xf32>
    %120 = vector.extract_strided_slice %3 {offsets = [1, 0], sizes = [1, 32], strides = [1, 1]} : vector<3x32xf32> to vector<1x32xf32>
    %121 = vector.shape_cast %120 : vector<1x32xf32> to vector<32xf32>
    %122 = vector.shape_cast %121 : vector<32xf32> to vector<1x1x1x32xf32>
    %123 = vector.extract_strided_slice %4 {offsets = [1, 0], sizes = [1, 32], strides = [1, 1]} : vector<3x32xf32> to vector<1x32xf32>
    %124 = vector.shape_cast %123 : vector<1x32xf32> to vector<32xf32>
    %125 = vector.shape_cast %124 : vector<32xf32> to vector<1x1x1x32xf32>
    %cst_42 = arith.constant 9.99999974E-6 : f32
    %126 = vector.broadcast %cst_42 : f32 to vector<2x1x1x32xf32>
    %127 = arith.addf %119, %126 : vector<2x1x1x32xf32>
    %128 = math.rsqrt %127 : vector<2x1x1x32xf32>
    %129 = vector.broadcast %122 : vector<1x1x1x32xf32> to vector<2x1x1x32xf32>
    %130 = arith.mulf %128, %129 : vector<2x1x1x32xf32>
    %131 = arith.mulf %112, %130 : vector<2x1x1x32xf32>
    %132 = vector.broadcast %125 : vector<1x1x1x32xf32> to vector<2x1x1x32xf32>
    %133 = arith.subf %132, %131 : vector<2x1x1x32xf32>
    %134 = vector.broadcast %130 : vector<2x1x1x32xf32> to vector<2x8x8x32xf32>
    %135 = arith.mulf %108, %134 : vector<2x8x8x32xf32>
    %136 = vector.broadcast %133 : vector<2x1x1x32xf32> to vector<2x8x8x32xf32>
    %137 = arith.addf %135, %136 : vector<2x8x8x32xf32>
    %138 = vector.shape_cast %137 : vector<2x8x8x32xf32> to vector<2x64x32xf32>
    %139 = vector.shape_cast %138 : vector<2x64x32xf32> to vector<128x32xf32>
    %140 = arith.truncf %139 : vector<128x32xf32> to vector<128x32xbf16>
    %141 = vector.extract_strided_slice %1 {offsets = [2, 0, 0], sizes = [1, 32, 32], strides = [1, 1, 1]} : vector<3x32x32xbf16> to vector<1x32x32xbf16>
    %142 = vector.shape_cast %141 : vector<1x32x32xbf16> to vector<32x32xbf16>
    %cst_43 = arith.constant dense<0.000000e+00> : vector<128x32xf32>
    %143 = tpu.matmul %140, %142, %cst_43 {dimension_numbers = #tpu.dot_dimension_numbers<[1], [0], [0], [1], [0, 0, 1, 1], [], []>} : vector<128x32xbf16>, vector<32x32xbf16>, vector<128x32xf32> -> vector<128x32xf32>
    %144 = vector.extract_strided_slice %2 {offsets = [2, 0], sizes = [1, 32], strides = [1, 1]} : vector<3x32xf32> to vector<1x32xf32>
    %145 = vector.shape_cast %144 : vector<1x32xf32> to vector<32xf32>
    %146 = vector.shape_cast %145 : vector<32xf32> to vector<1x32xf32>
    %147 = vector.broadcast %146 : vector<1x32xf32> to vector<128x32xf32>
    %148 = arith.addf %143, %147 : vector<128x32xf32>
    %149 = vector.shape_cast %148 : vector<128x32xf32> to vector<2x64x32xf32>
    %150 = arith.truncf %149 : vector<2x64x32xf32> to vector<2x64x32xbf16>
    %151 = vector.extract_strided_slice %13 {offsets = [0, 0, 64], sizes = [2, 8, 32], strides = [1, 1, 1]} : vector<2x8x192xbf16> to vector<2x8x32xbf16>
    %152 = vector.extract_strided_slice %13 {offsets = [0, 0, 160], sizes = [2, 8, 32], strides = [1, 1, 1]} : vector<2x8x192xbf16> to vector<2x8x32xbf16>
    "tpu.trace_start"() <{level = 10 : i32, message = "brd,bnd->brn"}> : () -> ()
    %cst_44 = arith.constant dense<0.000000e+00> : vector<2x64x8xf32>
    %153 = tpu.matmul %150, %151, %cst_44 {dimension_numbers = #tpu.dot_dimension_numbers<[2], [2], [1], [1], [0, 0, 0, 1, 1, 1], [0], [0]>} : vector<2x64x32xbf16>, vector<2x8x32xbf16>, vector<2x64x8xf32> -> vector<2x64x8xf32>
    "tpu.trace_stop"() : () -> ()
    %cst_45 = arith.constant dense<0xFF800000> : vector<2x64xf32>
    %154 = vector.multi_reduction <maximumf>, %153, %cst_45 [2] : vector<2x64x8xf32> to vector<2x64xf32>
    %155 = vector.shape_cast %154 : vector<2x64xf32> to vector<2x64x1xf32>
    %156 = vector.broadcast %155 : vector<2x64x1xf32> to vector<2x64x8xf32>
    %157 = arith.subf %153, %156 : vector<2x64x8xf32>
    %158 = math.exp %157 : vector<2x64x8xf32>
    %cst_46 = arith.constant dense<0.000000e+00> : vector<2x64xf32>
    %159 = vector.multi_reduction <add>, %158, %cst_46 [2] : vector<2x64x8xf32> to vector<2x64xf32>
    %160 = vector.shape_cast %159 : vector<2x64xf32> to vector<2x64x1xf32>
    %161 = tpu.reciprocal %160 {approx = true} : vector<2x64x1xf32> -> vector<2x64x1xf32>
    %162 = vector.broadcast %161 : vector<2x64x1xf32> to vector<2x64x8xf32>
    %163 = arith.mulf %158, %162 : vector<2x64x8xf32>
    %164 = arith.truncf %163 : vector<2x64x8xf32> to vector<2x64x8xbf16>
    "tpu.trace_start"() <{level = 10 : i32, message = "brn,bnd->brd"}> : () -> ()
    %cst_47 = arith.constant dense<0.000000e+00> : vector<2x64x32xf32>
    %165 = tpu.matmul %164, %152, %cst_47 {dimension_numbers = #tpu.dot_dimension_numbers<[2], [1], [1], [2], [0, 0, 0, 1, 1, 2], [0], [0]>} : vector<2x64x8xbf16>, vector<2x8x32xbf16>, vector<2x64x32xf32> -> vector<2x64x32xf32>
    "tpu.trace_stop"() : () -> ()
    %166 = vector.shape_cast %165 : vector<2x64x32xf32> to vector<2x8x8x32xf32>
    %167 = arith.addf %108, %166 : vector<2x8x8x32xf32>
    %cst_48 = arith.constant dense<0.000000e+00> : vector<2x32xf32>
    %168 = vector.multi_reduction <add>, %167, %cst_48 [1, 2] : vector<2x8x8x32xf32> to vector<2x32xf32>
    %169 = vector.shape_cast %168 : vector<2x32xf32> to vector<2x1x1x32xf32>
    %cst_49 = arith.constant 6.400000e+01 : f32
    %170 = vector.broadcast %cst_49 : f32 to vector<2x1x1x32xf32>
    %171 = arith.divf %169, %170 : vector<2x1x1x32xf32>
    %172 = vector.broadcast %171 : vector<2x1x1x32xf32> to vector<2x8x8x32xf32>
    %173 = arith.subf %167, %172 : vector<2x8x8x32xf32>
    %174 = arith.mulf %173, %173 : vector<2x8x8x32xf32>
    %cst_50 = arith.constant dense<0.000000e+00> : vector<2x32xf32>
    %175 = vector.multi_reduction <add>, %174, %cst_50 [1, 2] : vector<2x8x8x32xf32> to vector<2x32xf32>
    %176 = vector.shape_cast %175 : vector<2x32xf32> to vector<2x1x1x32xf32>
    %cst_51 = arith.constant 6.400000e+01 : f32
    %177 = vector.broadcast %cst_51 : f32 to vector<2x1x1x32xf32>
    %178 = arith.divf %176, %177 : vector<2x1x1x32xf32>
    %179 = vector.extract_strided_slice %3 {offsets = [2, 0], sizes = [1, 32], strides = [1, 1]} : vector<3x32xf32> to vector<1x32xf32>
    %180 = vector.shape_cast %179 : vector<1x32xf32> to vector<32xf32>
    %181 = vector.shape_cast %180 : vector<32xf32> to vector<1x1x1x32xf32>
    %182 = vector.extract_strided_slice %4 {offsets = [2, 0], sizes = [1, 32], strides = [1, 1]} : vector<3x32xf32> to vector<1x32xf32>
    %183 = vector.shape_cast %182 : vector<1x32xf32> to vector<32xf32>
    %184 = vector.shape_cast %183 : vector<32xf32> to vector<1x1x1x32xf32>
    %cst_52 = arith.constant 9.99999974E-6 : f32
    %185 = vector.broadcast %cst_52 : f32 to vector<2x1x1x32xf32>
    %186 = arith.addf %178, %185 : vector<2x1x1x32xf32>
    %187 = math.rsqrt %186 : vector<2x1x1x32xf32>
    %188 = vector.broadcast %181 : vector<1x1x1x32xf32> to vector<2x1x1x32xf32>
    %189 = arith.mulf %187, %188 : vector<2x1x1x32xf32>
    %190 = arith.mulf %171, %189 : vector<2x1x1x32xf32>
    %191 = vector.broadcast %184 : vector<1x1x1x32xf32> to vector<2x1x1x32xf32>
    %192 = arith.subf %191, %190 : vector<2x1x1x32xf32>
    %193 = vector.broadcast %189 : vector<2x1x1x32xf32> to vector<2x8x8x32xf32>
    %194 = arith.mulf %167, %193 : vector<2x8x8x32xf32>
    %195 = vector.broadcast %192 : vector<2x1x1x32xf32> to vector<2x8x8x32xf32>
    %196 = arith.addf %194, %195 : vector<2x8x8x32xf32>
    %c0_53 = arith.constant 0 : index
    %c0_54 = arith.constant 0 : index
    %c0_55 = arith.constant 0 : index
    %c0_56 = arith.constant 0 : index
    %197 = vector.load %arg9[%c0_53, %c0_54, %c0_55, %c0_56] : memref<2x8x8x32xf32, #tpu.memory_space<vmem>>, vector<2x8x8x32xf32>
    tpu.vector_store %arg9[%c0_53, %c0_54, %c0_55, %c0_56], %196 {strides = array<i32>} : memref<2x8x8x32xf32, #tpu.memory_space<vmem>>, vector<2x8x8x32xf32>,
    return
  }
  func.func @transform_0(%arg0: i32) -> (i32, i32, i32, i32) {
    %c0_i32 = arith.constant 0 : i32
    %c0_i32_0 = arith.constant 0 : i32
    %c0_i32_1 = arith.constant 0 : i32
    %c0_i32_2 = arith.constant 0 : i32
    return %arg0, %c0_i32, %c0_i32_0, %c0_i32_1 : i32, i32, i32, i32
  }
  func.func @transform_1(%arg0: i32) -> (i32, i32, i32) {
    %c0_i32 = arith.constant 0 : i32
    %c0_i32_0 = arith.constant 0 : i32
    %c0_i32_1 = arith.constant 0 : i32
    return %arg0, %c0_i32, %c0_i32_0 : i32, i32, i32
  }
  func.func @transform_2(%arg0: i32) -> (i32, i32, i32) {
    %c0_i32 = arith.constant 0 : i32
    %c0_i32_0 = arith.constant 0 : i32
    %c0_i32_1 = arith.constant 0 : i32
    %c0_i32_2 = arith.constant 0 : i32
    return %c0_i32, %c0_i32_0, %c0_i32_1 : i32, i32, i32
  }
  func.func @transform_3(%arg0: i32) -> (i32, i32) {
    %c0_i32 = arith.constant 0 : i32
    %c0_i32_0 = arith.constant 0 : i32
    %c0_i32_1 = arith.constant 0 : i32
    return %c0_i32, %c0_i32_0 : i32, i32
  }
  func.func @transform_4(%arg0: i32) -> (i32, i32) {
    %c0_i32 = arith.constant 0 : i32
    %c0_i32_0 = arith.constant 0 : i32
    %c0_i32_1 = arith.constant 0 : i32
    return %c0_i32, %c0_i32_0 : i32, i32
  }
  func.func @transform_5(%arg0: i32) -> (i32, i32) {
    %c0_i32 = arith.constant 0 : i32
    %c0_i32_0 = arith.constant 0 : i32
    %c0_i32_1 = arith.constant 0 : i32
    return %c0_i32, %c0_i32_0 : i32, i32
  }
  func.func @transform_6(%arg0: i32) -> (i32, i32) {
    %c0_i32 = arith.constant 0 : i32
    %c0_i32_0 = arith.constant 0 : i32
    %c0_i32_1 = arith.constant 0 : i32
    return %c0_i32, %c0_i32_0 : i32, i32
  }
  func.func @transform_7(%arg0: i32) -> (i32, i32) {
    %c0_i32 = arith.constant 0 : i32
    %c0_i32_0 = arith.constant 0 : i32
    %c0_i32_1 = arith.constant 0 : i32
    return %c0_i32, %c0_i32_0 : i32, i32
  }
  func.func @transform_8(%arg0: i32) -> (i32, i32, i32, i32) {
    %c0_i32 = arith.constant 0 : i32
    %c0_i32_0 = arith.constant 0 : i32
    %c0_i32_1 = arith.constant 0 : i32
    %c0_i32_2 = arith.constant 0 : i32
    return %arg0, %c0_i32, %c0_i32_0, %c0_i32_1 : i32, i32, i32, i32
  }
}

</mosaic_0001>

<llo_original>
// kernel: tpu_custom_call.1
$region0: #{tpu_custom_call.1}
  #allocation0 [shape = 'u32[]', space=smem, size = 0x4, offset = 0x4, fixed_abs, tag = 'smem constant byte address 0x4 - core index']
  #allocation1 [shape = 'u32[144,128]{1,0:T(1,128)}', space=vmem, size = 0x12000, scoped, tag = 'internal scratch']
  %s0 = inlined_call_operand.hbm [shape: f32[4,8,8,32], index: 0, kind: input, shape index: {}]
  %s1 = inlined_call_operand.hbm [shape: bf16[4,8,16], index: 1, kind: input, shape index: {}]
  %s2 = inlined_call_operand.hbm [shape: bf16[3,32,32], index: 2, kind: input, shape index: {}]
  %s3 = inlined_call_operand.vmem [shape: f32[3,32], index: 3, kind: input, shape index: {}]
  %s4 = inlined_call_operand.hbm [shape: bf16[16,192], index: 4, kind: input, shape index: {}]
  %s5 = inlined_call_operand.vmem [shape: f32[1,192], index: 5, kind: input, shape index: {}]
  %s6 = inlined_call_operand.vmem [shape: f32[3,32], index: 6, kind: input, shape index: {}]
  %s7 = inlined_call_operand.vmem [shape: f32[3,32], index: 7, kind: input, shape index: {}]
  %s8 = inlined_call_operand.hbm [shape: f32[4,8,8,32], index: 8, kind: output, shape index: {}]
  %s9 = sld [smem:[#allocation0]]
  $region81: #{tpu_custom_call.1} parent=0
    _
  %s11 = ssub.s32 1, %s9
  %s12 = scalar_select 0, %s11, %s9
  $region1: #{tpu_custom_call.1} parent=0
    #allocation2 [shape = 'u8[131072]{0}', space=vmem, size = 0x20000, scoped, tag = 'input window, operand 0']
    #allocation3 [shape = 's32[2]{0}', space=sflag, size = 0x8, scoped, tag = 'scoped memory for tpu_custom_call.1']
    #allocation4 [shape = 's32[2]{0}', space=sflag, size = 0x8, scoped, tag = 'scoped memory for tpu_custom_call.1']
    #allocation5 [shape = 'u8[8192]{0}', space=vmem, size = 0x2000, scoped, tag = 'input window, operand 1']
    #allocation6 [shape = 's32[2]{0}', space=sflag, size = 0x8, scoped, tag = 'scoped memory for tpu_custom_call.1']
    #allocation7 [shape = 'u8[24576]{0}', space=vmem, size = 0x6000, scoped, tag = 'input window, operand 2, single buffered']
    #allocation8 [shape = 'u8[8192]{0}', space=vmem, size = 0x2000, scoped, tag = 'input window, operand 4, single buffered']
    #allocation9 [shape = 's32[1]{0}', space=sflag, size = 0x4, scoped, tag = 'scoped memory for tpu_custom_call.1']
    #allocation10 [shape = 'u8[131072]{0}', space=vmem, size = 0x20000, scoped, tag = 'output window, operand 0']
    %13 = vsyncpa [#allocation3], 0
    %s14 = scalar_lea.sflag [#allocation3], 1
    %15 = vsyncpa %s14, 0
    %16 = vsyncpa [#allocation6], 0
    %s17 = scalar_lea.sflag [#allocation6], 1
    %18 = vsyncpa %s17, 0
    %19 = vsyncpa [#allocation9], 0
    %20 = vsyncpa [#allocation4], 0
    %s21 = scalar_lea.sflag [#allocation4], 1
    %22 = vsyncpa %s21, 0
    loop: start=0, step=1, limit=4
    $region2: #{tpu_custom_call.1} parent=1 // loop_pre_header
      _
    $region3: #{tpu_custom_call.1} parent=1 // loop_header
      %s24 = sphi 0, %s28
      %p25 = scmp.ge.s32.totalorder %s24, 4
      %s34 = sphi 0, %s36
      %s37 = sphi 0, %s34
      %s38 = sphi 0, %s37
      %s54 = sphi 0, %s38
      %s60 = sphi 0, %s62
      %s63 = sphi 0, %s60
      %s64 = sphi 0, %s63
      %s80 = sphi 0, %s64
      %s84 = sphi 0, %s84
      %s86 = sphi 0, %s84
      %s87 = sphi 0, %s86
      %s101 = sphi 0, %s87
      %s105 = sphi 0, %s105
      %s107 = sphi 0, %s105
      %s108 = sphi 0, %s107
      %s122 = sphi 0, %s108
      %s126 = sphi 0, %s126
      %s128 = sphi 0, %s126
      %s129 = sphi 0, %s128
      %s143 = sphi 0, %s129
      %s147 = sphi 0, %s147
      %s149 = sphi 0, %s147
      %s150 = sphi 0, %s149
      %s164 = sphi 0, %s150
      %s168 = sphi 0, %s168
      %s170 = sphi 0, %s168
      %s171 = sphi 0, %s170
      %s185 = sphi 0, %s171
      %s189 = sphi 0, %s189
      %s191 = sphi 0, %s189
      %s192 = sphi 0, %s191
      %s206 = sphi 0, %s192
      %s212 = sphi 0, %s214
      %s215 = sphi 0, %s212
      %s216 = sphi 0, %s215
      %s232 = sphi 0, %s216
    $region4: #{tpu_custom_call.1} parent=1 // loop_header_branch
      %27 = sbr.rel (%p25) target = $region8
    $region5: #{tpu_custom_call.1} parent=1 // loop_body
      %s29 = ssub.s32 %s24, 1
      %s30 = ssub.s32 %s24, 2
      %s31 = sadd.s32 %s24, 1
      %s32 = ssub.s32 %s24, %s31
      %p33 = scmp.eq.s32.totalorder %s32, 0
      %s35 = sadd.s32 %s34, 1
      %s36 = scalar_select %p33, %s34, %s35
      %p39 = pneg %p33
      %p40 = scmp.eq.s32.totalorder %s24, 1
      %p41 = por %p39, %p40
      %p42 = scmp.ne.s32.totalorder %s34, %s37
      %p43 = scmp.eq.s32.totalorder %s24, 0
      %p44 = por %p42, %p43
      %p45 = scmp.ne.s32.totalorder %s34, %s37
      %p46 = scmp.eq.s32.totalorder %s29, 1
      %p47 = por %p45, %p46
      %p48 = scmp.ne.s32.totalorder %s37, %s38
      %p49 = scmp.eq.s32.totalorder %s29, 0
      %p50 = por %p48, %p49
      %p51 = scmp.ne.s32.totalorder %s37, %s38
      %p52 = scmp.eq.s32.totalorder %s30, 1
      %p53 = por %p51, %p52
      %p55 = scmp.ne.s32.totalorder %s38, %s54
      %p56 = scmp.eq.s32.totalorder %s30, 0
      %p57 = por %p55, %p56
      %s58 = ssub.s32 %s24, %s31
      %p59 = scmp.eq.s32.totalorder %s58, 0
      %s61 = sadd.s32 %s60, 1
      %s62 = scalar_select %p59, %s60, %s61
      %p65 = pneg %p59
      %p66 = scmp.eq.s32.totalorder %s24, 1
      %p67 = por %p65, %p66
      %p68 = scmp.ne.s32.totalorder %s60, %s63
      %p69 = scmp.eq.s32.totalorder %s24, 0
      %p70 = por %p68, %p69
      %p71 = scmp.ne.s32.totalorder %s60, %s63
      %p72 = scmp.eq.s32.totalorder %s29, 1
      %p73 = por %p71, %p72
      %p74 = scmp.ne.s32.totalorder %s63, %s64
      %p75 = scmp.eq.s32.totalorder %s29, 0
      %p76 = por %p74, %p75
      %p77 = scmp.ne.s32.totalorder %s63, %s64
      %p78 = scmp.eq.s32.totalorder %s30, 1
      %p79 = por %p77, %p78
      %p81 = scmp.ne.s32.totalorder %s64, %s80
      %p82 = scmp.eq.s32.totalorder %s30, 0
      %p83 = por %p81, %p82
      %s85 = sadd.s32 %s84, 1
      %p88 = scmp.eq.s32.totalorder %s24, 1
      %p89 = scmp.ne.s32.totalorder %s84, %s86
      %p90 = scmp.eq.s32.totalorder %s24, 0
      %p91 = por %p89, %p90
      %p92 = scmp.ne.s32.totalorder %s84, %s86
      %p93 = scmp.eq.s32.totalorder %s29, 1
      %p94 = por %p92, %p93
      %p95 = scmp.ne.s32.totalorder %s86, %s87
      %p96 = scmp.eq.s32.totalorder %s29, 0
      %p97 = por %p95, %p96
      %p98 = scmp.ne.s32.totalorder %s86, %s87
      %p99 = scmp.eq.s32.totalorder %s30, 1
      %p100 = por %p98, %p99
      %p102 = scmp.ne.s32.totalorder %s87, %s101
      %p103 = scmp.eq.s32.totalorder %s30, 0
      %p104 = por %p102, %p103
      %s106 = sadd.s32 %s105, 1
      %p109 = scmp.eq.s32.totalorder %s24, 1
      %p110 = scmp.ne.s32.totalorder %s105, %s107
      %p111 = scmp.eq.s32.totalorder %s24, 0
      %p112 = por %p110, %p111
      %p113 = scmp.ne.s32.totalorder %s105, %s107
      %p114 = scmp.eq.s32.totalorder %s29, 1
      %p115 = por %p113, %p114
      %p116 = scmp.ne.s32.totalorder %s107, %s108
      %p117 = scmp.eq.s32.totalorder %s29, 0
      %p118 = por %p116, %p117
      %p119 = scmp.ne.s32.totalorder %s107, %s108
      %p120 = scmp.eq.s32.totalorder %s30, 1
      %p121 = por %p119, %p120
      %p123 = scmp.ne.s32.totalorder %s108, %s122
      %p124 = scmp.eq.s32.totalorder %s30, 0
      %p125 = por %p123, %p124
      %s127 = sadd.s32 %s126, 1
      %p130 = scmp.eq.s32.totalorder %s24, 1
      %p131 = scmp.ne.s32.totalorder %s126, %s128
      %p132 = scmp.eq.s32.totalorder %s24, 0
      %p133 = por %p131, %p132
      %p134 = scmp.ne.s32.totalorder %s126, %s128
      %p135 = scmp.eq.s32.totalorder %s29, 1
      %p136 = por %p134, %p135
      %p137 = scmp.ne.s32.totalorder %s128, %s129
      %p138 = scmp.eq.s32.totalorder %s29, 0
      %p139 = por %p137, %p138
      %p140 = scmp.ne.s32.totalorder %s128, %s129
      %p141 = scmp.eq.s32.totalorder %s30, 1
      %p142 = por %p140, %p141
      %p144 = scmp.ne.s32.totalorder %s129, %s143
      %p145 = scmp.eq.s32.totalorder %s30, 0
      %p146 = por %p144, %p145
      %s148 = sadd.s32 %s147, 1
      %p151 = scmp.eq.s32.totalorder %s24, 1
      %p152 = scmp.ne.s32.totalorder %s147, %s149
      %p153 = scmp.eq.s32.totalorder %s24, 0
      %p154 = por %p152, %p153
      %p155 = scmp.ne.s32.totalorder %s147, %s149
      %p156 = scmp.eq.s32.totalorder %s29, 1
      %p157 = por %p155, %p156
      %p158 = scmp.ne.s32.totalorder %s149, %s150
      %p159 = scmp.eq.s32.totalorder %s29, 0
      %p160 = por %p158, %p159
      %p161 = scmp.ne.s32.totalorder %s149, %s150
      %p162 = scmp.eq.s32.totalorder %s30, 1
      %p163 = por %p161, %p162
      %p165 = scmp.ne.s32.totalorder %s150, %s164
      %p166 = scmp.eq.s32.totalorder %s30, 0
      %p167 = por %p165, %p166
      %s169 = sadd.s32 %s168, 1
      %p172 = scmp.eq.s32.totalorder %s24, 1
      %p173 = scmp.ne.s32.totalorder %s168, %s170
      %p174 = scmp.eq.s32.totalorder %s24, 0
      %p175 = por %p173, %p174
      %p176 = scmp.ne.s32.totalorder %s168, %s170
      %p177 = scmp.eq.s32.totalorder %s29, 1
      %p178 = por %p176, %p177
      %p179 = scmp.ne.s32.totalorder %s170, %s171
      %p180 = scmp.eq.s32.totalorder %s29, 0
      %p181 = por %p179, %p180
      %p182 = scmp.ne.s32.totalorder %s170, %s171
      %p183 = scmp.eq.s32.totalorder %s30, 1
      %p184 = por %p182, %p183
      %p186 = scmp.ne.s32.totalorder %s171, %s185
      %p187 = scmp.eq.s32.totalorder %s30, 0
      %p188 = por %p186, %p187
      %s190 = sadd.s32 %s189, 1
      %p193 = scmp.eq.s32.totalorder %s24, 1
      %p194 = scmp.ne.s32.totalorder %s189, %s191
      %p195 = scmp.eq.s32.totalorder %s24, 0
      %p196 = por %p194, %p195
      %p197 = scmp.ne.s32.totalorder %s189, %s191
      %p198 = scmp.eq.s32.totalorder %s29, 1
      %p199 = por %p197, %p198
      %p200 = scmp.ne.s32.totalorder %s191, %s192
      %p201 = scmp.eq.s32.totalorder %s29, 0
      %p202 = por %p200, %p201
      %p203 = scmp.ne.s32.totalorder %s191, %s192
      %p204 = scmp.eq.s32.totalorder %s30, 1
      %p205 = por %p203, %p204
      %p207 = scmp.ne.s32.totalorder %s192, %s206
      %p208 = scmp.eq.s32.totalorder %s30, 0
      %p209 = por %p207, %p208
      %s210 = ssub.s32 %s24, %s31
      %p211 = scmp.eq.s32.totalorder %s210, 0
      %s213 = sadd.s32 %s212, 1
      %s214 = scalar_select %p211, %s212, %s213
      %p217 = pneg %p211
      %p218 = scmp.eq.s32.totalorder %s24, 1
      %p219 = por %p217, %p218
      %p220 = scmp.ne.s32.totalorder %s212, %s215
      %p221 = scmp.eq.s32.totalorder %s24, 0
      %p222 = por %p220, %p221
      %p223 = scmp.ne.s32.totalorder %s212, %s215
      %p224 = scmp.eq.s32.totalorder %s29, 1
      %p225 = por %p223, %p224
      %p226 = scmp.ne.s32.totalorder %s215, %s216
      %p227 = scmp.eq.s32.totalorder %s29, 0
      %p228 = por %p226, %p227
      %p229 = scmp.ne.s32.totalorder %s215, %s216
      %p230 = scmp.eq.s32.totalorder %s30, 1
      %p231 = por %p229, %p230
      %p233 = scmp.ne.s32.totalorder %s216, %s232
      %p234 = scmp.eq.s32.totalorder %s30, 0
      %p235 = por %p233, %p234
      %p236 = scmp.le.s32.totalorder 1, %s24
      %p237 = scmp.lt.s32.totalorder %s24, 3
      %p238 = pnand %p236, %p237
      %p239 = pneg %p238
      // Predicated region
      $region9: #{tpu_custom_call.1} parent=5 // pred_check
        _
      $region10: #{tpu_custom_call.1} parent=5 // pred_check_branch
        %241 = sbr.rel (%p238) target = $region12
      $region11: #{tpu_custom_call.1} parent=5 // pred_region
        %s242 = ssub.s32 %s24, 1
        // Predicated region
        $region13: #{tpu_custom_call.1} parent=11 // pred_check
          %p243 = pneg %p97
        $region14: #{tpu_custom_call.1} parent=11 // pred_check_branch
          %245 = sbr.rel (%p243) target = $region16
        $region15: #{tpu_custom_call.1} parent=11 // pred_region
          %s247 = ssub.s32 768, 768
          %248 = vsyncadd [#allocation6], %s247
          %s249 = sshll.u32 [#allocation7], 4
          %s250 = int_to_ptr.vmem [resolvable:$true] %s249
          %255 = dma.hbm_to_vmem [thread:$0]  %s2, 768, %s250, [#allocation6], 64, 64, 4
        $region16: #{tpu_custom_call.1} parent=11 // pred_fallthru
          _
        // Predicated region
        $region17: #{tpu_custom_call.1} parent=11 // pred_check
          %p256 = pneg %p118
        $region18: #{tpu_custom_call.1} parent=11 // pred_check_branch
          %258 = sbr.rel (%p256) target = $region20
        $region19: #{tpu_custom_call.1} parent=11 // pred_region
          _
        $region20: #{tpu_custom_call.1} parent=11 // pred_fallthru
          _
        // Predicated region
        $region21: #{tpu_custom_call.1} parent=11 // pred_check
          %p259 = pneg %p139
        $region22: #{tpu_custom_call.1} parent=11 // pred_check_branch
          %261 = sbr.rel (%p259) target = $region24
        $region23: #{tpu_custom_call.1} parent=11 // pred_region
          %s263 = ssub.s32 256, 256
          %264 = vsyncadd [#allocation9], %s263
          %s265 = sshll.u32 [#allocation8], 4
          %s266 = int_to_ptr.vmem [resolvable:$true] %s265
          %271 = dma.hbm_to_vmem [thread:$0]  %s4, 256, %s266, [#allocation9], 128, 128, 8
        $region24: #{tpu_custom_call.1} parent=11 // pred_fallthru
          _
        // Predicated region
        $region25: #{tpu_custom_call.1} parent=11 // pred_check
          %p272 = pneg %p160
        $region26: #{tpu_custom_call.1} parent=11 // pred_check_branch
          %274 = sbr.rel (%p272) target = $region28
        $region27: #{tpu_custom_call.1} parent=11 // pred_region
          _
        $region28: #{tpu_custom_call.1} parent=11 // pred_fallthru
          _
        // Predicated region
        $region29: #{tpu_custom_call.1} parent=11 // pred_check
          %p275 = pneg %p181
        $region30: #{tpu_custom_call.1} parent=11 // pred_check_branch
          %277 = sbr.rel (%p275) target = $region32
        $region31: #{tpu_custom_call.1} parent=11 // pred_region
          _
        $region32: #{tpu_custom_call.1} parent=11 // pred_fallthru
          _
        // Predicated region
        $region33: #{tpu_custom_call.1} parent=11 // pred_check
          %p278 = pneg %p202
        $region34: #{tpu_custom_call.1} parent=11 // pred_check_branch
          %280 = sbr.rel (%p278) target = $region36
        $region35: #{tpu_custom_call.1} parent=11 // pred_region
          _
        $region36: #{tpu_custom_call.1} parent=11 // pred_fallthru
          _
      $region12: #{tpu_custom_call.1} parent=5 // pred_fallthru
        _
      %p281 = scmp.lt.s32.totalorder %s24, 2
      // Predicated region
      $region37: #{tpu_custom_call.1} parent=5 // pred_check
        %p282 = pneg %p281
      $region38: #{tpu_custom_call.1} parent=5 // pred_check_branch
        %284 = sbr.rel (%p282) target = $region40
      $region39: #{tpu_custom_call.1} parent=5 // pred_region
        // Predicated region
        $region41: #{tpu_custom_call.1} parent=39 // pred_check
          %p285 = pneg %p44
        $region42: #{tpu_custom_call.1} parent=39 // pred_check_branch
          %287 = sbr.rel (%p285) target = $region44
        $region43: #{tpu_custom_call.1} parent=39 // pred_region
          %s288 = sand.u32 %s34, 1
          %s289 = scalar_lea.sflag [#allocation3], %s288
          %s290 = sand.u32 %s34, 1
          %s291 = smul.addr %s290, 128
          %s292 = scalar_lea.vmem [#allocation2], %s291
          %s293 = smul.u32 2, %s24
          %s295 = ssub.s32 2048, 2048
          %296 = vsyncadd %s289, %s295
          %s297 = smul.addr %s293, 8
          %s298 = smul.addr %s297, 128
          %s299 = scalar_lea.hbm %s0, %s298
          %s300 = sshll.u32 %s292, 4
          %s301 = int_to_ptr.vmem [resolvable:$true] %s300
          %306 = dma.hbm_to_vmem [thread:$0]  %s299, 2048, %s301, %s289, 128, 128, 8
        $region44: #{tpu_custom_call.1} parent=39 // pred_fallthru
          _
        // Predicated region
        $region45: #{tpu_custom_call.1} parent=39 // pred_check
          %p307 = pneg %p70
        $region46: #{tpu_custom_call.1} parent=39 // pred_check_branch
          %309 = sbr.rel (%p307) target = $region48
        $region47: #{tpu_custom_call.1} parent=39 // pred_region
          %s310 = sand.u32 %s24, 1
          %s311 = scalar_lea.sflag [#allocation6], %s310
          %s312 = sand.u32 %s60, 1
          %s313 = smul.addr %s312, 8
          %s314 = scalar_lea.vmem [#allocation5], %s313
          %s315 = smul.u32 2, %s24
          %s317 = ssub.s32 128, 128
          %318 = vsyncadd %s311, %s317
          %s319 = smul.addr %s315, 64
          %s320 = scalar_lea.hbm %s1, %s319
          %s321 = sshll.u32 %s314, 4
          %s322 = int_to_ptr.vmem [resolvable:$true] %s321
          %327 = dma.hbm_to_vmem [thread:$0]  %s320, 128, %s322, %s311, 64, 64, 4
        $region48: #{tpu_custom_call.1} parent=39 // pred_fallthru
          _
      $region40: #{tpu_custom_call.1} parent=5 // pred_fallthru
        _
      %p328 = scmp.le.s32.totalorder 1, %s24
      %p329 = scmp.lt.s32.totalorder %s24, 3
      %p330 = pnand %p328, %p329
      %p331 = pneg %p330
      // Predicated region
      $region49: #{tpu_custom_call.1} parent=5 // pred_check
        _
      $region50: #{tpu_custom_call.1} parent=5 // pred_check_branch
        %333 = sbr.rel (%p330) target = $region52
      $region51: #{tpu_custom_call.1} parent=5 // pred_region
        %s334 = ssub.s32 %s24, 1
        %s335 = sand.u32 %s37, 1
        %s336 = scalar_lea.sflag [#allocation3], %s335
        %s337 = sand.u32 %s37, 1
        %s338 = smul.addr %s337, 128
        %s339 = scalar_lea.vmem [#allocation2], %s338
        // Predicated region
        $region53: #{tpu_custom_call.1} parent=51 // pred_check
          %p340 = pneg %p50
        $region54: #{tpu_custom_call.1} parent=51 // pred_check_branch
          %342 = sbr.rel (%p340) target = $region56
        $region55: #{tpu_custom_call.1} parent=51 // pred_region
          %343 = dma.done %s336, 2048
        $region56: #{tpu_custom_call.1} parent=51 // pred_fallthru
          _
        %s344 = sand.u32 %s29, 1
        %s345 = scalar_lea.sflag [#allocation6], %s344
        %s346 = sand.u32 %s63, 1
        %s347 = smul.addr %s346, 8
        %s348 = scalar_lea.vmem [#allocation5], %s347
        // Predicated region
        $region57: #{tpu_custom_call.1} parent=51 // pred_check
          %p349 = pneg %p76
        $region58: #{tpu_custom_call.1} parent=51 // pred_check_branch
          %351 = sbr.rel (%p349) target = $region60
        $region59: #{tpu_custom_call.1} parent=51 // pred_region
          %352 = dma.done %s345, 128
        $region60: #{tpu_custom_call.1} parent=51 // pred_fallthru
          _
        // Predicated region
        $region61: #{tpu_custom_call.1} parent=51 // pred_check
          %p353 = pneg %p97
        $region62: #{tpu_custom_call.1} parent=51 // pred_check_branch
          %355 = sbr.rel (%p353) target = $region64
        $region63: #{tpu_custom_call.1} parent=51 // pred_region
          %356 = dma.done [#allocation6], 768
        $region64: #{tpu_custom_call.1} parent=51 // pred_fallthru
          _
        // Predicated region
        $region65: #{tpu_custom_call.1} parent=51 // pred_check
          %p357 = pneg %p139
        $region66: #{tpu_custom_call.1} parent=51 // pred_check_branch
          %359 = sbr.rel (%p357) target = $region68
        $region67: #{tpu_custom_call.1} parent=51 // pred_region
          %360 = dma.done [#allocation9], 256
        $region68: #{tpu_custom_call.1} parent=51 // pred_fallthru
          _
        %s361 = sand.u32 %s37, 1
        %s362 = scalar_lea.sflag [#allocation3], %s361
        %s363 = sand.u32 %s37, 1
        %s364 = smul.addr %s363, 128
        %s365 = scalar_lea.vmem [#allocation2], %s364
        %p366 = pneg %p50
        %p367 = pneg %p47
        %s368 = sand.u32 %s29, 1
        %s369 = scalar_lea.sflag [#allocation6], %s368
        %s370 = sand.u32 %s63, 1
        %s371 = smul.addr %s370, 8
        %s372 = scalar_lea.vmem [#allocation5], %s371
        %p373 = pneg %p76
        %p374 = pneg %p73
        %p375 = pneg %p97
        %p376 = pneg %p94
        %p377 = pneg %p118
        %p378 = pneg %p115
        %p379 = pneg %p139
        %p380 = pneg %p136
        %p381 = pneg %p160
        %p382 = pneg %p157
        %p383 = pneg %p181
        %p384 = pneg %p178
        %p385 = pneg %p202
        %p386 = pneg %p199
        %p387 = pneg %p228
        %p388 = pneg %p225
        %s389 = sand.u32 %s215, 1
        %s390 = scalar_lea.sflag [#allocation4], %s389
        %s391 = sand.u32 %s215, 1
        %s392 = smul.addr %s391, 128
        %s393 = scalar_lea.vmem [#allocation10], %s392
        %s394 = smul.u32 2, %s29
        %s395 = smul.u32 2, %s29
        %s396 = smul.u32 2, %s29
        %v398 = vld [vmem:[%s339] sm:$0xff]
        %v399 = vld [vmem:[%s339 + $0x8] sm:$0xff]
        %v400 = vld [vmem:[%s339 + $0x10] sm:$0xff]
        %v401 = vld [vmem:[%s339 + $0x18] sm:$0xff]
        %v402 = vld [vmem:[%s339 + $0x20] sm:$0xff]
        %v403 = vld [vmem:[%s339 + $0x28] sm:$0xff]
        %v404 = vld [vmem:[%s339 + $0x30] sm:$0xff]
        %v405 = vld [vmem:[%s339 + $0x38] sm:$0xff]
        %v406 = vld [vmem:[%s339 + $0x40] sm:$0xff]
        %v407 = vld [vmem:[%s339 + $0x48] sm:$0xff]
        %v408 = vld [vmem:[%s339 + $0x50] sm:$0xff]
        %v409 = vld [vmem:[%s339 + $0x58] sm:$0xff]
        %v410 = vld [vmem:[%s339 + $0x60] sm:$0xff]
        %v411 = vld [vmem:[%s339 + $0x68] sm:$0xff]
        %v412 = vld [vmem:[%s339 + $0x70] sm:$0xff]
        %v413 = vld [vmem:[%s339 + $0x78] sm:$0xff]
        %v414 = vld [vmem:[#allocation7] sm:$0xf]
        %v415 = vld [vmem:[#allocation7 + $0x4] sm:$0xf]
        %v416 = vld [vmem:[#allocation7 + $0x8] sm:$0xf]
        %v417 = vld [vmem:[#allocation7 + $0xc] sm:$0xf]
        %v418 = vld [vmem:[#allocation7 + $0x10] sm:$0xf]
        %v419 = vld [vmem:[#allocation7 + $0x14] sm:$0xf]
        %v420 = vld [vmem:[#allocation7 + $0x18] sm:$0xf]
        %v421 = vld [vmem:[#allocation7 + $0x1c] sm:$0xf]
        %v422 = vld [vmem:[#allocation7 + $0x20] sm:$0xf]
        %v423 = vld [vmem:[#allocation7 + $0x24] sm:$0xf]
        %v424 = vld [vmem:[#allocation7 + $0x28] sm:$0xf]
        %v425 = vld [vmem:[#allocation7 + $0x2c] sm:$0xf]
        %v426 = vld [vmem:[%s3] sm:$0x7]
        %v427 = vld [vmem:[%s6] sm:$0x7]
        %v428 = vld [vmem:[%s7] sm:$0x7]
        %v429 = vld [vmem:[%s348] sm:$0xf]
        %v430 = vld [vmem:[%s348 + $0x4] sm:$0xf]
        %v431 = vld [vmem:[#allocation8] sm:$0xff]
        %v432 = vld [vmem:[#allocation8 + $0x8] sm:$0xff]
        %v433 = vld [vmem:[%s5] sm:$0x3]
        %v435 = vlaneseq
        %v436 = vshrl.u32 %v435, 7
        %v437 = vsub.s32 0, %v436
        %v438 = vrot.slane %v433, %v437
        %v439 = vlaneseq
        %v440 = vshrl.u32 %v439, 7
        %v441 = vsub.s32 1, %v440
        %v442 = vrot.slane %v433, %v441
        %v447 = vunpack.c.l.b16 %v429
        %v448 = vunpack.c.l.b16 %v430
        %v449 = vpack.c.b16 %v448, %v447
        %v452 = vunpack.c.l.b16 %v431
        %v453 = vunpack.c.h.b16 %v431
        %v454 = vunpack.c.l.b16 %v432
        %v455 = vunpack.c.h.b16 %v432
        %v456 = vpack.c.b16 %v454, %v452
        %v457 = vpack.c.b16 %v455, %v453
        %vm460 = vcmask 130048
        %v462 = vsel %vm460, %v449, 0
        %464 = vmatprep.subr.bf16.mxu0 %v457
        %465 = vmatpush1.bf16.msra.mxu0 %v456
        %466 = vmatprep.subr.bf16.mxu0 0
        %467 = vmatpush1.bf16.msra.mxu0 0
        %468 = vmatprep.subr.bf16.mxu0 0
        %469 = vmatpush1.bf16.msra.mxu0 0
        %470 = vmatprep.subr.bf16.mxu0 0
        %471 = vmatpush1.bf16.msra.mxu0 0
        %472 = vmatprep.subr.bf16.mxu0 0
        %473 = vmatpush1.bf16.msra.mxu0 0
        %474 = vmatprep.subr.bf16.mxu0 0
        %475 = vmatpush1.bf16.msra.mxu0 0
        %476 = vmatprep.subr.bf16.mxu0 0
        %477 = vmatpush1.bf16.msra.mxu0 0
        %478 = vmatprep.subr.bf16.mxu0 0
        %479 = vmatpush1.bf16.msra.mxu0 0
        %480 = vmatprep.subr.bf16.mxu0 0
        %481 = vmatpush1.bf16.msra.mxu0 0
        %482 = vmatprep.subr.bf16.mxu0 0
        %483 = vmatpush1.bf16.msra.mxu0 0
        %484 = vmatprep.subr.bf16.mxu0 0
        %485 = vmatpush1.bf16.msra.mxu0 0
        %486 = vmatprep.subr.bf16.mxu0 0
        %487 = vmatpush1.bf16.msra.mxu0 0
        %488 = vmatprep.subr.bf16.mxu0 0
        %489 = vmatpush1.bf16.msra.mxu0 0
        %490 = vmatprep.subr.bf16.mxu0 0
        %491 = vmatpush1.bf16.msra.mxu0 0
        %492 = vmatprep.subr.bf16.mxu0 0
        %493 = vmatpush1.bf16.msra.mxu0 0
        %494 = vmatprep.subr.bf16.mxu0 0
        %495 = vmatpush1.bf16.msra.mxu0 0
        %496 = vmatprep.mubr.bf16.mxu0 0
        %497 = vmatmul.mubr.bf16.gmra.mrb[0].mxu0 %v462
        %v498 = vpop.f32.mrb[0].mxu0
        %v499 = vadd.f32 %v438, %v498
        %v500 = vpop.f32.mrb[0].mxu0
        %v501 = vadd.f32 %v442, %v500
        %v502 = vpop.f32.mrb[0].mxu0
        %v503 = vadd.f32 %v438, %v502
        %v504 = vpop.f32.mrb[0].mxu0
        %v505 = vadd.f32 %v442, %v504
        %506 = vdwg.mxu0
        %v507 = vpack.c.bf16 %v503, %v499
        %v508 = vpack.c.bf16 %v505, %v501
        %v511 = vunpack.c.l.b16 %v507
        %v512 = vunpack.c.l.b16 %v508
        %v513 = vunpack.c.h.b16 %v507
        %v514 = vunpack.c.h.b16 %v508
        %v515 = vpack.c.b16 %v512, %v511
        %v516 = vpack.c.b16 %v514, %v513
        %vm517 = vcmask 261120
        %v518 = vsel %vm517, %v398, 0.0
        %v519 = vrot.slane %v518, 4
        %v520 = vadd.f32 %v518, %v519
        %v521 = vrot.slane %v520, 2
        %v522 = vadd.f32 %v520, %v521
        %v523 = vrot.slane %v522, 1
        %v524 = vadd.f32 %v522, %v523
        %v525 = vsel %vm517, %v399, 0.0
        %v526 = vrot.slane %v525, 4
        %v527 = vadd.f32 %v525, %v526
        %v528 = vrot.slane %v527, 2
        %v529 = vadd.f32 %v527, %v528
        %v530 = vrot.slane %v529, 1
        %v531 = vadd.f32 %v529, %v530
        %v532 = vsel %vm517, %v400, 0.0
        %v533 = vrot.slane %v532, 4
        %v534 = vadd.f32 %v532, %v533
        %v535 = vrot.slane %v534, 2
        %v536 = vadd.f32 %v534, %v535
        %v537 = vrot.slane %v536, 1
        %v538 = vadd.f32 %v536, %v537
        %v539 = vsel %vm517, %v401, 0.0
        %v540 = vrot.slane %v539, 4
        %v541 = vadd.f32 %v539, %v540
        %v542 = vrot.slane %v541, 2
        %v543 = vadd.f32 %v541, %v542
        %v544 = vrot.slane %v543, 1
        %v545 = vadd.f32 %v543, %v544
        %v546 = vsel %vm517, %v402, 0.0
        %v547 = vrot.slane %v546, 4
        %v548 = vadd.f32 %v546, %v547
        %v549 = vrot.slane %v548, 2
        %v550 = vadd.f32 %v548, %v549
        %v551 = vrot.slane %v550, 1
        %v552 = vadd.f32 %v550, %v551
        %v553 = vsel %vm517, %v403, 0.0
        %v554 = vrot.slane %v553, 4
        %v555 = vadd.f32 %v553, %v554
        %v556 = vrot.slane %v555, 2
        %v557 = vadd.f32 %v555, %v556
        %v558 = vrot.slane %v557, 1
        %v559 = vadd.f32 %v557, %v558
        %v560 = vsel %vm517, %v404, 0.0
        %v561 = vrot.slane %v560, 4
        %v562 = vadd.f32 %v560, %v561
        %v563 = vrot.slane %v562, 2
        %v564 = vadd.f32 %v562, %v563
        %v565 = vrot.slane %v564, 1
        %v566 = vadd.f32 %v564, %v565
        %v567 = vsel %vm517, %v405, 0.0
        %v568 = vrot.slane %v567, 4
        %v569 = vadd.f32 %v567, %v568
        %v570 = vrot.slane %v569, 2
        %v571 = vadd.f32 %v569, %v570
        %v572 = vrot.slane %v571, 1
        %v573 = vadd.f32 %v571, %v572
        %v574 = vsel %vm517, %v406, 0.0
        %v575 = vrot.slane %v574, 4
        %v576 = vadd.f32 %v574, %v575
        %v577 = vrot.slane %v576, 2
        %v578 = vadd.f32 %v576, %v577
        %v579 = vrot.slane %v578, 1
        %v580 = vadd.f32 %v578, %v579
        %v581 = vsel %vm517, %v407, 0.0
        %v582 = vrot.slane %v581, 4
        %v583 = vadd.f32 %v581, %v582
        %v584 = vrot.slane %v583, 2
        %v585 = vadd.f32 %v583, %v584
        %v586 = vrot.slane %v585, 1
        %v587 = vadd.f32 %v585, %v586
        %v588 = vsel %vm517, %v408, 0.0
        %v589 = vrot.slane %v588, 4
        %v590 = vadd.f32 %v588, %v589
        %v591 = vrot.slane %v590, 2
        %v592 = vadd.f32 %v590, %v591
        %v593 = vrot.slane %v592, 1
        %v594 = vadd.f32 %v592, %v593
        %v595 = vsel %vm517, %v409, 0.0
        %v596 = vrot.slane %v595, 4
        %v597 = vadd.f32 %v595, %v596
        %v598 = vrot.slane %v597, 2
        %v599 = vadd.f32 %v597, %v598
        %v600 = vrot.slane %v599, 1
        %v601 = vadd.f32 %v599, %v600
        %v602 = vsel %vm517, %v410, 0.0
        %v603 = vrot.slane %v602, 4
        %v604 = vadd.f32 %v602, %v603
        %v605 = vrot.slane %v604, 2
        %v606 = vadd.f32 %v604, %v605
        %v607 = vrot.slane %v606, 1
        %v608 = vadd.f32 %v606, %v607
        %v609 = vsel %vm517, %v411, 0.0
        %v610 = vrot.slane %v609, 4
        %v611 = vadd.f32 %v609, %v610
        %v612 = vrot.slane %v611, 2
        %v613 = vadd.f32 %v611, %v612
        %v614 = vrot.slane %v613, 1
        %v615 = vadd.f32 %v613, %v614
        %v616 = vsel %vm517, %v412, 0.0
        %v617 = vrot.slane %v616, 4
        %v618 = vadd.f32 %v616, %v617
        %v619 = vrot.slane %v618, 2
        %v620 = vadd.f32 %v618, %v619
        %v621 = vrot.slane %v620, 1
        %v622 = vadd.f32 %v620, %v621
        %v623 = vsel %vm517, %v413, 0.0
        %v624 = vrot.slane %v623, 4
        %v625 = vadd.f32 %v623, %v624
        %v626 = vrot.slane %v625, 2
        %v627 = vadd.f32 %v625, %v626
        %v628 = vrot.slane %v627, 1
        %v629 = vadd.f32 %v627, %v628
        %v630 = vrcp.pop 8.0
        %v631 = vmul.f32 %v524, %v630
        %v632 = vmul.f32 %v531, %v630
        %v633 = vmul.f32 %v538, %v630
        %v634 = vmul.f32 %v545, %v630
        %v635 = vmul.f32 %v552, %v630
        %v636 = vmul.f32 %v559, %v630
        %v637 = vmul.f32 %v566, %v630
        %v638 = vmul.f32 %v573, %v630
        %v639 = vmul.f32 %v580, %v630
        %v640 = vmul.f32 %v587, %v630
        %v641 = vmul.f32 %v594, %v630
        %v642 = vmul.f32 %v601, %v630
        %v643 = vmul.f32 %v608, %v630
        %v644 = vmul.f32 %v615, %v630
        %v645 = vmul.f32 %v622, %v630
        %v646 = vmul.f32 %v629, %v630
        %v647 = vpack.c.bf16 %v631, %v631
        %v648 = vpack.c.bf16 %v632, %v632
        %v649 = vpack.c.bf16 %v633, %v633
        %v650 = vpack.c.bf16 %v634, %v634
        %v651 = vpack.c.bf16 %v635, %v635
        %v652 = vpack.c.bf16 %v636, %v636
        %v653 = vpack.c.bf16 %v637, %v637
        %v654 = vpack.c.bf16 %v638, %v638
        %v655 = vpack.c.bf16 %v639, %v639
        %v656 = vpack.c.bf16 %v640, %v640
        %v657 = vpack.c.bf16 %v641, %v641
        %v658 = vpack.c.bf16 %v642, %v642
        %v659 = vpack.c.bf16 %v643, %v643
        %v660 = vpack.c.bf16 %v644, %v644
        %v661 = vpack.c.bf16 %v645, %v645
        %v662 = vpack.c.bf16 %v646, %v646
        %v663 = vlaneseq
        %v664 = vshrl.u32 %v663, 7
        %v665 = vsub.s32 0, %v664
        %v666 = vrot.slane %v426, %v665
        %v683 = vunpack.c.l.b16 %v647
        %v684 = vunpack.c.l.b16 %v648
        %v685 = vunpack.c.l.b16 %v649
        %v686 = vunpack.c.l.b16 %v650
        %v687 = vunpack.c.l.b16 %v651
        %v688 = vunpack.c.l.b16 %v652
        %v689 = vunpack.c.l.b16 %v653
        %v690 = vunpack.c.l.b16 %v654
        %v691 = vunpack.c.l.b16 %v655
        %v692 = vunpack.c.l.b16 %v656
        %v693 = vunpack.c.l.b16 %v657
        %v694 = vunpack.c.l.b16 %v658
        %v695 = vunpack.c.l.b16 %v659
        %v696 = vunpack.c.l.b16 %v660
        %v697 = vunpack.c.l.b16 %v661
        %v698 = vunpack.c.l.b16 %v662
        %vm699 = vcmask 1041409
        %v700 = vsel %vm699, %v684, %v683
        %vm701 = vcmask 1042434
        %v702 = vsel %vm701, %v685, %v700
        %vm703 = vcmask 1043459
        %v704 = vsel %vm703, %v686, %v702
        %vm705 = vcmask 1044484
        %v706 = vsel %vm705, %v687, %v704
        %vm707 = vcmask 1045509
        %v708 = vsel %vm707, %v688, %v706
        %vm709 = vcmask 1046534
        %v710 = vsel %vm709, %v689, %v708
        %vm711 = vcmask 1047559
        %v712 = vsel %vm711, %v690, %v710
        %v713 = vsel %vm699, %v692, %v691
        %v714 = vsel %vm701, %v693, %v713
        %v715 = vsel %vm703, %v694, %v714
        %v716 = vsel %vm705, %v695, %v715
        %v717 = vsel %vm707, %v696, %v716
        %v718 = vsel %vm709, %v697, %v717
        %v719 = vsel %vm711, %v698, %v718
        %v720 = vpack.c.b16 %v719, %v712
        %v725 = vunpack.c.l.b16 %v414
        %v726 = vunpack.c.l.b16 %v415
        %v727 = vunpack.c.l.b16 %v416
        %v728 = vunpack.c.l.b16 %v417
        %v729 = vpack.c.b16 %v726, %v725
        %v730 = vpack.c.b16 %v728, %v727
        %v734 = vsel %vm517, %v720, 0
        %736 = vmatprep.subr.bf16.mxu0 0
        %737 = vmatpush1.bf16.msra.mxu0 %v729
        %738 = vmatprep.subr.bf16.mxu0 0
        %739 = vmatpush1.bf16.msra.mxu0 %v730
        %740 = vmatprep.subr.bf16.mxu0 0
        %741 = vmatpush1.bf16.msra.mxu0 0
        %742 = vmatprep.subr.bf16.mxu0 0
        %743 = vmatpush1.bf16.msra.mxu0 0
        %744 = vmatprep.subr.bf16.mxu0 0
        %745 = vmatpush1.bf16.msra.mxu0 0
        %746 = vmatprep.subr.bf16.mxu0 0
        %747 = vmatpush1.bf16.msra.mxu0 0
        %748 = vmatprep.subr.bf16.mxu0 0
        %749 = vmatpush1.bf16.msra.mxu0 0
        %750 = vmatprep.subr.bf16.mxu0 0
        %751 = vmatpush1.bf16.msra.mxu0 0
        %752 = vmatprep.subr.bf16.mxu0 0
        %753 = vmatpush1.bf16.msra.mxu0 0
        %754 = vmatprep.subr.bf16.mxu0 0
        %755 = vmatpush1.bf16.msra.mxu0 0
        %756 = vmatprep.subr.bf16.mxu0 0
        %757 = vmatpush1.bf16.msra.mxu0 0
        %758 = vmatprep.subr.bf16.mxu0 0
        %759 = vmatpush1.bf16.msra.mxu0 0
        %760 = vmatprep.subr.bf16.mxu0 0
        %761 = vmatpush1.bf16.msra.mxu0 0
        %762 = vmatprep.subr.bf16.mxu0 0
        %763 = vmatpush1.bf16.msra.mxu0 0
        %764 = vmatprep.subr.bf16.mxu0 0
        %765 = vmatpush1.bf16.msra.mxu0 0
        %766 = vmatprep.subr.bf16.mxu0 0
        %767 = vmatpush1.bf16.msra.mxu0 0
        %768 = vmatprep.mubr.bf16.mxu0 0
        %769 = vmatmul.mubr.bf16.gmra.mrb[0].mxu0 %v734
        %v770 = vpop.f32.mrb[0].mxu0
        %v771 = vadd.f32 %v666, %v770
        %v772 = vpop.f32.mrb[0].mxu0
        %v773 = vpop.f32.mrb[0].mxu0
        %v774 = vadd.f32 %v666, %v773
        %v775 = vpop.f32.mrb[0].mxu0
        %776 = vdwg.mxu0
        %v777 = vpack.c.bf16 %v771, %v771
        %v778 = vpack.c.bf16 %v774, %v774
        %v780 = vsel %vm517, %v777, 0
        %v783 = vsel %vm517, %v515, 0
        %785 = vmatprep.subr.bf16.mxu0 0
        %786 = vmatpush1.bf16.xpose.msra.mxu0 %v783
        %787 = vmatprep.subr.bf16.mxu0 0
        %788 = vmatpush1.bf16.xpose.msra.mxu0 0
        %789 = vmatprep.subr.bf16.mxu0 0
        %790 = vmatpush1.bf16.xpose.msra.mxu0 0
        %791 = vmatprep.subr.bf16.mxu0 0
        %792 = vmatpush1.bf16.xpose.msra.mxu0 0
        %793 = vmatprep.subr.bf16.mxu0 0
        %794 = vmatpush1.bf16.xpose.msra.mxu0 0
        %795 = vmatprep.subr.bf16.mxu0 0
        %796 = vmatpush1.bf16.xpose.msra.mxu0 0
        %797 = vmatprep.subr.bf16.mxu0 0
        %798 = vmatpush1.bf16.xpose.msra.mxu0 0
        %799 = vmatprep.subr.bf16.mxu0 0
        %800 = vmatpush1.bf16.xpose.msra.mxu0 0
        %801 = vmatprep.subr.bf16.mxu0 0
        %802 = vmatpush1.bf16.xpose.msra.mxu0 0
        %803 = vmatprep.subr.bf16.mxu0 0
        %804 = vmatpush1.bf16.xpose.msra.mxu0 0
        %805 = vmatprep.subr.bf16.mxu0 0
        %806 = vmatpush1.bf16.xpose.msra.mxu0 0
        %807 = vmatprep.subr.bf16.mxu0 0
        %808 = vmatpush1.bf16.xpose.msra.mxu0 0
        %809 = vmatprep.subr.bf16.mxu0 0
        %810 = vmatpush1.bf16.xpose.msra.mxu0 0
        %811 = vmatprep.subr.bf16.mxu0 0
        %812 = vmatpush1.bf16.xpose.msra.mxu0 0
        %813 = vmatprep.subr.bf16.mxu0 0
        %814 = vmatpush1.bf16.xpose.msra.mxu0 0
        %815 = vmatprep.subr.bf16.mxu0 0
        %816 = vmatpush1.bf16.xpose.msra.mxu0 0
        %817 = vmatprep.mubr.bf16.mxu0 0
        %818 = vmatmul.mubr.bf16.gmra.mrb[0].mxu0 %v780
        %v819 = vpop.f32.mrb[0].mxu0
        %v820 = vadd.f32 0.0, %v819
        %v821 = vpop.f32.mrb[0].mxu0
        %v822 = vpop.f32.mrb[0].mxu0
        %v823 = vpop.f32.mrb[0].mxu0
        %824 = vdwg.mxu0
        %v826 = vsel %vm517, %v778, 0
        %v829 = vsel %vm517, %v516, 0
        %831 = vmatprep.subr.bf16.mxu0 0
        %832 = vmatpush1.bf16.xpose.msra.mxu0 %v829
        %833 = vmatprep.subr.bf16.mxu0 0
        %834 = vmatpush1.bf16.xpose.msra.mxu0 0
        %835 = vmatprep.subr.bf16.mxu0 0
        %836 = vmatpush1.bf16.xpose.msra.mxu0 0
        %837 = vmatprep.subr.bf16.mxu0 0
        %838 = vmatpush1.bf16.xpose.msra.mxu0 0
        %839 = vmatprep.subr.bf16.mxu0 0
        %840 = vmatpush1.bf16.xpose.msra.mxu0 0
        %841 = vmatprep.subr.bf16.mxu0 0
        %842 = vmatpush1.bf16.xpose.msra.mxu0 0
        %843 = vmatprep.subr.bf16.mxu0 0
        %844 = vmatpush1.bf16.xpose.msra.mxu0 0
        %845 = vmatprep.subr.bf16.mxu0 0
        %846 = vmatpush1.bf16.xpose.msra.mxu0 0
        %847 = vmatprep.subr.bf16.mxu0 0
        %848 = vmatpush1.bf16.xpose.msra.mxu0 0
        %849 = vmatprep.subr.bf16.mxu0 0
        %850 = vmatpush1.bf16.xpose.msra.mxu0 0
        %851 = vmatprep.subr.bf16.mxu0 0
        %852 = vmatpush1.bf16.xpose.msra.mxu0 0
        %853 = vmatprep.subr.bf16.mxu0 0
        %854 = vmatpush1.bf16.xpose.msra.mxu0 0
        %855 = vmatprep.subr.bf16.mxu0 0
        %856 = vmatpush1.bf16.xpose.msra.mxu0 0
        %857 = vmatprep.subr.bf16.mxu0 0
        %858 = vmatpush1.bf16.xpose.msra.mxu0 0
        %859 = vmatprep.subr.bf16.mxu0 0
        %860 = vmatpush1.bf16.xpose.msra.mxu0 0
        %861 = vmatprep.subr.bf16.mxu0 0
        %862 = vmatpush1.bf16.xpose.msra.mxu0 0
        %863 = vmatprep.mubr.bf16.mxu0 0
        %864 = vmatmul.mubr.bf16.gmra.mrb[0].mxu0 %v826
        %v865 = vpop.f32.mrb[0].mxu0
        %v866 = vadd.f32 0.0, %v865
        %v867 = vpop.f32.mrb[0].mxu0
        %v868 = vpop.f32.mrb[0].mxu0
        %v869 = vpop.f32.mrb[0].mxu0
        %870 = vdwg.mxu0
        %vm871 = vcmask 64512
        %v872 = vsel %vm871, %v820, -inf
        %873 = vmax.xlane.f32.xlu0 %v872
        %v874 = vpop.xlane.xlu0 %873
        %v875 = vsel %vm871, %v866, -inf
        %876 = vmax.xlane.f32.xlu0 %v875
        %v877 = vpop.xlane.xlu0 %876
        %v878 = vsub.f32 %v820, %v874
        %v879 = vsub.f32 %v866, %v877
        %v880 = vmul.f32 %v878, 1.442695
        %v881 = vpow.pop %v880
        %v882 = vmul.f32 %v879, 1.442695
        %v883 = vpow.pop %v882
        %v884 = vsel %vm871, %v881, 0.0
        %885 = vadd.xlane.f32.xlu0 %v884
        %v886 = vpop.xlane.xlu0 %885
        %v887 = vsel %vm871, %v883, 0.0
        %888 = vadd.xlane.f32.xlu0 %v887
        %v889 = vpop.xlane.xlu0 %888
        %v890 = vrcp.pop %v886
        %v891 = vrcp.pop %v889
        %v892 = vmul.f32 %v881, %v890
        %v893 = vmul.f32 %v883, %v891
        %v894 = vpack.c.bf16 %v892, %v892
        %v895 = vpack.c.bf16 %v893, %v893
        %v896 = vpack.c.b16 %v511, %v511
        %897 = vrot.lane.b32.xlu0 %v896, 32
        %v898 = vpop.permute.xlu0 %897
        %v900 = vsel %vm871, %v894, 0
        %vm902 = vcmask 1043456
        %v904 = vsel %vm902, %v898, 0
        %906 = vmatprep.subr.bf16.mxu0 0
        %907 = vmatpush1.bf16.msra.mxu0 %v904
        %908 = vmatprep.subr.bf16.mxu0 0
        %909 = vmatpush1.bf16.msra.mxu0 0
        %910 = vmatprep.subr.bf16.mxu0 0
        %911 = vmatpush1.bf16.msra.mxu0 0
        %912 = vmatprep.subr.bf16.mxu0 0
        %913 = vmatpush1.bf16.msra.mxu0 0
        %914 = vmatprep.subr.bf16.mxu0 0
        %915 = vmatpush1.bf16.msra.mxu0 0
        %916 = vmatprep.subr.bf16.mxu0 0
        %917 = vmatpush1.bf16.msra.mxu0 0
        %918 = vmatprep.subr.bf16.mxu0 0
        %919 = vmatpush1.bf16.msra.mxu0 0
        %920 = vmatprep.subr.bf16.mxu0 0
        %921 = vmatpush1.bf16.msra.mxu0 0
        %922 = vmatprep.subr.bf16.mxu0 0
        %923 = vmatpush1.bf16.msra.mxu0 0
        %924 = vmatprep.subr.bf16.mxu0 0
        %925 = vmatpush1.bf16.msra.mxu0 0
        %926 = vmatprep.subr.bf16.mxu0 0
        %927 = vmatpush1.bf16.msra.mxu0 0
        %928 = vmatprep.subr.bf16.mxu0 0
        %929 = vmatpush1.bf16.msra.mxu0 0
        %930 = vmatprep.subr.bf16.mxu0 0
        %931 = vmatpush1.bf16.msra.mxu0 0
        %932 = vmatprep.subr.bf16.mxu0 0
        %933 = vmatpush1.bf16.msra.mxu0 0
        %934 = vmatprep.subr.bf16.mxu0 0
        %935 = vmatpush1.bf16.msra.mxu0 0
        %936 = vmatprep.subr.bf16.mxu0 0
        %937 = vmatpush1.bf16.msra.mxu0 0
        %938 = vmatprep.mubr.bf16.mxu0 0
        %939 = vmatmul.mubr.bf16.gmra.mrb[0].mxu0 %v900
        %v940 = vpop.f32.mrb[0].mxu0
        %v941 = vadd.f32 0.0, %v940
        %v942 = vpop.f32.mrb[0].mxu0
        %v943 = vpop.f32.mrb[0].mxu0
        %v944 = vpop.f32.mrb[0].mxu0
        %945 = vdwg.mxu0
        %v946 = vpack.c.b16 %v513, %v513
        %947 = vrot.lane.b32.xlu0 %v946, 32
        %v948 = vpop.permute.xlu0 %947
        %v950 = vsel %vm871, %v895, 0
        %v953 = vsel %vm902, %v948, 0
        %955 = vmatprep.subr.bf16.mxu0 0
        %956 = vmatpush1.bf16.msra.mxu0 %v953
        %957 = vmatprep.subr.bf16.mxu0 0
        %958 = vmatpush1.bf16.msra.mxu0 0
        %959 = vmatprep.subr.bf16.mxu0 0
        %960 = vmatpush1.bf16.msra.mxu0 0
        %961 = vmatprep.subr.bf16.mxu0 0
        %962 = vmatpush1.bf16.msra.mxu0 0
        %963 = vmatprep.subr.bf16.mxu0 0
        %964 = vmatpush1.bf16.msra.mxu0 0
        %965 = vmatprep.subr.bf16.mxu0 0
        %966 = vmatpush1.bf16.msra.mxu0 0
        %967 = vmatprep.subr.bf16.mxu0 0
        %968 = vmatpush1.bf16.msra.mxu0 0
        %969 = vmatprep.subr.bf16.mxu0 0
        %970 = vmatpush1.bf16.msra.mxu0 0
        %971 = vmatprep.subr.bf16.mxu0 0
        %972 = vmatpush1.bf16.msra.mxu0 0
        %973 = vmatprep.subr.bf16.mxu0 0
        %974 = vmatpush1.bf16.msra.mxu0 0
        %975 = vmatprep.subr.bf16.mxu0 0
        %976 = vmatpush1.bf16.msra.mxu0 0
        %977 = vmatprep.subr.bf16.mxu0 0
        %978 = vmatpush1.bf16.msra.mxu0 0
        %979 = vmatprep.subr.bf16.mxu0 0
        %980 = vmatpush1.bf16.msra.mxu0 0
        %981 = vmatprep.subr.bf16.mxu0 0
        %982 = vmatpush1.bf16.msra.mxu0 0
        %983 = vmatprep.subr.bf16.mxu0 0
        %984 = vmatpush1.bf16.msra.mxu0 0
        %985 = vmatprep.subr.bf16.mxu0 0
        %986 = vmatpush1.bf16.msra.mxu0 0
        %987 = vmatprep.mubr.bf16.mxu0 0
        %988 = vmatmul.mubr.bf16.gmra.mrb[0].mxu0 %v950
        %v989 = vpop.f32.mrb[0].mxu0
        %v990 = vadd.f32 0.0, %v989
        %v991 = vpop.f32.mrb[0].mxu0
        %v992 = vpop.f32.mrb[0].mxu0
        %v993 = vpop.f32.mrb[0].mxu0
        %994 = vdwg.mxu0
        %v997 = vcombine.high %v941, %v941
        %v999 = vunpack.c.l.s4 1966171168
        %v1000 = vunpack.c.0.s8 %v999
        %v1001 = vlaneseq
        %v1002 = vshrl.u32 %v1001, 7
        %v1003 = vsub.s32 %v1000, %v1002
        %v1004 = vrot.slane %v941, %v1003
        %v1006 = vunpack.c.l.s4 1966171168
        %v1007 = vunpack.c.0.s8 %v1006
        %v1008 = vlaneseq
        %v1009 = vshrl.u32 %v1008, 7
        %v1010 = vsub.s32 %v1007, %v1009
        %v1011 = vrot.slane %v997, %v1010
        %v1012 = vcombine.high %v1004, %v1004
        %v1013 = vcombine.high %v1011, %v1011
        %v1015 = vunpack.c.l.s4 1966171168
        %v1016 = vunpack.c.0.s8 %v1015
        %v1017 = vlaneseq
        %v1018 = vshrl.u32 %v1017, 7
        %v1019 = vsub.s32 %v1016, %v1018
        %v1020 = vrot.slane %v1004, %v1019
        %v1022 = vunpack.c.l.s4 1966171168
        %v1023 = vunpack.c.0.s8 %v1022
        %v1024 = vlaneseq
        %v1025 = vshrl.u32 %v1024, 7
        %v1026 = vsub.s32 %v1023, %v1025
        %v1027 = vrot.slane %v1011, %v1026
        %v1029 = vunpack.c.l.s4 1966171168
        %v1030 = vunpack.c.0.s8 %v1029
        %v1031 = vlaneseq
        %v1032 = vshrl.u32 %v1031, 7
        %v1033 = vsub.s32 %v1030, %v1032
        %v1034 = vrot.slane %v1012, %v1033
        %v1036 = vunpack.c.l.s4 1966171168
        %v1037 = vunpack.c.0.s8 %v1036
        %v1038 = vlaneseq
        %v1039 = vshrl.u32 %v1038, 7
        %v1040 = vsub.s32 %v1037, %v1039
        %v1041 = vrot.slane %v1013, %v1040
        %v1042 = vcombine.high %v1020, %v1020
        %v1043 = vcombine.high %v1027, %v1027
        %v1044 = vcombine.high %v1034, %v1034
        %v1045 = vcombine.high %v1041, %v1041
        %v1046 = vcombine.high %v990, %v990
        %v1048 = vunpack.c.l.s4 1966171168
        %v1049 = vunpack.c.0.s8 %v1048
        %v1050 = vlaneseq
        %v1051 = vshrl.u32 %v1050, 7
        %v1052 = vsub.s32 %v1049, %v1051
        %v1053 = vrot.slane %v990, %v1052
        %v1055 = vunpack.c.l.s4 1966171168
        %v1056 = vunpack.c.0.s8 %v1055
        %v1057 = vlaneseq
        %v1058 = vshrl.u32 %v1057, 7
        %v1059 = vsub.s32 %v1056, %v1058
        %v1060 = vrot.slane %v1046, %v1059
        %v1061 = vcombine.high %v1053, %v1053
        %v1062 = vcombine.high %v1060, %v1060
        %v1064 = vunpack.c.l.s4 1966171168
        %v1065 = vunpack.c.0.s8 %v1064
        %v1066 = vlaneseq
        %v1067 = vshrl.u32 %v1066, 7
        %v1068 = vsub.s32 %v1065, %v1067
        %v1069 = vrot.slane %v1053, %v1068
        %v1071 = vunpack.c.l.s4 1966171168
        %v1072 = vunpack.c.0.s8 %v1071
        %v1073 = vlaneseq
        %v1074 = vshrl.u32 %v1073, 7
        %v1075 = vsub.s32 %v1072, %v1074
        %v1076 = vrot.slane %v1060, %v1075
        %v1078 = vunpack.c.l.s4 1966171168
        %v1079 = vunpack.c.0.s8 %v1078
        %v1080 = vlaneseq
        %v1081 = vshrl.u32 %v1080, 7
        %v1082 = vsub.s32 %v1079, %v1081
        %v1083 = vrot.slane %v1061, %v1082
        %v1085 = vunpack.c.l.s4 1966171168
        %v1086 = vunpack.c.0.s8 %v1085
        %v1087 = vlaneseq
        %v1088 = vshrl.u32 %v1087, 7
        %v1089 = vsub.s32 %v1086, %v1088
        %v1090 = vrot.slane %v1062, %v1089
        %v1091 = vcombine.high %v1069, %v1069
        %v1092 = vcombine.high %v1076, %v1076
        %v1093 = vcombine.high %v1083, %v1083
        %v1094 = vcombine.high %v1090, %v1090
        %v1095 = vlaneseq
        %v1096 = vshrl.u32 %v1095, 7
        %v1097 = vsub.s32 0, %v1096
        %v1098 = vrot.slane %v1020, %v1097
        %v1099 = vlaneseq
        %v1100 = vshrl.u32 %v1099, 7
        %v1101 = vsub.s32 0, %v1100
        %v1102 = vrot.slane %v1034, %v1101
        %v1103 = vlaneseq
        %v1104 = vshrl.u32 %v1103, 7
        %v1105 = vsub.s32 0, %v1104
        %v1106 = vrot.slane %v1042, %v1105
        %v1107 = vlaneseq
        %v1108 = vshrl.u32 %v1107, 7
        %v1109 = vsub.s32 0, %v1108
        %v1110 = vrot.slane %v1044, %v1109
        %v1111 = vlaneseq
        %v1112 = vshrl.u32 %v1111, 7
        %v1113 = vsub.s32 0, %v1112
        %v1114 = vrot.slane %v1027, %v1113
        %v1115 = vlaneseq
        %v1116 = vshrl.u32 %v1115, 7
        %v1117 = vsub.s32 0, %v1116
        %v1118 = vrot.slane %v1041, %v1117
        %v1119 = vlaneseq
        %v1120 = vshrl.u32 %v1119, 7
        %v1121 = vsub.s32 0, %v1120
        %v1122 = vrot.slane %v1043, %v1121
        %v1123 = vlaneseq
        %v1124 = vshrl.u32 %v1123, 7
        %v1125 = vsub.s32 0, %v1124
        %v1126 = vrot.slane %v1045, %v1125
        %v1127 = vlaneseq
        %v1128 = vshrl.u32 %v1127, 7
        %v1129 = vsub.s32 0, %v1128
        %v1130 = vrot.slane %v1069, %v1129
        %v1131 = vlaneseq
        %v1132 = vshrl.u32 %v1131, 7
        %v1133 = vsub.s32 0, %v1132
        %v1134 = vrot.slane %v1083, %v1133
        %v1135 = vlaneseq
        %v1136 = vshrl.u32 %v1135, 7
        %v1137 = vsub.s32 0, %v1136
        %v1138 = vrot.slane %v1091, %v1137
        %v1139 = vlaneseq
        %v1140 = vshrl.u32 %v1139, 7
        %v1141 = vsub.s32 0, %v1140
        %v1142 = vrot.slane %v1093, %v1141
        %v1143 = vlaneseq
        %v1144 = vshrl.u32 %v1143, 7
        %v1145 = vsub.s32 0, %v1144
        %v1146 = vrot.slane %v1076, %v1145
        %v1147 = vlaneseq
        %v1148 = vshrl.u32 %v1147, 7
        %v1149 = vsub.s32 0, %v1148
        %v1150 = vrot.slane %v1090, %v1149
        %v1151 = vlaneseq
        %v1152 = vshrl.u32 %v1151, 7
        %v1153 = vsub.s32 0, %v1152
        %v1154 = vrot.slane %v1092, %v1153
        %v1155 = vlaneseq
        %v1156 = vshrl.u32 %v1155, 7
        %v1157 = vsub.s32 0, %v1156
        %v1158 = vrot.slane %v1094, %v1157
        %v1175 = vadd.f32 %v398, %v1098
        %v1176 = vadd.f32 %v399, %v1102
        %v1177 = vadd.f32 %v400, %v1106
        %v1178 = vadd.f32 %v401, %v1110
        %v1179 = vadd.f32 %v402, %v1114
        %v1180 = vadd.f32 %v403, %v1118
        %v1181 = vadd.f32 %v404, %v1122
        %v1182 = vadd.f32 %v405, %v1126
        %v1183 = vadd.f32 %v406, %v1130
        %v1184 = vadd.f32 %v407, %v1134
        %v1185 = vadd.f32 %v408, %v1138
        %v1186 = vadd.f32 %v409, %v1142
        %v1187 = vadd.f32 %v410, %v1146
        %v1188 = vadd.f32 %v411, %v1150
        %v1189 = vadd.f32 %v412, %v1154
        %v1190 = vadd.f32 %v413, %v1158
        %v1191 = vsel %vm517, %v1175, 0.0
        %v1192 = vsel %vm517, %v1176, 0.0
        %v1193 = vadd.f32 %v1191, %v1192
        %v1194 = vsel %vm517, %v1177, 0.0
        %v1195 = vadd.f32 %v1193, %v1194
        %v1196 = vsel %vm517, %v1178, 0.0
        %v1197 = vadd.f32 %v1195, %v1196
        %v1198 = vsel %vm517, %v1179, 0.0
        %v1199 = vadd.f32 %v1197, %v1198
        %v1200 = vsel %vm517, %v1180, 0.0
        %v1201 = vadd.f32 %v1199, %v1200
        %v1202 = vsel %vm517, %v1181, 0.0
        %v1203 = vadd.f32 %v1201, %v1202
        %v1204 = vsel %vm517, %v1182, 0.0
        %v1205 = vadd.f32 %v1203, %v1204
        %v1206 = vrot.slane %v1205, 4
        %v1207 = vadd.f32 %v1205, %v1206
        %v1208 = vrot.slane %v1207, 2
        %v1209 = vadd.f32 %v1207, %v1208
        %v1210 = vrot.slane %v1209, 1
        %v1211 = vadd.f32 %v1209, %v1210
        %v1212 = vsel %vm517, %v1183, 0.0
        %v1213 = vsel %vm517, %v1184, 0.0
        %v1214 = vadd.f32 %v1212, %v1213
        %v1215 = vsel %vm517, %v1185, 0.0
        %v1216 = vadd.f32 %v1214, %v1215
        %v1217 = vsel %vm517, %v1186, 0.0
        %v1218 = vadd.f32 %v1216, %v1217
        %v1219 = vsel %vm517, %v1187, 0.0
        %v1220 = vadd.f32 %v1218, %v1219
        %v1221 = vsel %vm517, %v1188, 0.0
        %v1222 = vadd.f32 %v1220, %v1221
        %v1223 = vsel %vm517, %v1189, 0.0
        %v1224 = vadd.f32 %v1222, %v1223
        %v1225 = vsel %vm517, %v1190, 0.0
        %v1226 = vadd.f32 %v1224, %v1225
        %v1227 = vrot.slane %v1226, 4
        %v1228 = vadd.f32 %v1226, %v1227
        %v1229 = vrot.slane %v1228, 2
        %v1230 = vadd.f32 %v1228, %v1229
        %v1231 = vrot.slane %v1230, 1
        %v1232 = vadd.f32 %v1230, %v1231
        %v1233 = vrcp.pop 64.0
        %v1234 = vmul.f32 %v1211, %v1233
        %v1235 = vmul.f32 %v1232, %v1233
        %v1236 = vsub.f32 %v1175, %v1234
        %v1237 = vsub.f32 %v1176, %v1234
        %v1238 = vsub.f32 %v1177, %v1234
        %v1239 = vsub.f32 %v1178, %v1234
        %v1240 = vsub.f32 %v1179, %v1234
        %v1241 = vsub.f32 %v1180, %v1234
        %v1242 = vsub.f32 %v1181, %v1234
        %v1243 = vsub.f32 %v1182, %v1234
        %v1244 = vsub.f32 %v1183, %v1235
        %v1245 = vsub.f32 %v1184, %v1235
        %v1246 = vsub.f32 %v1185, %v1235
        %v1247 = vsub.f32 %v1186, %v1235
        %v1248 = vsub.f32 %v1187, %v1235
        %v1249 = vsub.f32 %v1188, %v1235
        %v1250 = vsub.f32 %v1189, %v1235
        %v1251 = vsub.f32 %v1190, %v1235
        %v1252 = vmul.f32 %v1236, %v1236
        %v1253 = vmul.f32 %v1237, %v1237
        %v1254 = vmul.f32 %v1238, %v1238
        %v1255 = vmul.f32 %v1239, %v1239
        %v1256 = vmul.f32 %v1240, %v1240
        %v1257 = vmul.f32 %v1241, %v1241
        %v1258 = vmul.f32 %v1242, %v1242
        %v1259 = vmul.f32 %v1243, %v1243
        %v1260 = vmul.f32 %v1244, %v1244
        %v1261 = vmul.f32 %v1245, %v1245
        %v1262 = vmul.f32 %v1246, %v1246
        %v1263 = vmul.f32 %v1247, %v1247
        %v1264 = vmul.f32 %v1248, %v1248
        %v1265 = vmul.f32 %v1249, %v1249
        %v1266 = vmul.f32 %v1250, %v1250
        %v1267 = vmul.f32 %v1251, %v1251
        %v1268 = vsel %vm517, %v1252, 0.0
        %v1269 = vsel %vm517, %v1253, 0.0
        %v1270 = vadd.f32 %v1268, %v1269
        %v1271 = vsel %vm517, %v1254, 0.0
        %v1272 = vadd.f32 %v1270, %v1271
        %v1273 = vsel %vm517, %v1255, 0.0
        %v1274 = vadd.f32 %v1272, %v1273
        %v1275 = vsel %vm517, %v1256, 0.0
        %v1276 = vadd.f32 %v1274, %v1275
        %v1277 = vsel %vm517, %v1257, 0.0
        %v1278 = vadd.f32 %v1276, %v1277
        %v1279 = vsel %vm517, %v1258, 0.0
        %v1280 = vadd.f32 %v1278, %v1279
        %v1281 = vsel %vm517, %v1259, 0.0
        %v1282 = vadd.f32 %v1280, %v1281
        %v1283 = vrot.slane %v1282, 4
        %v1284 = vadd.f32 %v1282, %v1283
        %v1285 = vrot.slane %v1284, 2
        %v1286 = vadd.f32 %v1284, %v1285
        %v1287 = vrot.slane %v1286, 1
        %v1288 = vadd.f32 %v1286, %v1287
        %v1289 = vsel %vm517, %v1260, 0.0
        %v1290 = vsel %vm517, %v1261, 0.0
        %v1291 = vadd.f32 %v1289, %v1290
        %v1292 = vsel %vm517, %v1262, 0.0
        %v1293 = vadd.f32 %v1291, %v1292
        %v1294 = vsel %vm517, %v1263, 0.0
        %v1295 = vadd.f32 %v1293, %v1294
        %v1296 = vsel %vm517, %v1264, 0.0
        %v1297 = vadd.f32 %v1295, %v1296
        %v1298 = vsel %vm517, %v1265, 0.0
        %v1299 = vadd.f32 %v1297, %v1298
        %v1300 = vsel %vm517, %v1266, 0.0
        %v1301 = vadd.f32 %v1299, %v1300
        %v1302 = vsel %vm517, %v1267, 0.0
        %v1303 = vadd.f32 %v1301, %v1302
        %v1304 = vrot.slane %v1303, 4
        %v1305 = vadd.f32 %v1303, %v1304
        %v1306 = vrot.slane %v1305, 2
        %v1307 = vadd.f32 %v1305, %v1306
        %v1308 = vrot.slane %v1307, 1
        %v1309 = vadd.f32 %v1307, %v1308
        %v1310 = vmul.f32 %v1288, %v1233
        %v1311 = vmul.f32 %v1309, %v1233
        %v1312 = vadd.f32 %v1310, 1e-05
        %v1313 = vadd.f32 %v1311, 1e-05
        %v1314 = vrsqrt.pop %v1312
        %v1315 = vrsqrt.pop %v1313
        %v1316 = vmul.f32 %v1314, %v427
        %v1317 = vmul.f32 %v1315, %v427
        %v1318 = vmul.f32 %v1234, %v1316
        %v1319 = vmul.f32 %v1235, %v1317
        %v1320 = vsub.f32 %v428, %v1318
        %v1321 = vsub.f32 %v428, %v1319
        %v1322 = vlaneseq
        %v1323 = vshrl.u32 %v1322, 7
        %v1324 = vsub.s32 0, %v1323
        %v1325 = vrot.slane %v1316, %v1324
        %v1326 = vlaneseq
        %v1327 = vshrl.u32 %v1326, 7
        %v1328 = vsub.s32 0, %v1327
        %v1329 = vrot.slane %v1317, %v1328
        %v1330 = vmul.f32 %v1175, %v1325
        %v1331 = vmul.f32 %v1176, %v1325
        %v1332 = vmul.f32 %v1177, %v1325
        %v1333 = vmul.f32 %v1178, %v1325
        %v1334 = vmul.f32 %v1179, %v1325
        %v1335 = vmul.f32 %v1180, %v1325
        %v1336 = vmul.f32 %v1181, %v1325
        %v1337 = vmul.f32 %v1182, %v1325
        %v1338 = vmul.f32 %v1183, %v1329
        %v1339 = vmul.f32 %v1184, %v1329
        %v1340 = vmul.f32 %v1185, %v1329
        %v1341 = vmul.f32 %v1186, %v1329
        %v1342 = vmul.f32 %v1187, %v1329
        %v1343 = vmul.f32 %v1188, %v1329
        %v1344 = vmul.f32 %v1189, %v1329
        %v1345 = vmul.f32 %v1190, %v1329
        %v1346 = vlaneseq
        %v1347 = vshrl.u32 %v1346, 7
        %v1348 = vsub.s32 0, %v1347
        %v1349 = vrot.slane %v1320, %v1348
        %v1350 = vlaneseq
        %v1351 = vshrl.u32 %v1350, 7
        %v1352 = vsub.s32 0, %v1351
        %v1353 = vrot.slane %v1321, %v1352
        %v1354 = vadd.f32 %v1330, %v1349
        %v1355 = vadd.f32 %v1331, %v1349
        %v1356 = vadd.f32 %v1332, %v1349
        %v1357 = vadd.f32 %v1333, %v1349
        %v1358 = vadd.f32 %v1334, %v1349
        %v1359 = vadd.f32 %v1335, %v1349
        %v1360 = vadd.f32 %v1336, %v1349
        %v1361 = vadd.f32 %v1337, %v1349
        %v1362 = vadd.f32 %v1338, %v1353
        %v1363 = vadd.f32 %v1339, %v1353
        %v1364 = vadd.f32 %v1340, %v1353
        %v1365 = vadd.f32 %v1341, %v1353
        %v1366 = vadd.f32 %v1342, %v1353
        %v1367 = vadd.f32 %v1343, %v1353
        %v1368 = vadd.f32 %v1344, %v1353
        %v1369 = vadd.f32 %v1345, %v1353
        %v1370 = vsel %vm517, %v1354, 0.0
        %v1371 = vsel %vm517, %v1355, 0.0
        %v1372 = vadd.f32 %v1370, %v1371
        %v1373 = vsel %vm517, %v1356, 0.0
        %v1374 = vadd.f32 %v1372, %v1373
        %v1375 = vsel %vm517, %v1357, 0.0
        %v1376 = vadd.f32 %v1374, %v1375
        %v1377 = vsel %vm517, %v1358, 0.0
        %v1378 = vadd.f32 %v1376, %v1377
        %v1379 = vsel %vm517, %v1359, 0.0
        %v1380 = vadd.f32 %v1378, %v1379
        %v1381 = vsel %vm517, %v1360, 0.0
        %v1382 = vadd.f32 %v1380, %v1381
        %v1383 = vsel %vm517, %v1361, 0.0
        %v1384 = vadd.f32 %v1382, %v1383
        %v1385 = vsel %vm517, %v1362, 0.0
        %v1386 = vsel %vm517, %v1363, 0.0
        %v1387 = vadd.f32 %v1385, %v1386
        %v1388 = vsel %vm517, %v1364, 0.0
        %v1389 = vadd.f32 %v1387, %v1388
        %v1390 = vsel %vm517, %v1365, 0.0
        %v1391 = vadd.f32 %v1389, %v1390
        %v1392 = vsel %vm517, %v1366, 0.0
        %v1393 = vadd.f32 %v1391, %v1392
        %v1394 = vsel %vm517, %v1367, 0.0
        %v1395 = vadd.f32 %v1393, %v1394
        %v1396 = vsel %vm517, %v1368, 0.0
        %v1397 = vadd.f32 %v1395, %v1396
        %v1398 = vsel %vm517, %v1369, 0.0
        %v1399 = vadd.f32 %v1397, %v1398
        %v1400 = vmul.f32 %v1384, %v630
        %v1401 = vmul.f32 %v1399, %v630
        %v1402 = vpack.c.bf16 %v1401, %v1400
        %v1403 = vlaneseq
        %v1404 = vshrl.u32 %v1403, 7
        %v1405 = vsub.s32 1, %v1404
        %v1406 = vrot.slane %v426, %v1405
        %v1411 = vunpack.c.l.b16 %v418
        %v1412 = vunpack.c.l.b16 %v419
        %v1413 = vunpack.c.l.b16 %v420
        %v1414 = vunpack.c.l.b16 %v421
        %v1415 = vpack.c.b16 %v1412, %v1411
        %v1416 = vpack.c.b16 %v1414, %v1413
        %v1420 = vsel %vm517, %v1402, 0
        %1422 = vmatprep.subr.bf16.mxu0 0
        %1423 = vmatpush1.bf16.msra.mxu0 %v1415
        %1424 = vmatprep.subr.bf16.mxu0 0
        %1425 = vmatpush1.bf16.msra.mxu0 %v1416
        %1426 = vmatprep.subr.bf16.mxu0 0
        %1427 = vmatpush1.bf16.msra.mxu0 0
        %1428 = vmatprep.subr.bf16.mxu0 0
        %1429 = vmatpush1.bf16.msra.mxu0 0
        %1430 = vmatprep.subr.bf16.mxu0 0
        %1431 = vmatpush1.bf16.msra.mxu0 0
        %1432 = vmatprep.subr.bf16.mxu0 0
        %1433 = vmatpush1.bf16.msra.mxu0 0
        %1434 = vmatprep.subr.bf16.mxu0 0
        %1435 = vmatpush1.bf16.msra.mxu0 0
        %1436 = vmatprep.subr.bf16.mxu0 0
        %1437 = vmatpush1.bf16.msra.mxu0 0
        %1438 = vmatprep.subr.bf16.mxu0 0
        %1439 = vmatpush1.bf16.msra.mxu0 0
        %1440 = vmatprep.subr.bf16.mxu0 0
        %1441 = vmatpush1.bf16.msra.mxu0 0
        %1442 = vmatprep.subr.bf16.mxu0 0
        %1443 = vmatpush1.bf16.msra.mxu0 0
        %1444 = vmatprep.subr.bf16.mxu0 0
        %1445 = vmatpush1.bf16.msra.mxu0 0
        %1446 = vmatprep.subr.bf16.mxu0 0
        %1447 = vmatpush1.bf16.msra.mxu0 0
        %1448 = vmatprep.subr.bf16.mxu0 0
        %1449 = vmatpush1.bf16.msra.mxu0 0
        %1450 = vmatprep.subr.bf16.mxu0 0
        %1451 = vmatpush1.bf16.msra.mxu0 0
        %1452 = vmatprep.subr.bf16.mxu0 0
        %1453 = vmatpush1.bf16.msra.mxu0 0
        %1454 = vmatprep.mubr.bf16.mxu0 0
        %1455 = vmatmul.mubr.bf16.gmra.mrb[0].mxu0 %v1420
        %v1456 = vpop.f32.mrb[0].mxu0
        %v1457 = vadd.f32 %v1406, %v1456
        %v1458 = vpop.f32.mrb[0].mxu0
        %v1459 = vpop.f32.mrb[0].mxu0
        %v1460 = vadd.f32 %v1406, %v1459
        %v1461 = vpop.f32.mrb[0].mxu0
        %1462 = vdwg.mxu0
        %v1463 = vpack.c.bf16 %v1457, %v1457
        %v1464 = vpack.c.bf16 %v1460, %v1460
        %1465 = vrot.lane.b32.xlu0 %v896, 96
        %v1466 = vpop.permute.xlu0 %1465
        %v1468 = vsel %vm517, %v1463, 0
        %v1471 = vsel %vm517, %v1466, 0
        %1473 = vmatprep.subr.bf16.mxu0 0
        %1474 = vmatpush1.bf16.xpose.msra.mxu0 %v1471
        %1475 = vmatprep.subr.bf16.mxu0 0
        %1476 = vmatpush1.bf16.xpose.msra.mxu0 0
        %1477 = vmatprep.subr.bf16.mxu0 0
        %1478 = vmatpush1.bf16.xpose.msra.mxu0 0
        %1479 = vmatprep.subr.bf16.mxu0 0
        %1480 = vmatpush1.bf16.xpose.msra.mxu0 0
        %1481 = vmatprep.subr.bf16.mxu0 0
        %1482 = vmatpush1.bf16.xpose.msra.mxu0 0
        %1483 = vmatprep.subr.bf16.mxu0 0
        %1484 = vmatpush1.bf16.xpose.msra.mxu0 0
        %1485 = vmatprep.subr.bf16.mxu0 0
        %1486 = vmatpush1.bf16.xpose.msra.mxu0 0
        %1487 = vmatprep.subr.bf16.mxu0 0
        %1488 = vmatpush1.bf16.xpose.msra.mxu0 0
        %1489 = vmatprep.subr.bf16.mxu0 0
        %1490 = vmatpush1.bf16.xpose.msra.mxu0 0
        %1491 = vmatprep.subr.bf16.mxu0 0
        %1492 = vmatpush1.bf16.xpose.msra.mxu0 0
        %1493 = vmatprep.subr.bf16.mxu0 0
        %1494 = vmatpush1.bf16.xpose.msra.mxu0 0
        %1495 = vmatprep.subr.bf16.mxu0 0
        %1496 = vmatpush1.bf16.xpose.msra.mxu0 0
        %1497 = vmatprep.subr.bf16.mxu0 0
        %1498 = vmatpush1.bf16.xpose.msra.mxu0 0
        %1499 = vmatprep.subr.bf16.mxu0 0
        %1500 = vmatpush1.bf16.xpose.msra.mxu0 0
        %1501 = vmatprep.subr.bf16.mxu0 0
        %1502 = vmatpush1.bf16.xpose.msra.mxu0 0
        %1503 = vmatprep.subr.bf16.mxu0 0
        %1504 = vmatpush1.bf16.xpose.msra.mxu0 0
        %1505 = vmatprep.mubr.bf16.mxu0 0
        %1506 = vmatmul.mubr.bf16.gmra.mrb[0].mxu0 %v1468
        %v1507 = vpop.f32.mrb[0].mxu0
        %v1508 = vadd.f32 0.0, %v1507
        %v1509 = vpop.f32.mrb[0].mxu0
        %v1510 = vpop.f32.mrb[0].mxu0
        %v1511 = vpop.f32.mrb[0].mxu0
        %1512 = vdwg.mxu0
        %1513 = vrot.lane.b32.xlu0 %v946, 96
        %v1514 = vpop.permute.xlu0 %1513
        %v1516 = vsel %vm517, %v1464, 0
        %v1519 = vsel %vm517, %v1514, 0
        %1521 = vmatprep.subr.bf16.mxu0 0
        %1522 = vmatpush1.bf16.xpose.msra.mxu0 %v1519
        %1523 = vmatprep.subr.bf16.mxu0 0
        %1524 = vmatpush1.bf16.xpose.msra.mxu0 0
        %1525 = vmatprep.subr.bf16.mxu0 0
        %1526 = vmatpush1.bf16.xpose.msra.mxu0 0
        %1527 = vmatprep.subr.bf16.mxu0 0
        %1528 = vmatpush1.bf16.xpose.msra.mxu0 0
        %1529 = vmatprep.subr.bf16.mxu0 0
        %1530 = vmatpush1.bf16.xpose.msra.mxu0 0
        %1531 = vmatprep.subr.bf16.mxu0 0
        %1532 = vmatpush1.bf16.xpose.msra.mxu0 0
        %1533 = vmatprep.subr.bf16.mxu0 0
        %1534 = vmatpush1.bf16.xpose.msra.mxu0 0
        %1535 = vmatprep.subr.bf16.mxu0 0
        %1536 = vmatpush1.bf16.xpose.msra.mxu0 0
        %1537 = vmatprep.subr.bf16.mxu0 0
        %1538 = vmatpush1.bf16.xpose.msra.mxu0 0
        %1539 = vmatprep.subr.bf16.mxu0 0
        %1540 = vmatpush1.bf16.xpose.msra.mxu0 0
        %1541 = vmatprep.subr.bf16.mxu0 0
        %1542 = vmatpush1.bf16.xpose.msra.mxu0 0
        %1543 = vmatprep.subr.bf16.mxu0 0
        %1544 = vmatpush1.bf16.xpose.msra.mxu0 0
        %1545 = vmatprep.subr.bf16.mxu0 0
        %1546 = vmatpush1.bf16.xpose.msra.mxu0 0
        %1547 = vmatprep.subr.bf16.mxu0 0
        %1548 = vmatpush1.bf16.xpose.msra.mxu0 0
        %1549 = vmatprep.subr.bf16.mxu0 0
        %1550 = vmatpush1.bf16.xpose.msra.mxu0 0
        %1551 = vmatprep.subr.bf16.mxu0 0
        %1552 = vmatpush1.bf16.xpose.msra.mxu0 0
        %1553 = vmatprep.mubr.bf16.mxu0 0
        %1554 = vmatmul.mubr.bf16.gmra.mrb[0].mxu0 %v1516
        %v1555 = vpop.f32.mrb[0].mxu0
        %v1556 = vadd.f32 0.0, %v1555
        %v1557 = vpop.f32.mrb[0].mxu0
        %v1558 = vpop.f32.mrb[0].mxu0
        %v1559 = vpop.f32.mrb[0].mxu0
        %1560 = vdwg.mxu0
        %v1561 = vsel %vm871, %v1508, -inf
        %1562 = vmax.xlane.f32.xlu0 %v1561
        %v1563 = vpop.xlane.xlu0 %1562
        %v1564 = vsel %vm871, %v1556, -inf
        %1565 = vmax.xlane.f32.xlu0 %v1564
        %v1566 = vpop.xlane.xlu0 %1565
        %v1567 = vsub.f32 %v1508, %v1563
        %v1568 = vsub.f32 %v1556, %v1566
        %v1569 = vmul.f32 %v1567, 1.442695
        %v1570 = vpow.pop %v1569
        %v1571 = vmul.f32 %v1568, 1.442695
        %v1572 = vpow.pop %v1571
        %v1573 = vsel %vm871, %v1570, 0.0
        %1574 = vadd.xlane.f32.xlu0 %v1573
        %v1575 = vpop.xlane.xlu0 %1574
        %v1576 = vsel %vm871, %v1572, 0.0
        %1577 = vadd.xlane.f32.xlu0 %v1576
        %v1578 = vpop.xlane.xlu0 %1577
        %v1579 = vrcp.pop %v1575
        %v1580 = vrcp.pop %v1578
        %v1581 = vmul.f32 %v1570, %v1579
        %v1582 = vmul.f32 %v1572, %v1580
        %v1583 = vpack.c.bf16 %v1581, %v1581
        %v1584 = vpack.c.bf16 %v1582, %v1582
        %v1585 = vrot.slane %v515, 4
        %v1587 = vsel %vm871, %v1583, 0
        %v1590 = vsel %vm902, %v1585, 0
        %1592 = vmatprep.subr.bf16.mxu0 0
        %1593 = vmatpush1.bf16.msra.mxu0 %v1590
        %1594 = vmatprep.subr.bf16.mxu0 0
        %1595 = vmatpush1.bf16.msra.mxu0 0
        %1596 = vmatprep.subr.bf16.mxu0 0
        %1597 = vmatpush1.bf16.msra.mxu0 0
        %1598 = vmatprep.subr.bf16.mxu0 0
        %1599 = vmatpush1.bf16.msra.mxu0 0
        %1600 = vmatprep.subr.bf16.mxu0 0
        %1601 = vmatpush1.bf16.msra.mxu0 0
        %1602 = vmatprep.subr.bf16.mxu0 0
        %1603 = vmatpush1.bf16.msra.mxu0 0
        %1604 = vmatprep.subr.bf16.mxu0 0
        %1605 = vmatpush1.bf16.msra.mxu0 0
        %1606 = vmatprep.subr.bf16.mxu0 0
        %1607 = vmatpush1.bf16.msra.mxu0 0
        %1608 = vmatprep.subr.bf16.mxu0 0
        %1609 = vmatpush1.bf16.msra.mxu0 0
        %1610 = vmatprep.subr.bf16.mxu0 0
        %1611 = vmatpush1.bf16.msra.mxu0 0
        %1612 = vmatprep.subr.bf16.mxu0 0
        %1613 = vmatpush1.bf16.msra.mxu0 0
        %1614 = vmatprep.subr.bf16.mxu0 0
        %1615 = vmatpush1.bf16.msra.mxu0 0
        %1616 = vmatprep.subr.bf16.mxu0 0
        %1617 = vmatpush1.bf16.msra.mxu0 0
        %1618 = vmatprep.subr.bf16.mxu0 0
        %1619 = vmatpush1.bf16.msra.mxu0 0
        %1620 = vmatprep.subr.bf16.mxu0 0
        %1621 = vmatpush1.bf16.msra.mxu0 0
        %1622 = vmatprep.subr.bf16.mxu0 0
        %1623 = vmatpush1.bf16.msra.mxu0 0
        %1624 = vmatprep.mubr.bf16.mxu0 0
        %1625 = vmatmul.mubr.bf16.gmra.mrb[0].mxu0 %v1587
        %v1626 = vpop.f32.mrb[0].mxu0
        %v1627 = vadd.f32 0.0, %v1626
        %v1628 = vpop.f32.mrb[0].mxu0
        %v1629 = vpop.f32.mrb[0].mxu0
        %v1630 = vpop.f32.mrb[0].mxu0
        %1631 = vdwg.mxu0
        %v1632 = vrot.slane %v516, 4
        %v1634 = vsel %vm871, %v1584, 0
        %v1637 = vsel %vm902, %v1632, 0
        %1639 = vmatprep.subr.bf16.mxu0 0
        %1640 = vmatpush1.bf16.msra.mxu0 %v1637
        %1641 = vmatprep.subr.bf16.mxu0 0
        %1642 = vmatpush1.bf16.msra.mxu0 0
        %1643 = vmatprep.subr.bf16.mxu0 0
        %1644 = vmatpush1.bf16.msra.mxu0 0
        %1645 = vmatprep.subr.bf16.mxu0 0
        %1646 = vmatpush1.bf16.msra.mxu0 0
        %1647 = vmatprep.subr.bf16.mxu0 0
        %1648 = vmatpush1.bf16.msra.mxu0 0
        %1649 = vmatprep.subr.bf16.mxu0 0
        %1650 = vmatpush1.bf16.msra.mxu0 0
        %1651 = vmatprep.subr.bf16.mxu0 0
        %1652 = vmatpush1.bf16.msra.mxu0 0
        %1653 = vmatprep.subr.bf16.mxu0 0
        %1654 = vmatpush1.bf16.msra.mxu0 0
        %1655 = vmatprep.subr.bf16.mxu0 0
        %1656 = vmatpush1.bf16.msra.mxu0 0
        %1657 = vmatprep.subr.bf16.mxu0 0
        %1658 = vmatpush1.bf16.msra.mxu0 0
        %1659 = vmatprep.subr.bf16.mxu0 0
        %1660 = vmatpush1.bf16.msra.mxu0 0
        %1661 = vmatprep.subr.bf16.mxu0 0
        %1662 = vmatpush1.bf16.msra.mxu0 0
        %1663 = vmatprep.subr.bf16.mxu0 0
        %1664 = vmatpush1.bf16.msra.mxu0 0
        %1665 = vmatprep.subr.bf16.mxu0 0
        %1666 = vmatpush1.bf16.msra.mxu0 0
        %1667 = vmatprep.subr.bf16.mxu0 0
        %1668 = vmatpush1.bf16.msra.mxu0 0
        %1669 = vmatprep.subr.bf16.mxu0 0
        %1670 = vmatpush1.bf16.msra.mxu0 0
        %1671 = vmatprep.mubr.bf16.mxu0 0
        %1672 = vmatmul.mubr.bf16.gmra.mrb[0].mxu0 %v1634
        %v1673 = vpop.f32.mrb[0].mxu0
        %v1674 = vadd.f32 0.0, %v1673
        %v1675 = vpop.f32.mrb[0].mxu0
        %v1676 = vpop.f32.mrb[0].mxu0
        %v1677 = vpop.f32.mrb[0].mxu0
        %1678 = vdwg.mxu0
        %v1679 = vadd.f32 %v1175, %v1627
        %v1680 = vadd.f32 %v1176, %v1627
        %v1681 = vadd.f32 %v1177, %v1627
        %v1682 = vadd.f32 %v1178, %v1627
        %v1683 = vadd.f32 %v1179, %v1627
        %v1684 = vadd.f32 %v1180, %v1627
        %v1685 = vadd.f32 %v1181, %v1627
        %v1686 = vadd.f32 %v1182, %v1627
        %v1687 = vadd.f32 %v1183, %v1674
        %v1688 = vadd.f32 %v1184, %v1674
        %v1689 = vadd.f32 %v1185, %v1674
        %v1690 = vadd.f32 %v1186, %v1674
        %v1691 = vadd.f32 %v1187, %v1674
        %v1692 = vadd.f32 %v1188, %v1674
        %v1693 = vadd.f32 %v1189, %v1674
        %v1694 = vadd.f32 %v1190, %v1674
        %v1695 = vsel %vm517, %v1679, 0.0
        %v1696 = vsel %vm517, %v1680, 0.0
        %v1697 = vadd.f32 %v1695, %v1696
        %v1698 = vsel %vm517, %v1681, 0.0
        %v1699 = vadd.f32 %v1697, %v1698
        %v1700 = vsel %vm517, %v1682, 0.0
        %v1701 = vadd.f32 %v1699, %v1700
        %v1702 = vsel %vm517, %v1683, 0.0
        %v1703 = vadd.f32 %v1701, %v1702
        %v1704 = vsel %vm517, %v1684, 0.0
        %v1705 = vadd.f32 %v1703, %v1704
        %v1706 = vsel %vm517, %v1685, 0.0
        %v1707 = vadd.f32 %v1705, %v1706
        %v1708 = vsel %vm517, %v1686, 0.0
        %v1709 = vadd.f32 %v1707, %v1708
        %v1710 = vrot.slane %v1709, 4
        %v1711 = vadd.f32 %v1709, %v1710
        %v1712 = vrot.slane %v1711, 2
        %v1713 = vadd.f32 %v1711, %v1712
        %v1714 = vrot.slane %v1713, 1
        %v1715 = vadd.f32 %v1713, %v1714
        %v1716 = vsel %vm517, %v1687, 0.0
        %v1717 = vsel %vm517, %v1688, 0.0
        %v1718 = vadd.f32 %v1716, %v1717
        %v1719 = vsel %vm517, %v1689, 0.0
        %v1720 = vadd.f32 %v1718, %v1719
        %v1721 = vsel %vm517, %v1690, 0.0
        %v1722 = vadd.f32 %v1720, %v1721
        %v1723 = vsel %vm517, %v1691, 0.0
        %v1724 = vadd.f32 %v1722, %v1723
        %v1725 = vsel %vm517, %v1692, 0.0
        %v1726 = vadd.f32 %v1724, %v1725
        %v1727 = vsel %vm517, %v1693, 0.0
        %v1728 = vadd.f32 %v1726, %v1727
        %v1729 = vsel %vm517, %v1694, 0.0
        %v1730 = vadd.f32 %v1728, %v1729
        %v1731 = vrot.slane %v1730, 4
        %v1732 = vadd.f32 %v1730, %v1731
        %v1733 = vrot.slane %v1732, 2
        %v1734 = vadd.f32 %v1732, %v1733
        %v1735 = vrot.slane %v1734, 1
        %v1736 = vadd.f32 %v1734, %v1735
        %v1737 = vmul.f32 %v1715, %v1233
        %v1738 = vmul.f32 %v1736, %v1233
        %v1739 = vsub.f32 %v1679, %v1737
        %v1740 = vsub.f32 %v1680, %v1737
        %v1741 = vsub.f32 %v1681, %v1737
        %v1742 = vsub.f32 %v1682, %v1737
        %v1743 = vsub.f32 %v1683, %v1737
        %v1744 = vsub.f32 %v1684, %v1737
        %v1745 = vsub.f32 %v1685, %v1737
        %v1746 = vsub.f32 %v1686, %v1737
        %v1747 = vsub.f32 %v1687, %v1738
        %v1748 = vsub.f32 %v1688, %v1738
        %v1749 = vsub.f32 %v1689, %v1738
        %v1750 = vsub.f32 %v1690, %v1738
        %v1751 = vsub.f32 %v1691, %v1738
        %v1752 = vsub.f32 %v1692, %v1738
        %v1753 = vsub.f32 %v1693, %v1738
        %v1754 = vsub.f32 %v1694, %v1738
        %v1755 = vmul.f32 %v1739, %v1739
        %v1756 = vmul.f32 %v1740, %v1740
        %v1757 = vmul.f32 %v1741, %v1741
        %v1758 = vmul.f32 %v1742, %v1742
        %v1759 = vmul.f32 %v1743, %v1743
        %v1760 = vmul.f32 %v1744, %v1744
        %v1761 = vmul.f32 %v1745, %v1745
        %v1762 = vmul.f32 %v1746, %v1746
        %v1763 = vmul.f32 %v1747, %v1747
        %v1764 = vmul.f32 %v1748, %v1748
        %v1765 = vmul.f32 %v1749, %v1749
        %v1766 = vmul.f32 %v1750, %v1750
        %v1767 = vmul.f32 %v1751, %v1751
        %v1768 = vmul.f32 %v1752, %v1752
        %v1769 = vmul.f32 %v1753, %v1753
        %v1770 = vmul.f32 %v1754, %v1754
        %v1771 = vsel %vm517, %v1755, 0.0
        %v1772 = vsel %vm517, %v1756, 0.0
        %v1773 = vadd.f32 %v1771, %v1772
        %v1774 = vsel %vm517, %v1757, 0.0
        %v1775 = vadd.f32 %v1773, %v1774
        %v1776 = vsel %vm517, %v1758, 0.0
        %v1777 = vadd.f32 %v1775, %v1776
        %v1778 = vsel %vm517, %v1759, 0.0
        %v1779 = vadd.f32 %v1777, %v1778
        %v1780 = vsel %vm517, %v1760, 0.0
        %v1781 = vadd.f32 %v1779, %v1780
        %v1782 = vsel %vm517, %v1761, 0.0
        %v1783 = vadd.f32 %v1781, %v1782
        %v1784 = vsel %vm517, %v1762, 0.0
        %v1785 = vadd.f32 %v1783, %v1784
        %v1786 = vrot.slane %v1785, 4
        %v1787 = vadd.f32 %v1785, %v1786
        %v1788 = vrot.slane %v1787, 2
        %v1789 = vadd.f32 %v1787, %v1788
        %v1790 = vrot.slane %v1789, 1
        %v1791 = vadd.f32 %v1789, %v1790
        %v1792 = vsel %vm517, %v1763, 0.0
        %v1793 = vsel %vm517, %v1764, 0.0
        %v1794 = vadd.f32 %v1792, %v1793
        %v1795 = vsel %vm517, %v1765, 0.0
        %v1796 = vadd.f32 %v1794, %v1795
        %v1797 = vsel %vm517, %v1766, 0.0
        %v1798 = vadd.f32 %v1796, %v1797
        %v1799 = vsel %vm517, %v1767, 0.0
        %v1800 = vadd.f32 %v1798, %v1799
        %v1801 = vsel %vm517, %v1768, 0.0
        %v1802 = vadd.f32 %v1800, %v1801
        %v1803 = vsel %vm517, %v1769, 0.0
        %v1804 = vadd.f32 %v1802, %v1803
        %v1805 = vsel %vm517, %v1770, 0.0
        %v1806 = vadd.f32 %v1804, %v1805
        %v1807 = vrot.slane %v1806, 4
        %v1808 = vadd.f32 %v1806, %v1807
        %v1809 = vrot.slane %v1808, 2
        %v1810 = vadd.f32 %v1808, %v1809
        %v1811 = vrot.slane %v1810, 1
        %v1812 = vadd.f32 %v1810, %v1811
        %v1813 = vmul.f32 %v1791, %v1233
        %v1814 = vmul.f32 %v1812, %v1233
        %v1815 = vadd.f32 %v1813, 1e-05
        %v1816 = vadd.f32 %v1814, 1e-05
        %v1817 = vrsqrt.pop %v1815
        %v1818 = vrsqrt.pop %v1816
        %v1819 = vmul.f32 %v1817, %v427
        %v1820 = vmul.f32 %v1818, %v427
        %v1821 = vmul.f32 %v1737, %v1819
        %v1822 = vmul.f32 %v1738, %v1820
        %v1823 = vsub.f32 %v428, %v1821
        %v1824 = vsub.f32 %v428, %v1822
        %v1825 = vlaneseq
        %v1826 = vshrl.u32 %v1825, 7
        %v1827 = vsub.s32 1, %v1826
        %v1828 = vrot.slane %v1819, %v1827
        %v1829 = vlaneseq
        %v1830 = vshrl.u32 %v1829, 7
        %v1831 = vsub.s32 1, %v1830
        %v1832 = vrot.slane %v1820, %v1831
        %v1833 = vmul.f32 %v1679, %v1828
        %v1834 = vmul.f32 %v1680, %v1828
        %v1835 = vmul.f32 %v1681, %v1828
        %v1836 = vmul.f32 %v1682, %v1828
        %v1837 = vmul.f32 %v1683, %v1828
        %v1838 = vmul.f32 %v1684, %v1828
        %v1839 = vmul.f32 %v1685, %v1828
        %v1840 = vmul.f32 %v1686, %v1828
        %v1841 = vmul.f32 %v1687, %v1832
        %v1842 = vmul.f32 %v1688, %v1832
        %v1843 = vmul.f32 %v1689, %v1832
        %v1844 = vmul.f32 %v1690, %v1832
        %v1845 = vmul.f32 %v1691, %v1832
        %v1846 = vmul.f32 %v1692, %v1832
        %v1847 = vmul.f32 %v1693, %v1832
        %v1848 = vmul.f32 %v1694, %v1832
        %v1849 = vlaneseq
        %v1850 = vshrl.u32 %v1849, 7
        %v1851 = vsub.s32 1, %v1850
        %v1852 = vrot.slane %v1823, %v1851
        %v1853 = vlaneseq
        %v1854 = vshrl.u32 %v1853, 7
        %v1855 = vsub.s32 1, %v1854
        %v1856 = vrot.slane %v1824, %v1855
        %v1857 = vadd.f32 %v1833, %v1852
        %v1858 = vadd.f32 %v1834, %v1852
        %v1859 = vadd.f32 %v1835, %v1852
        %v1860 = vadd.f32 %v1836, %v1852
        %v1861 = vadd.f32 %v1837, %v1852
        %v1862 = vadd.f32 %v1838, %v1852
        %v1863 = vadd.f32 %v1839, %v1852
        %v1864 = vadd.f32 %v1840, %v1852
        %v1865 = vadd.f32 %v1841, %v1856
        %v1866 = vadd.f32 %v1842, %v1856
        %v1867 = vadd.f32 %v1843, %v1856
        %v1868 = vadd.f32 %v1844, %v1856
        %v1869 = vadd.f32 %v1845, %v1856
        %v1870 = vadd.f32 %v1846, %v1856
        %v1871 = vadd.f32 %v1847, %v1856
        %v1872 = vadd.f32 %v1848, %v1856
        %v1873 = vpack.c.bf16 %v1858, %v1857
        %v1874 = vpack.c.bf16 %v1860, %v1859
        %v1875 = vpack.c.bf16 %v1862, %v1861
        %v1876 = vpack.c.bf16 %v1864, %v1863
        %v1877 = vpack.c.bf16 %v1866, %v1865
        %v1878 = vpack.c.bf16 %v1868, %v1867
        %v1879 = vpack.c.bf16 %v1870, %v1869
        %v1880 = vpack.c.bf16 %v1872, %v1871
        %v1881 = vlaneseq
        %v1882 = vshrl.u32 %v1881, 7
        %v1883 = vsub.s32 2, %v1882
        %v1884 = vrot.slane %v426, %v1883
        %v1889 = vunpack.c.l.b16 %v422
        %v1890 = vunpack.c.l.b16 %v423
        %v1891 = vunpack.c.l.b16 %v424
        %v1892 = vunpack.c.l.b16 %v425
        %v1893 = vpack.c.b16 %v1890, %v1889
        %v1894 = vpack.c.b16 %v1892, %v1891
        %v1898 = vsel %vm517, %v1873, 0
        %v1901 = vsel %vm517, %v1874, 0
        %v1904 = vsel %vm517, %v1875, 0
        %v1907 = vsel %vm517, %v1876, 0
        %v1910 = vsel %vm517, %v1877, 0
        %v1913 = vsel %vm517, %v1878, 0
        %v1916 = vsel %vm517, %v1879, 0
        %v1919 = vsel %vm517, %v1880, 0
        %1921 = vmatprep.subr.bf16.mxu0 0
        %1922 = vmatpush1.bf16.msra.mxu0 %v1893
        %1923 = vmatprep.subr.bf16.mxu0 0
        %1924 = vmatpush1.bf16.msra.mxu0 %v1894
        %1925 = vmatprep.subr.bf16.mxu0 0
        %1926 = vmatpush1.bf16.msra.mxu0 0
        %1927 = vmatprep.subr.bf16.mxu0 0
        %1928 = vmatpush1.bf16.msra.mxu0 0
        %1929 = vmatprep.subr.bf16.mxu0 0
        %1930 = vmatpush1.bf16.msra.mxu0 0
        %1931 = vmatprep.subr.bf16.mxu0 0
        %1932 = vmatpush1.bf16.msra.mxu0 0
        %1933 = vmatprep.subr.bf16.mxu0 0
        %1934 = vmatpush1.bf16.msra.mxu0 0
        %1935 = vmatprep.subr.bf16.mxu0 0
        %1936 = vmatpush1.bf16.msra.mxu0 0
        %1937 = vmatprep.subr.bf16.mxu0 0
        %1938 = vmatpush1.bf16.msra.mxu0 0
        %1939 = vmatprep.subr.bf16.mxu0 0
        %1940 = vmatpush1.bf16.msra.mxu0 0
        %1941 = vmatprep.subr.bf16.mxu0 0
        %1942 = vmatpush1.bf16.msra.mxu0 0
        %1943 = vmatprep.subr.bf16.mxu0 0
        %1944 = vmatpush1.bf16.msra.mxu0 0
        %1945 = vmatprep.subr.bf16.mxu0 0
        %1946 = vmatpush1.bf16.msra.mxu0 0
        %1947 = vmatprep.subr.bf16.mxu0 0
        %1948 = vmatpush1.bf16.msra.mxu0 0
        %1949 = vmatprep.subr.bf16.mxu0 0
        %1950 = vmatpush1.bf16.msra.mxu0 0
        %1951 = vmatprep.subr.bf16.mxu0 0
        %1952 = vmatpush1.bf16.msra.mxu0 0
        %1953 = vmatprep.mubr.bf16.mxu0 0
        %1954 = vmatmul.mubr.bf16.gmra.mrb[0].mxu0 %v1898
        %v1955 = vpop.f32.mrb[0].mxu0
        %v1956 = vadd.f32 %v1884, %v1955
        %v1957 = vpop.f32.mrb[0].mxu0
        %v1958 = vpop.f32.mrb[0].mxu0
        %v1959 = vadd.f32 %v1884, %v1958
        %v1960 = vpop.f32.mrb[0].mxu0
        %1961 = vmatprep.mubr.bf16.mxu0 0
        %1962 = vmatmul.mubr.bf16.gmra.mrb[0].mxu0 %v1901
        %v1963 = vpop.f32.mrb[0].mxu0
        %v1964 = vadd.f32 %v1884, %v1963
        %v1965 = vpop.f32.mrb[0].mxu0
        %v1966 = vpop.f32.mrb[0].mxu0
        %v1967 = vadd.f32 %v1884, %v1966
        %v1968 = vpop.f32.mrb[0].mxu0
        %1969 = vmatprep.mubr.bf16.mxu0 0
        %1970 = vmatmul.mubr.bf16.gmra.mrb[0].mxu0 %v1904
        %v1971 = vpop.f32.mrb[0].mxu0
        %v1972 = vadd.f32 %v1884, %v1971
        %v1973 = vpop.f32.mrb[0].mxu0
        %v1974 = vpop.f32.mrb[0].mxu0
        %v1975 = vadd.f32 %v1884, %v1974
        %v1976 = vpop.f32.mrb[0].mxu0
        %1977 = vmatprep.mubr.bf16.mxu0 0
        %1978 = vmatmul.mubr.bf16.gmra.mrb[0].mxu0 %v1907
        %v1979 = vpop.f32.mrb[0].mxu0
        %v1980 = vadd.f32 %v1884, %v1979
        %v1981 = vpop.f32.mrb[0].mxu0
        %v1982 = vpop.f32.mrb[0].mxu0
        %v1983 = vadd.f32 %v1884, %v1982
        %v1984 = vpop.f32.mrb[0].mxu0
        %1985 = vmatprep.mubr.bf16.mxu0 0
        %1986 = vmatmul.mubr.bf16.gmra.mrb[0].mxu0 %v1910
        %v1987 = vpop.f32.mrb[0].mxu0
        %v1988 = vadd.f32 %v1884, %v1987
        %v1989 = vpop.f32.mrb[0].mxu0
        %v1990 = vpop.f32.mrb[0].mxu0
        %v1991 = vadd.f32 %v1884, %v1990
        %v1992 = vpop.f32.mrb[0].mxu0
        %1993 = vmatprep.mubr.bf16.mxu0 0
        %1994 = vmatmul.mubr.bf16.gmra.mrb[0].mxu0 %v1913
        %v1995 = vpop.f32.mrb[0].mxu0
        %v1996 = vadd.f32 %v1884, %v1995
        %v1997 = vpop.f32.mrb[0].mxu0
        %v1998 = vpop.f32.mrb[0].mxu0
        %v1999 = vadd.f32 %v1884, %v1998
        %v2000 = vpop.f32.mrb[0].mxu0
        %2001 = vmatprep.mubr.bf16.mxu0 0
        %2002 = vmatmul.mubr.bf16.gmra.mrb[0].mxu0 %v1916
        %v2003 = vpop.f32.mrb[0].mxu0
        %v2004 = vadd.f32 %v1884, %v2003
        %v2005 = vpop.f32.mrb[0].mxu0
        %v2006 = vpop.f32.mrb[0].mxu0
        %v2007 = vadd.f32 %v1884, %v2006
        %v2008 = vpop.f32.mrb[0].mxu0
        %2009 = vmatprep.mubr.bf16.mxu0 0
        %2010 = vmatmul.mubr.bf16.gmra.mrb[0].mxu0 %v1919
        %v2011 = vpop.f32.mrb[0].mxu0
        %v2012 = vadd.f32 %v1884, %v2011
        %v2013 = vpop.f32.mrb[0].mxu0
        %v2014 = vpop.f32.mrb[0].mxu0
        %v2015 = vadd.f32 %v1884, %v2014
        %v2016 = vpop.f32.mrb[0].mxu0
        %2017 = vdwg.mxu0
        %v2018 = vpack.c.bf16 %v1959, %v1956
        %v2019 = vpack.c.bf16 %v1967, %v1964
        %v2020 = vpack.c.bf16 %v1975, %v1972
        %v2021 = vpack.c.bf16 %v1983, %v1980
        %v2022 = vpack.c.bf16 %v1991, %v1988
        %v2023 = vpack.c.bf16 %v1999, %v1996
        %v2024 = vpack.c.bf16 %v2007, %v2004
        %v2025 = vpack.c.bf16 %v2015, %v2012
        %2026 = vrot.lane.b32.xlu0 %v896, 64
        %v2027 = vpop.permute.xlu0 %2026
        %v2029 = vsel %vm517, %v2018, 0
        %v2032 = vsel %vm517, %v2019, 0
        %v2035 = vsel %vm517, %v2020, 0
        %v2038 = vsel %vm517, %v2021, 0
        %v2041 = vsel %vm517, %v2027, 0
        %2043 = vmatprep.subr.bf16.mxu0 0
        %2044 = vmatpush1.bf16.xpose.msra.mxu0 %v2041
        %2045 = vmatprep.subr.bf16.mxu0 0
        %2046 = vmatpush1.bf16.xpose.msra.mxu0 0
        %2047 = vmatprep.subr.bf16.mxu0 0
        %2048 = vmatpush1.bf16.xpose.msra.mxu0 0
        %2049 = vmatprep.subr.bf16.mxu0 0
        %2050 = vmatpush1.bf16.xpose.msra.mxu0 0
        %2051 = vmatprep.subr.bf16.mxu0 0
        %2052 = vmatpush1.bf16.xpose.msra.mxu0 0
        %2053 = vmatprep.subr.bf16.mxu0 0
        %2054 = vmatpush1.bf16.xpose.msra.mxu0 0
        %2055 = vmatprep.subr.bf16.mxu0 0
        %2056 = vmatpush1.bf16.xpose.msra.mxu0 0
        %2057 = vmatprep.subr.bf16.mxu0 0
        %2058 = vmatpush1.bf16.xpose.msra.mxu0 0
        %2059 = vmatprep.subr.bf16.mxu0 0
        %2060 = vmatpush1.bf16.xpose.msra.mxu0 0
        %2061 = vmatprep.subr.bf16.mxu0 0
        %2062 = vmatpush1.bf16.xpose.msra.mxu0 0
        %2063 = vmatprep.subr.bf16.mxu0 0
        %2064 = vmatpush1.bf16.xpose.msra.mxu0 0
        %2065 = vmatprep.subr.bf16.mxu0 0
        %2066 = vmatpush1.bf16.xpose.msra.mxu0 0
        %2067 = vmatprep.subr.bf16.mxu0 0
        %2068 = vmatpush1.bf16.xpose.msra.mxu0 0
        %2069 = vmatprep.subr.bf16.mxu0 0
        %2070 = vmatpush1.bf16.xpose.msra.mxu0 0
        %2071 = vmatprep.subr.bf16.mxu0 0
        %2072 = vmatpush1.bf16.xpose.msra.mxu0 0
        %2073 = vmatprep.subr.bf16.mxu0 0
        %2074 = vmatpush1.bf16.xpose.msra.mxu0 0
        %2075 = vmatprep.mubr.bf16.mxu0 0
        %2076 = vmatmul.mubr.bf16.gmra.mrb[0].mxu0 %v2029
        %v2077 = vpop.f32.mrb[0].mxu0
        %v2078 = vadd.f32 0.0, %v2077
        %v2079 = vpop.f32.mrb[0].mxu0
        %v2080 = vpop.f32.mrb[0].mxu0
        %v2081 = vadd.f32 0.0, %v2080
        %v2082 = vpop.f32.mrb[0].mxu0
        %2083 = vmatprep.mubr.bf16.mxu0 0
        %2084 = vmatmul.mubr.bf16.gmra.mrb[0].mxu0 %v2032
        %v2085 = vpop.f32.mrb[0].mxu0
        %v2086 = vadd.f32 0.0, %v2085
        %v2087 = vpop.f32.mrb[0].mxu0
        %v2088 = vpop.f32.mrb[0].mxu0
        %v2089 = vadd.f32 0.0, %v2088
        %v2090 = vpop.f32.mrb[0].mxu0
        %2091 = vmatprep.mubr.bf16.mxu0 0
        %2092 = vmatmul.mubr.bf16.gmra.mrb[0].mxu0 %v2035
        %v2093 = vpop.f32.mrb[0].mxu0
        %v2094 = vadd.f32 0.0, %v2093
        %v2095 = vpop.f32.mrb[0].mxu0
        %v2096 = vpop.f32.mrb[0].mxu0
        %v2097 = vadd.f32 0.0, %v2096
        %v2098 = vpop.f32.mrb[0].mxu0
        %2099 = vmatprep.mubr.bf16.mxu0 0
        %2100 = vmatmul.mubr.bf16.gmra.mrb[0].mxu0 %v2038
        %v2101 = vpop.f32.mrb[0].mxu0
        %v2102 = vadd.f32 0.0, %v2101
        %v2103 = vpop.f32.mrb[0].mxu0
        %v2104 = vpop.f32.mrb[0].mxu0
        %v2105 = vadd.f32 0.0, %v2104
        %v2106 = vpop.f32.mrb[0].mxu0
        %2107 = vdwg.mxu0
        %2108 = vrot.lane.b32.xlu0 %v946, 64
        %v2109 = vpop.permute.xlu0 %2108
        %v2111 = vsel %vm517, %v2022, 0
        %v2114 = vsel %vm517, %v2023, 0
        %v2117 = vsel %vm517, %v2024, 0
        %v2120 = vsel %vm517, %v2025, 0
        %v2123 = vsel %vm517, %v2109, 0
        %2125 = vmatprep.subr.bf16.mxu0 0
        %2126 = vmatpush1.bf16.xpose.msra.mxu0 %v2123
        %2127 = vmatprep.subr.bf16.mxu0 0
        %2128 = vmatpush1.bf16.xpose.msra.mxu0 0
        %2129 = vmatprep.subr.bf16.mxu0 0
        %2130 = vmatpush1.bf16.xpose.msra.mxu0 0
        %2131 = vmatprep.subr.bf16.mxu0 0
        %2132 = vmatpush1.bf16.xpose.msra.mxu0 0
        %2133 = vmatprep.subr.bf16.mxu0 0
        %2134 = vmatpush1.bf16.xpose.msra.mxu0 0
        %2135 = vmatprep.subr.bf16.mxu0 0
        %2136 = vmatpush1.bf16.xpose.msra.mxu0 0
        %2137 = vmatprep.subr.bf16.mxu0 0
        %2138 = vmatpush1.bf16.xpose.msra.mxu0 0
        %2139 = vmatprep.subr.bf16.mxu0 0
        %2140 = vmatpush1.bf16.xpose.msra.mxu0 0
        %2141 = vmatprep.subr.bf16.mxu0 0
        %2142 = vmatpush1.bf16.xpose.msra.mxu0 0
        %2143 = vmatprep.subr.bf16.mxu0 0
        %2144 = vmatpush1.bf16.xpose.msra.mxu0 0
        %2145 = vmatprep.subr.bf16.mxu0 0
        %2146 = vmatpush1.bf16.xpose.msra.mxu0 0
        %2147 = vmatprep.subr.bf16.mxu0 0
        %2148 = vmatpush1.bf16.xpose.msra.mxu0 0
        %2149 = vmatprep.subr.bf16.mxu0 0
        %2150 = vmatpush1.bf16.xpose.msra.mxu0 0
        %2151 = vmatprep.subr.bf16.mxu0 0
        %2152 = vmatpush1.bf16.xpose.msra.mxu0 0
        %2153 = vmatprep.subr.bf16.mxu0 0
        %2154 = vmatpush1.bf16.xpose.msra.mxu0 0
        %2155 = vmatprep.subr.bf16.mxu0 0
        %2156 = vmatpush1.bf16.xpose.msra.mxu0 0
        %2157 = vmatprep.mubr.bf16.mxu0 0
        %2158 = vmatmul.mubr.bf16.gmra.mrb[0].mxu0 %v2111
        %v2159 = vpop.f32.mrb[0].mxu0
        %v2160 = vadd.f32 0.0, %v2159
        %v2161 = vpop.f32.mrb[0].mxu0
        %v2162 = vpop.f32.mrb[0].mxu0
        %v2163 = vadd.f32 0.0, %v2162
        %v2164 = vpop.f32.mrb[0].mxu0
        %2165 = vmatprep.mubr.bf16.mxu0 0
        %2166 = vmatmul.mubr.bf16.gmra.mrb[0].mxu0 %v2114
        %v2167 = vpop.f32.mrb[0].mxu0
        %v2168 = vadd.f32 0.0, %v2167
        %v2169 = vpop.f32.mrb[0].mxu0
        %v2170 = vpop.f32.mrb[0].mxu0
        %v2171 = vadd.f32 0.0, %v2170
        %v2172 = vpop.f32.mrb[0].mxu0
        %2173 = vmatprep.mubr.bf16.mxu0 0
        %2174 = vmatmul.mubr.bf16.gmra.mrb[0].mxu0 %v2117
        %v2175 = vpop.f32.mrb[0].mxu0
        %v2176 = vadd.f32 0.0, %v2175
        %v2177 = vpop.f32.mrb[0].mxu0
        %v2178 = vpop.f32.mrb[0].mxu0
        %v2179 = vadd.f32 0.0, %v2178
        %v2180 = vpop.f32.mrb[0].mxu0
        %2181 = vmatprep.mubr.bf16.mxu0 0
        %2182 = vmatmul.mubr.bf16.gmra.mrb[0].mxu0 %v2120
        %v2183 = vpop.f32.mrb[0].mxu0
        %v2184 = vadd.f32 0.0, %v2183
        %v2185 = vpop.f32.mrb[0].mxu0
        %v2186 = vpop.f32.mrb[0].mxu0
        %v2187 = vadd.f32 0.0, %v2186
        %v2188 = vpop.f32.mrb[0].mxu0
        %2189 = vdwg.mxu0
        %v2190 = vsel %vm871, %v2078, -inf
        %2191 = vmax.xlane.f32.xlu0 %v2190
        %v2192 = vpop.xlane.xlu0 %2191
        %v2193 = vsel %vm871, %v2081, -inf
        %2194 = vmax.xlane.f32.xlu0 %v2193
        %v2195 = vpop.xlane.xlu0 %2194
        %v2196 = vsel %vm871, %v2086, -inf
        %2197 = vmax.xlane.f32.xlu0 %v2196
        %v2198 = vpop.xlane.xlu0 %2197
        %v2199 = vsel %vm871, %v2089, -inf
        %2200 = vmax.xlane.f32.xlu0 %v2199
        %v2201 = vpop.xlane.xlu0 %2200
        %v2202 = vsel %vm871, %v2094, -inf
        %2203 = vmax.xlane.f32.xlu0 %v2202
        %v2204 = vpop.xlane.xlu0 %2203
        %v2205 = vsel %vm871, %v2097, -inf
        %2206 = vmax.xlane.f32.xlu0 %v2205
        %v2207 = vpop.xlane.xlu0 %2206
        %v2208 = vsel %vm871, %v2102, -inf
        %2209 = vmax.xlane.f32.xlu0 %v2208
        %v2210 = vpop.xlane.xlu0 %2209
        %v2211 = vsel %vm871, %v2105, -inf
        %2212 = vmax.xlane.f32.xlu0 %v2211
        %v2213 = vpop.xlane.xlu0 %2212
        %v2214 = vsel %vm871, %v2160, -inf
        %2215 = vmax.xlane.f32.xlu0 %v2214
        %v2216 = vpop.xlane.xlu0 %2215
        %v2217 = vsel %vm871, %v2163, -inf
        %2218 = vmax.xlane.f32.xlu0 %v2217
        %v2219 = vpop.xlane.xlu0 %2218
        %v2220 = vsel %vm871, %v2168, -inf
        %2221 = vmax.xlane.f32.xlu0 %v2220
        %v2222 = vpop.xlane.xlu0 %2221
        %v2223 = vsel %vm871, %v2171, -inf
        %2224 = vmax.xlane.f32.xlu0 %v2223
        %v2225 = vpop.xlane.xlu0 %2224
        %v2226 = vsel %vm871, %v2176, -inf
        %2227 = vmax.xlane.f32.xlu0 %v2226
        %v2228 = vpop.xlane.xlu0 %2227
        %v2229 = vsel %vm871, %v2179, -inf
        %2230 = vmax.xlane.f32.xlu0 %v2229
        %v2231 = vpop.xlane.xlu0 %2230
        %v2232 = vsel %vm871, %v2184, -inf
        %2233 = vmax.xlane.f32.xlu0 %v2232
        %v2234 = vpop.xlane.xlu0 %2233
        %v2235 = vsel %vm871, %v2187, -inf
        %2236 = vmax.xlane.f32.xlu0 %v2235
        %v2237 = vpop.xlane.xlu0 %2236
        %v2238 = vsub.f32 %v2078, %v2192
        %v2239 = vsub.f32 %v2081, %v2195
        %v2240 = vsub.f32 %v2086, %v2198
        %v2241 = vsub.f32 %v2089, %v2201
        %v2242 = vsub.f32 %v2094, %v2204
        %v2243 = vsub.f32 %v2097, %v2207
        %v2244 = vsub.f32 %v2102, %v2210
        %v2245 = vsub.f32 %v2105, %v2213
        %v2246 = vsub.f32 %v2160, %v2216
        %v2247 = vsub.f32 %v2163, %v2219
        %v2248 = vsub.f32 %v2168, %v2222
        %v2249 = vsub.f32 %v2171, %v2225
        %v2250 = vsub.f32 %v2176, %v2228
        %v2251 = vsub.f32 %v2179, %v2231
        %v2252 = vsub.f32 %v2184, %v2234
        %v2253 = vsub.f32 %v2187, %v2237
        %v2254 = vmul.f32 %v2238, 1.442695
        %v2255 = vpow.pop %v2254
        %v2256 = vmul.f32 %v2239, 1.442695
        %v2257 = vpow.pop %v2256
        %v2258 = vmul.f32 %v2240, 1.442695
        %v2259 = vpow.pop %v2258
        %v2260 = vmul.f32 %v2241, 1.442695
        %v2261 = vpow.pop %v2260
        %v2262 = vmul.f32 %v2242, 1.442695
        %v2263 = vpow.pop %v2262
        %v2264 = vmul.f32 %v2243, 1.442695
        %v2265 = vpow.pop %v2264
        %v2266 = vmul.f32 %v2244, 1.442695
        %v2267 = vpow.pop %v2266
        %v2268 = vmul.f32 %v2245, 1.442695
        %v2269 = vpow.pop %v2268
        %v2270 = vmul.f32 %v2246, 1.442695
        %v2271 = vpow.pop %v2270
        %v2272 = vmul.f32 %v2247, 1.442695
        %v2273 = vpow.pop %v2272
        %v2274 = vmul.f32 %v2248, 1.442695
        %v2275 = vpow.pop %v2274
        %v2276 = vmul.f32 %v2249, 1.442695
        %v2277 = vpow.pop %v2276
        %v2278 = vmul.f32 %v2250, 1.442695
        %v2279 = vpow.pop %v2278
        %v2280 = vmul.f32 %v2251, 1.442695
        %v2281 = vpow.pop %v2280
        %v2282 = vmul.f32 %v2252, 1.442695
        %v2283 = vpow.pop %v2282
        %v2284 = vmul.f32 %v2253, 1.442695
        %v2285 = vpow.pop %v2284
        %v2286 = vsel %vm871, %v2255, 0.0
        %2287 = vadd.xlane.f32.xlu0 %v2286
        %v2288 = vpop.xlane.xlu0 %2287
        %v2289 = vsel %vm871, %v2257, 0.0
        %2290 = vadd.xlane.f32.xlu0 %v2289
        %v2291 = vpop.xlane.xlu0 %2290
        %v2292 = vsel %vm871, %v2259, 0.0
        %2293 = vadd.xlane.f32.xlu0 %v2292
        %v2294 = vpop.xlane.xlu0 %2293
        %v2295 = vsel %vm871, %v2261, 0.0
        %2296 = vadd.xlane.f32.xlu0 %v2295
        %v2297 = vpop.xlane.xlu0 %2296
        %v2298 = vsel %vm871, %v2263, 0.0
        %2299 = vadd.xlane.f32.xlu0 %v2298
        %v2300 = vpop.xlane.xlu0 %2299
        %v2301 = vsel %vm871, %v2265, 0.0
        %2302 = vadd.xlane.f32.xlu0 %v2301
        %v2303 = vpop.xlane.xlu0 %2302
        %v2304 = vsel %vm871, %v2267, 0.0
        %2305 = vadd.xlane.f32.xlu0 %v2304
        %v2306 = vpop.xlane.xlu0 %2305
        %v2307 = vsel %vm871, %v2269, 0.0
        %2308 = vadd.xlane.f32.xlu0 %v2307
        %v2309 = vpop.xlane.xlu0 %2308
        %v2310 = vsel %vm871, %v2271, 0.0
        %2311 = vadd.xlane.f32.xlu0 %v2310
        %v2312 = vpop.xlane.xlu0 %2311
        %v2313 = vsel %vm871, %v2273, 0.0
        %2314 = vadd.xlane.f32.xlu0 %v2313
        %v2315 = vpop.xlane.xlu0 %2314
        %v2316 = vsel %vm871, %v2275, 0.0
        %2317 = vadd.xlane.f32.xlu0 %v2316
        %v2318 = vpop.xlane.xlu0 %2317
        %v2319 = vsel %vm871, %v2277, 0.0
        %2320 = vadd.xlane.f32.xlu0 %v2319
        %v2321 = vpop.xlane.xlu0 %2320
        %v2322 = vsel %vm871, %v2279, 0.0
        %2323 = vadd.xlane.f32.xlu0 %v2322
        %v2324 = vpop.xlane.xlu0 %2323
        %v2325 = vsel %vm871, %v2281, 0.0
        %2326 = vadd.xlane.f32.xlu0 %v2325
        %v2327 = vpop.xlane.xlu0 %2326
        %v2328 = vsel %vm871, %v2283, 0.0
        %2329 = vadd.xlane.f32.xlu0 %v2328
        %v2330 = vpop.xlane.xlu0 %2329
        %v2331 = vsel %vm871, %v2285, 0.0
        %2332 = vadd.xlane.f32.xlu0 %v2331
        %v2333 = vpop.xlane.xlu0 %2332
        %v2334 = vrcp.pop %v2288
        %v2335 = vrcp.pop %v2291
        %v2336 = vrcp.pop %v2294
        %v2337 = vrcp.pop %v2297
        %v2338 = vrcp.pop %v2300
        %v2339 = vrcp.pop %v2303
        %v2340 = vrcp.pop %v2306
        %v2341 = vrcp.pop %v2309
        %v2342 = vrcp.pop %v2312
        %v2343 = vrcp.pop %v2315
        %v2344 = vrcp.pop %v2318
        %v2345 = vrcp.pop %v2321
        %v2346 = vrcp.pop %v2324
        %v2347 = vrcp.pop %v2327
        %v2348 = vrcp.pop %v2330
        %v2349 = vrcp.pop %v2333
        %v2350 = vmul.f32 %v2255, %v2334
        %v2351 = vmul.f32 %v2257, %v2335
        %v2352 = vmul.f32 %v2259, %v2336
        %v2353 = vmul.f32 %v2261, %v2337
        %v2354 = vmul.f32 %v2263, %v2338
        %v2355 = vmul.f32 %v2265, %v2339
        %v2356 = vmul.f32 %v2267, %v2340
        %v2357 = vmul.f32 %v2269, %v2341
        %v2358 = vmul.f32 %v2271, %v2342
        %v2359 = vmul.f32 %v2273, %v2343
        %v2360 = vmul.f32 %v2275, %v2344
        %v2361 = vmul.f32 %v2277, %v2345
        %v2362 = vmul.f32 %v2279, %v2346
        %v2363 = vmul.f32 %v2281, %v2347
        %v2364 = vmul.f32 %v2283, %v2348
        %v2365 = vmul.f32 %v2285, %v2349
        %v2366 = vpack.c.bf16 %v2351, %v2350
        %v2367 = vpack.c.bf16 %v2353, %v2352
        %v2368 = vpack.c.bf16 %v2355, %v2354
        %v2369 = vpack.c.bf16 %v2357, %v2356
        %v2370 = vpack.c.bf16 %v2359, %v2358
        %v2371 = vpack.c.bf16 %v2361, %v2360
        %v2372 = vpack.c.bf16 %v2363, %v2362
        %v2373 = vpack.c.bf16 %v2365, %v2364
        %2374 = vrot.lane.b32.xlu0 %v515, 96
        %v2375 = vpop.permute.xlu0 %2374
        %v2376 = vrot.slane %v2375, 4
        %v2378 = vsel %vm871, %v2366, 0
        %v2381 = vsel %vm871, %v2367, 0
        %v2384 = vsel %vm871, %v2368, 0
        %v2387 = vsel %vm871, %v2369, 0
        %v2390 = vsel %vm902, %v2376, 0
        %2392 = vmatprep.subr.bf16.mxu0 0
        %2393 = vmatpush1.bf16.msra.mxu0 %v2390
        %2394 = vmatprep.subr.bf16.mxu0 0
        %2395 = vmatpush1.bf16.msra.mxu0 0
        %2396 = vmatprep.subr.bf16.mxu0 0
        %2397 = vmatpush1.bf16.msra.mxu0 0
        %2398 = vmatprep.subr.bf16.mxu0 0
        %2399 = vmatpush1.bf16.msra.mxu0 0
        %2400 = vmatprep.subr.bf16.mxu0 0
        %2401 = vmatpush1.bf16.msra.mxu0 0
        %2402 = vmatprep.subr.bf16.mxu0 0
        %2403 = vmatpush1.bf16.msra.mxu0 0
        %2404 = vmatprep.subr.bf16.mxu0 0
        %2405 = vmatpush1.bf16.msra.mxu0 0
        %2406 = vmatprep.subr.bf16.mxu0 0
        %2407 = vmatpush1.bf16.msra.mxu0 0
        %2408 = vmatprep.subr.bf16.mxu0 0
        %2409 = vmatpush1.bf16.msra.mxu0 0
        %2410 = vmatprep.subr.bf16.mxu0 0
        %2411 = vmatpush1.bf16.msra.mxu0 0
        %2412 = vmatprep.subr.bf16.mxu0 0
        %2413 = vmatpush1.bf16.msra.mxu0 0
        %2414 = vmatprep.subr.bf16.mxu0 0
        %2415 = vmatpush1.bf16.msra.mxu0 0
        %2416 = vmatprep.subr.bf16.mxu0 0
        %2417 = vmatpush1.bf16.msra.mxu0 0
        %2418 = vmatprep.subr.bf16.mxu0 0
        %2419 = vmatpush1.bf16.msra.mxu0 0
        %2420 = vmatprep.subr.bf16.mxu0 0
        %2421 = vmatpush1.bf16.msra.mxu0 0
        %2422 = vmatprep.subr.bf16.mxu0 0
        %2423 = vmatpush1.bf16.msra.mxu0 0
        %2424 = vmatprep.mubr.bf16.mxu0 0
        %2425 = vmatmul.mubr.bf16.gmra.mrb[0].mxu0 %v2378
        %v2426 = vpop.f32.mrb[0].mxu0
        %v2427 = vadd.f32 0.0, %v2426
        %v2428 = vpop.f32.mrb[0].mxu0
        %v2429 = vpop.f32.mrb[0].mxu0
        %v2430 = vadd.f32 0.0, %v2429
        %v2431 = vpop.f32.mrb[0].mxu0
        %2432 = vmatprep.mubr.bf16.mxu0 0
        %2433 = vmatmul.mubr.bf16.gmra.mrb[0].mxu0 %v2381
        %v2434 = vpop.f32.mrb[0].mxu0
        %v2435 = vadd.f32 0.0, %v2434
        %v2436 = vpop.f32.mrb[0].mxu0
        %v2437 = vpop.f32.mrb[0].mxu0
        %v2438 = vadd.f32 0.0, %v2437
        %v2439 = vpop.f32.mrb[0].mxu0
        %2440 = vmatprep.mubr.bf16.mxu0 0
        %2441 = vmatmul.mubr.bf16.gmra.mrb[0].mxu0 %v2384
        %v2442 = vpop.f32.mrb[0].mxu0
        %v2443 = vadd.f32 0.0, %v2442
        %v2444 = vpop.f32.mrb[0].mxu0
        %v2445 = vpop.f32.mrb[0].mxu0
        %v2446 = vadd.f32 0.0, %v2445
        %v2447 = vpop.f32.mrb[0].mxu0
        %2448 = vmatprep.mubr.bf16.mxu0 0
        %2449 = vmatmul.mubr.bf16.gmra.mrb[0].mxu0 %v2387
        %v2450 = vpop.f32.mrb[0].mxu0
        %v2451 = vadd.f32 0.0, %v2450
        %v2452 = vpop.f32.mrb[0].mxu0
        %v2453 = vpop.f32.mrb[0].mxu0
        %v2454 = vadd.f32 0.0, %v2453
        %v2455 = vpop.f32.mrb[0].mxu0
        %2456 = vdwg.mxu0
        %2457 = vrot.lane.b32.xlu0 %v516, 96
        %v2458 = vpop.permute.xlu0 %2457
        %v2459 = vrot.slane %v2458, 4
        %v2461 = vsel %vm871, %v2370, 0
        %v2464 = vsel %vm871, %v2371, 0
        %v2467 = vsel %vm871, %v2372, 0
        %v2470 = vsel %vm871, %v2373, 0
        %v2473 = vsel %vm902, %v2459, 0
        %2475 = vmatprep.subr.bf16.mxu0 0
        %2476 = vmatpush1.bf16.msra.mxu0 %v2473
        %2477 = vmatprep.subr.bf16.mxu0 0
        %2478 = vmatpush1.bf16.msra.mxu0 0
        %2479 = vmatprep.subr.bf16.mxu0 0
        %2480 = vmatpush1.bf16.msra.mxu0 0
        %2481 = vmatprep.subr.bf16.mxu0 0
        %2482 = vmatpush1.bf16.msra.mxu0 0
        %2483 = vmatprep.subr.bf16.mxu0 0
        %2484 = vmatpush1.bf16.msra.mxu0 0
        %2485 = vmatprep.subr.bf16.mxu0 0
        %2486 = vmatpush1.bf16.msra.mxu0 0
        %2487 = vmatprep.subr.bf16.mxu0 0
        %2488 = vmatpush1.bf16.msra.mxu0 0
        %2489 = vmatprep.subr.bf16.mxu0 0
        %2490 = vmatpush1.bf16.msra.mxu0 0
        %2491 = vmatprep.subr.bf16.mxu0 0
        %2492 = vmatpush1.bf16.msra.mxu0 0
        %2493 = vmatprep.subr.bf16.mxu0 0
        %2494 = vmatpush1.bf16.msra.mxu0 0
        %2495 = vmatprep.subr.bf16.mxu0 0
        %2496 = vmatpush1.bf16.msra.mxu0 0
        %2497 = vmatprep.subr.bf16.mxu0 0
        %2498 = vmatpush1.bf16.msra.mxu0 0
        %2499 = vmatprep.subr.bf16.mxu0 0
        %2500 = vmatpush1.bf16.msra.mxu0 0
        %2501 = vmatprep.subr.bf16.mxu0 0
        %2502 = vmatpush1.bf16.msra.mxu0 0
        %2503 = vmatprep.subr.bf16.mxu0 0
        %2504 = vmatpush1.bf16.msra.mxu0 0
        %2505 = vmatprep.subr.bf16.mxu0 0
        %2506 = vmatpush1.bf16.msra.mxu0 0
        %2507 = vmatprep.mubr.bf16.mxu0 0
        %2508 = vmatmul.mubr.bf16.gmra.mrb[0].mxu0 %v2461
        %v2509 = vpop.f32.mrb[0].mxu0
        %v2510 = vadd.f32 0.0, %v2509
        %v2511 = vpop.f32.mrb[0].mxu0
        %v2512 = vpop.f32.mrb[0].mxu0
        %v2513 = vadd.f32 0.0, %v2512
        %v2514 = vpop.f32.mrb[0].mxu0
        %2515 = vmatprep.mubr.bf16.mxu0 0
        %2516 = vmatmul.mubr.bf16.gmra.mrb[0].mxu0 %v2464
        %v2517 = vpop.f32.mrb[0].mxu0
        %v2518 = vadd.f32 0.0, %v2517
        %v2519 = vpop.f32.mrb[0].mxu0
        %v2520 = vpop.f32.mrb[0].mxu0
        %v2521 = vadd.f32 0.0, %v2520
        %v2522 = vpop.f32.mrb[0].mxu0
        %2523 = vmatprep.mubr.bf16.mxu0 0
        %2524 = vmatmul.mubr.bf16.gmra.mrb[0].mxu0 %v2467
        %v2525 = vpop.f32.mrb[0].mxu0
        %v2526 = vadd.f32 0.0, %v2525
        %v2527 = vpop.f32.mrb[0].mxu0
        %v2528 = vpop.f32.mrb[0].mxu0
        %v2529 = vadd.f32 0.0, %v2528
        %v2530 = vpop.f32.mrb[0].mxu0
        %2531 = vmatprep.mubr.bf16.mxu0 0
        %2532 = vmatmul.mubr.bf16.gmra.mrb[0].mxu0 %v2470
        %v2533 = vpop.f32.mrb[0].mxu0
        %v2534 = vadd.f32 0.0, %v2533
        %v2535 = vpop.f32.mrb[0].mxu0
        %v2536 = vpop.f32.mrb[0].mxu0
        %v2537 = vadd.f32 0.0, %v2536
        %v2538 = vpop.f32.mrb[0].mxu0
        %2539 = vdwg.mxu0
        %v2540 = vadd.f32 %v1679, %v2427
        %v2541 = vadd.f32 %v1680, %v2430
        %v2542 = vadd.f32 %v1681, %v2435
        %v2543 = vadd.f32 %v1682, %v2438
        %v2544 = vadd.f32 %v1683, %v2443
        %v2545 = vadd.f32 %v1684, %v2446
        %v2546 = vadd.f32 %v1685, %v2451
        %v2547 = vadd.f32 %v1686, %v2454
        %v2548 = vadd.f32 %v1687, %v2510
        %v2549 = vadd.f32 %v1688, %v2513
        %v2550 = vadd.f32 %v1689, %v2518
        %v2551 = vadd.f32 %v1690, %v2521
        %v2552 = vadd.f32 %v1691, %v2526
        %v2553 = vadd.f32 %v1692, %v2529
        %v2554 = vadd.f32 %v1693, %v2534
        %v2555 = vadd.f32 %v1694, %v2537
        %v2556 = vsel %vm517, %v2540, 0.0
        %v2557 = vsel %vm517, %v2541, 0.0
        %v2558 = vadd.f32 %v2556, %v2557
        %v2559 = vsel %vm517, %v2542, 0.0
        %v2560 = vadd.f32 %v2558, %v2559
        %v2561 = vsel %vm517, %v2543, 0.0
        %v2562 = vadd.f32 %v2560, %v2561
        %v2563 = vsel %vm517, %v2544, 0.0
        %v2564 = vadd.f32 %v2562, %v2563
        %v2565 = vsel %vm517, %v2545, 0.0
        %v2566 = vadd.f32 %v2564, %v2565
        %v2567 = vsel %vm517, %v2546, 0.0
        %v2568 = vadd.f32 %v2566, %v2567
        %v2569 = vsel %vm517, %v2547, 0.0
        %v2570 = vadd.f32 %v2568, %v2569
        %v2571 = vrot.slane %v2570, 4
        %v2572 = vadd.f32 %v2570, %v2571
        %v2573 = vrot.slane %v2572, 2
        %v2574 = vadd.f32 %v2572, %v2573
        %v2575 = vrot.slane %v2574, 1
        %v2576 = vadd.f32 %v2574, %v2575
        %v2577 = vsel %vm517, %v2548, 0.0
        %v2578 = vsel %vm517, %v2549, 0.0
        %v2579 = vadd.f32 %v2577, %v2578
        %v2580 = vsel %vm517, %v2550, 0.0
        %v2581 = vadd.f32 %v2579, %v2580
        %v2582 = vsel %vm517, %v2551, 0.0
        %v2583 = vadd.f32 %v2581, %v2582
        %v2584 = vsel %vm517, %v2552, 0.0
        %v2585 = vadd.f32 %v2583, %v2584
        %v2586 = vsel %vm517, %v2553, 0.0
        %v2587 = vadd.f32 %v2585, %v2586
        %v2588 = vsel %vm517, %v2554, 0.0
        %v2589 = vadd.f32 %v2587, %v2588
        %v2590 = vsel %vm517, %v2555, 0.0
        %v2591 = vadd.f32 %v2589, %v2590
        %v2592 = vrot.slane %v2591, 4
        %v2593 = vadd.f32 %v2591, %v2592
        %v2594 = vrot.slane %v2593, 2
        %v2595 = vadd.f32 %v2593, %v2594
        %v2596 = vrot.slane %v2595, 1
        %v2597 = vadd.f32 %v2595, %v2596
        %v2598 = vmul.f32 %v2576, %v1233
        %v2599 = vmul.f32 %v2597, %v1233
        %v2600 = vsub.f32 %v2540, %v2598
        %v2601 = vsub.f32 %v2541, %v2598
        %v2602 = vsub.f32 %v2542, %v2598
        %v2603 = vsub.f32 %v2543, %v2598
        %v2604 = vsub.f32 %v2544, %v2598
        %v2605 = vsub.f32 %v2545, %v2598
        %v2606 = vsub.f32 %v2546, %v2598
        %v2607 = vsub.f32 %v2547, %v2598
        %v2608 = vsub.f32 %v2548, %v2599
        %v2609 = vsub.f32 %v2549, %v2599
        %v2610 = vsub.f32 %v2550, %v2599
        %v2611 = vsub.f32 %v2551, %v2599
        %v2612 = vsub.f32 %v2552, %v2599
        %v2613 = vsub.f32 %v2553, %v2599
        %v2614 = vsub.f32 %v2554, %v2599
        %v2615 = vsub.f32 %v2555, %v2599
        %v2616 = vmul.f32 %v2600, %v2600
        %v2617 = vmul.f32 %v2601, %v2601
        %v2618 = vmul.f32 %v2602, %v2602
        %v2619 = vmul.f32 %v2603, %v2603
        %v2620 = vmul.f32 %v2604, %v2604
        %v2621 = vmul.f32 %v2605, %v2605
        %v2622 = vmul.f32 %v2606, %v2606
        %v2623 = vmul.f32 %v2607, %v2607
        %v2624 = vmul.f32 %v2608, %v2608
        %v2625 = vmul.f32 %v2609, %v2609
        %v2626 = vmul.f32 %v2610, %v2610
        %v2627 = vmul.f32 %v2611, %v2611
        %v2628 = vmul.f32 %v2612, %v2612
        %v2629 = vmul.f32 %v2613, %v2613
        %v2630 = vmul.f32 %v2614, %v2614
        %v2631 = vmul.f32 %v2615, %v2615
        %v2632 = vsel %vm517, %v2616, 0.0
        %v2633 = vsel %vm517, %v2617, 0.0
        %v2634 = vadd.f32 %v2632, %v2633
        %v2635 = vsel %vm517, %v2618, 0.0
        %v2636 = vadd.f32 %v2634, %v2635
        %v2637 = vsel %vm517, %v2619, 0.0
        %v2638 = vadd.f32 %v2636, %v2637
        %v2639 = vsel %vm517, %v2620, 0.0
        %v2640 = vadd.f32 %v2638, %v2639
        %v2641 = vsel %vm517, %v2621, 0.0
        %v2642 = vadd.f32 %v2640, %v2641
        %v2643 = vsel %vm517, %v2622, 0.0
        %v2644 = vadd.f32 %v2642, %v2643
        %v2645 = vsel %vm517, %v2623, 0.0
        %v2646 = vadd.f32 %v2644, %v2645
        %v2647 = vrot.slane %v2646, 4
        %v2648 = vadd.f32 %v2646, %v2647
        %v2649 = vrot.slane %v2648, 2
        %v2650 = vadd.f32 %v2648, %v2649
        %v2651 = vrot.slane %v2650, 1
        %v2652 = vadd.f32 %v2650, %v2651
        %v2653 = vsel %vm517, %v2624, 0.0
        %v2654 = vsel %vm517, %v2625, 0.0
        %v2655 = vadd.f32 %v2653, %v2654
        %v2656 = vsel %vm517, %v2626, 0.0
        %v2657 = vadd.f32 %v2655, %v2656
        %v2658 = vsel %vm517, %v2627, 0.0
        %v2659 = vadd.f32 %v2657, %v2658
        %v2660 = vsel %vm517, %v2628, 0.0
        %v2661 = vadd.f32 %v2659, %v2660
        %v2662 = vsel %vm517, %v2629, 0.0
        %v2663 = vadd.f32 %v2661, %v2662
        %v2664 = vsel %vm517, %v2630, 0.0
        %v2665 = vadd.f32 %v2663, %v2664
        %v2666 = vsel %vm517, %v2631, 0.0
        %v2667 = vadd.f32 %v2665, %v2666
        %v2668 = vrot.slane %v2667, 4
        %v2669 = vadd.f32 %v2667, %v2668
        %v2670 = vrot.slane %v2669, 2
        %v2671 = vadd.f32 %v2669, %v2670
        %v2672 = vrot.slane %v2671, 1
        %v2673 = vadd.f32 %v2671, %v2672
        %v2674 = vmul.f32 %v2652, %v1233
        %v2675 = vmul.f32 %v2673, %v1233
        %v2676 = vadd.f32 %v2674, 1e-05
        %v2677 = vadd.f32 %v2675, 1e-05
        %v2678 = vrsqrt.pop %v2676
        %v2679 = vrsqrt.pop %v2677
        %v2680 = vmul.f32 %v2678, %v427
        %v2681 = vmul.f32 %v2679, %v427
        %v2682 = vmul.f32 %v2598, %v2680
        %v2683 = vmul.f32 %v2599, %v2681
        %v2684 = vsub.f32 %v428, %v2682
        %v2685 = vsub.f32 %v428, %v2683
        %v2686 = vlaneseq
        %v2687 = vshrl.u32 %v2686, 7
        %v2688 = vsub.s32 2, %v2687
        %v2689 = vrot.slane %v2680, %v2688
        %v2690 = vlaneseq
        %v2691 = vshrl.u32 %v2690, 7
        %v2692 = vsub.s32 2, %v2691
        %v2693 = vrot.slane %v2681, %v2692
        %v2694 = vmul.f32 %v2540, %v2689
        %v2695 = vmul.f32 %v2541, %v2689
        %v2696 = vmul.f32 %v2542, %v2689
        %v2697 = vmul.f32 %v2543, %v2689
        %v2698 = vmul.f32 %v2544, %v2689
        %v2699 = vmul.f32 %v2545, %v2689
        %v2700 = vmul.f32 %v2546, %v2689
        %v2701 = vmul.f32 %v2547, %v2689
        %v2702 = vmul.f32 %v2548, %v2693
        %v2703 = vmul.f32 %v2549, %v2693
        %v2704 = vmul.f32 %v2550, %v2693
        %v2705 = vmul.f32 %v2551, %v2693
        %v2706 = vmul.f32 %v2552, %v2693
        %v2707 = vmul.f32 %v2553, %v2693
        %v2708 = vmul.f32 %v2554, %v2693
        %v2709 = vmul.f32 %v2555, %v2693
        %v2710 = vlaneseq
        %v2711 = vshrl.u32 %v2710, 7
        %v2712 = vsub.s32 2, %v2711
        %v2713 = vrot.slane %v2684, %v2712
        %v2714 = vlaneseq
        %v2715 = vshrl.u32 %v2714, 7
        %v2716 = vsub.s32 2, %v2715
        %v2717 = vrot.slane %v2685, %v2716
        %v2718 = vadd.f32 %v2694, %v2713
        %v2719 = vadd.f32 %v2695, %v2713
        %v2720 = vadd.f32 %v2696, %v2713
        %v2721 = vadd.f32 %v2697, %v2713
        %v2722 = vadd.f32 %v2698, %v2713
        %v2723 = vadd.f32 %v2699, %v2713
        %v2724 = vadd.f32 %v2700, %v2713
        %v2725 = vadd.f32 %v2701, %v2713
        %v2726 = vadd.f32 %v2702, %v2717
        %v2727 = vadd.f32 %v2703, %v2717
        %v2728 = vadd.f32 %v2704, %v2717
        %v2729 = vadd.f32 %v2705, %v2717
        %v2730 = vadd.f32 %v2706, %v2717
        %v2731 = vadd.f32 %v2707, %v2717
        %v2732 = vadd.f32 %v2708, %v2717
        %v2733 = vadd.f32 %v2709, %v2717
        %2734 = vst.msk [vmem:[%s393] sm:$0xff] %vm517, %v2718
        %2735 = vst.msk [vmem:[%s393 + $0x8] sm:$0xff] %vm517, %v2719
        %2736 = vst.msk [vmem:[%s393 + $0x10] sm:$0xff] %vm517, %v2720
        %2737 = vst.msk [vmem:[%s393 + $0x18] sm:$0xff] %vm517, %v2721
        %2738 = vst.msk [vmem:[%s393 + $0x20] sm:$0xff] %vm517, %v2722
        %2739 = vst.msk [vmem:[%s393 + $0x28] sm:$0xff] %vm517, %v2723
        %2740 = vst.msk [vmem:[%s393 + $0x30] sm:$0xff] %vm517, %v2724
        %2741 = vst.msk [vmem:[%s393 + $0x38] sm:$0xff] %vm517, %v2725
        %2742 = vst.msk [vmem:[%s393 + $0x40] sm:$0xff] %vm517, %v2726
        %2743 = vst.msk [vmem:[%s393 + $0x48] sm:$0xff] %vm517, %v2727
        %2744 = vst.msk [vmem:[%s393 + $0x50] sm:$0xff] %vm517, %v2728
        %2745 = vst.msk [vmem:[%s393 + $0x58] sm:$0xff] %vm517, %v2729
        %2746 = vst.msk [vmem:[%s393 + $0x60] sm:$0xff] %vm517, %v2730
        %2747 = vst.msk [vmem:[%s393 + $0x68] sm:$0xff] %vm517, %v2731
        %2748 = vst.msk [vmem:[%s393 + $0x70] sm:$0xff] %vm517, %v2732
        %2749 = vst.msk [vmem:[%s393 + $0x78] sm:$0xff] %vm517, %v2733
        %s2750 = sand.u32 %s215, 1
        %s2751 = scalar_lea.sflag [#allocation4], %s2750
        %s2752 = sand.u32 %s215, 1
        %s2753 = smul.addr %s2752, 128
        %s2754 = scalar_lea.vmem [#allocation10], %s2753
        // Predicated region
        $region69: #{tpu_custom_call.1} parent=51 // pred_check
          %p2755 = pneg %p225
        $region70: #{tpu_custom_call.1} parent=51 // pred_check_branch
          %2757 = sbr.rel (%p2755) target = $region72
        $region71: #{tpu_custom_call.1} parent=51 // pred_region
          %s2758 = smul.u32 2, %s29
          %s2760 = ssub.s32 2048, 2048
          %2761 = vsyncadd %s2751, %s2760
          %s2762 = smul.addr %s2758, 8
          %s2763 = smul.addr %s2762, 128
          %s2764 = scalar_lea.hbm %s8, %s2763
          %s2765 = sshll.u32 %s2754, 4
          %s2766 = int_to_ptr.vmem [resolvable:$true] %s2765
          %2771 = dma.vmem_to_hbm [thread:$0]  %s2766, 2048, %s2764, %s2751, 128, 128, 8
        $region72: #{tpu_custom_call.1} parent=51 // pred_fallthru
          _
      $region52: #{tpu_custom_call.1} parent=5 // pred_fallthru
        _
      %p2772 = scmp.le.s32.totalorder 2, %s24
      // Predicated region
      $region73: #{tpu_custom_call.1} parent=5 // pred_check
        %p2773 = pneg %p2772
      $region74: #{tpu_custom_call.1} parent=5 // pred_check_branch
        %2775 = sbr.rel (%p2773) target = $region76
      $region75: #{tpu_custom_call.1} parent=5 // pred_region
        %s2776 = ssub.s32 %s24, 2
        // Predicated region
        $region77: #{tpu_custom_call.1} parent=75 // pred_check
          %p2777 = pneg %p231
        $region78: #{tpu_custom_call.1} parent=75 // pred_check_branch
          %2779 = sbr.rel (%p2777) target = $region80
        $region79: #{tpu_custom_call.1} parent=75 // pred_region
          %s2780 = sand.u32 %s216, 1
          %s2781 = scalar_lea.sflag [#allocation4], %s2780
          %s2782 = sand.u32 %s216, 1
          %s2783 = smul.addr %s2782, 128
          %s2784 = scalar_lea.vmem [#allocation10], %s2783
          %2785 = dma.done %s2781, 2048
        $region80: #{tpu_custom_call.1} parent=75 // pred_fallthru
          _
      $region76: #{tpu_custom_call.1} parent=5 // pred_fallthru
        _
    $region6: #{tpu_custom_call.1} parent=1 // loop_footer
      %s28 = sadd.s32 1, %s24
    $region7: #{tpu_custom_call.1} parent=1 // loop_footer_branch
      %23 = sbr.rel target = $region3
    $region8: #{tpu_custom_call.1} parent=1 // loop_exit
      _
    %2786 = vsyncpa [#allocation3], 1
    %s2787 = scalar_lea.sflag [#allocation3], 1
    %2788 = vsyncpa %s2787, 1
    %2789 = vsyncpa [#allocation6], 1
    %s2790 = scalar_lea.sflag [#allocation6], 1
    %2791 = vsyncpa %s2790, 1
    %2792 = vsyncpa [#allocation9], 1
    %2793 = vsyncpa [#allocation4], 1
    %s2794 = scalar_lea.sflag [#allocation4], 1
    %2795 = vsyncpa %s2794, 1

</llo_original>
